<compile_context>
chip_gen: v7x
topology: tpu7x:2x2x1
jax: 0.10.0
libtpu: 0.0.40
codegen_flags: <defaults>
</compile_context>

<pallas_src>
import functools
import math

import jax
import jax.numpy as jnp
from jax.experimental import pallas as pl
from jax.experimental.pallas import tpu as pltpu


# ----------------------------- fused Pallas kernel -----------------------------

def _pst_path_kernel(xp_ref, wemb_ref, pos_ref,
                     inw_ref, inb_ref, outw_ref, outb_ref,
                     ff1w_ref, ff1b_ref, ff2w_ref, ff2b_ref,
                     ln1g_ref, ln1b_ref, ln2g_ref, ln2b_ref,
                     o_ref, *, T, Tp, N, nheads, scale, eps):
    E = o_ref.shape[-1]
    d = E // nheads

    # ---- layer 0: fused patch embed (folded depthwise-separable conv as one MXU
    #      matmul) + zero-token pad + positional add, single aligned store ----
    @pl.when(pl.program_id(0) == 0)
    def _():
        emb = jnp.dot(xp_ref[...].astype(jnp.bfloat16), wemb_ref[...],
                      preferred_element_type=jnp.float32)              # (N*Tp, E)
        # pos_ref already carries: pos[0] for the zero token, pos[1:T] + conv_bias
        # for real patches, zeros for the Tp-T alignment rows (pad rows of xp are
        # zero, so they come out exactly 0 here).
        o_ref[...] = emb + jnp.tile(pos_ref[...], (N, 1))

    h = o_ref[...]                                                     # (N*Tp, E) f32

    # ---- multi-head self-attention ----
    qkv = jnp.dot(h.astype(jnp.bfloat16), inw_ref[...],
                  preferred_element_type=jnp.float32) + inb_ref[...]   # (N*Tp, 3E)
    # hoisted: scale + bf16 casts done once, not per (batch, head)
    q_all = (qkv[:, 0:E] * scale).astype(jnp.bfloat16)
    k_all = qkv[:, E:2 * E].astype(jnp.bfloat16)
    v_all = qkv[:, 2 * E:3 * E].astype(jnp.bfloat16)

    if Tp > T:   # static: mask padded key positions
        key_bias = jnp.where(
            jax.lax.broadcasted_iota(jnp.int32, (1, Tp), 1) < T,
            jnp.float32(0.0), jnp.float32(-1e30))                      # (1, Tp)
    else:
        key_bias = None

    per_batch = []
    for n in range(N):
        rows = slice(n * Tp, (n + 1) * Tp)          # tile-aligned (Tp % 8 == 0)
        qn, kn, vn = q_all[rows, :], k_all[rows, :], v_all[rows, :]
        heads = []
        for hh in range(nheads):
            cols = slice(hh * d, (hh + 1) * d)
            s = jnp.einsum('td,sd->ts', qn[:, cols], kn[:, cols],
                           preferred_element_type=jnp.float32)         # (Tp, Tp)
            if key_bias is not None:
                s = s + key_bias
            m = jnp.max(s, axis=-1, keepdims=True)
            p = jnp.exp(s - m)
            p = p * pl.reciprocal(jnp.sum(p, axis=-1, keepdims=True), approx=True)
            heads.append(jnp.dot(p.astype(jnp.bfloat16), vn[:, cols],
                                 preferred_element_type=jnp.float32))  # (Tp, d)
        per_batch.append(jnp.concatenate(heads, axis=-1))              # (Tp, E)
    attn = jnp.concatenate(per_batch, axis=0).astype(jnp.bfloat16)     # (N*Tp, E)
    attn = jnp.dot(attn, outw_ref[...],
                   preferred_element_type=jnp.float32) + outb_ref[...]

    # ---- residual + LayerNorm 1 (post-norm, f32) ----
    x1 = h + attn
    mu1 = jnp.mean(x1, axis=-1, keepdims=True)
    var1 = jnp.mean(jnp.square(x1 - mu1), axis=-1, keepdims=True)
    h1 = (x1 - mu1) * jax.lax.rsqrt(var1 + eps) * ln1g_ref[...] + ln1b_ref[...]

    # ---- feed-forward ----
    f = jnp.dot(h1.astype(jnp.bfloat16), ff1w_ref[...],
                preferred_element_type=jnp.float32) + ff1b_ref[...]
    f = jnp.maximum(f, 0.0)
    f = jnp.dot(f.astype(jnp.bfloat16), ff2w_ref[...],
                preferred_element_type=jnp.float32) + ff2b_ref[...]

    # ---- residual + LayerNorm 2 ----
    x2 = h1 + f
    mu2 = jnp.mean(x2, axis=-1, keepdims=True)
    var2 = jnp.mean(jnp.square(x2 - mu2), axis=-1, keepdims=True)
    o_ref[...] = (x2 - mu2) * jax.lax.rsqrt(var2 + eps) * ln2g_ref[...] + ln2b_ref[...]


# ------------------------------ pallas_call wrapper ------------------------------

def pst_path_pallas(xp_pad, w_fold, pos_pad, params, *,
                    num_heads, num_layers, T, Tp, N):
    NT, CK = xp_pad.shape
    E = w_fold.shape[1]
    d = E // num_heads
    scale = 1.0 / math.sqrt(d)

    def const_spec(shape):
        # same block for every layer -> loaded once, stays resident in VMEM
        return pl.BlockSpec(shape, lambda l: (0,) * len(shape))

    def layer_spec(arr):
        _, a, b = arr.shape
        return pl.BlockSpec((None, a, b), lambda l: (l, 0, 0))

    weight_names = ['in_w', 'in_b', 'out_w', 'out_b', 'ff1_w', 'ff1_b',
                    'ff2_w', 'ff2_b', 'ln1_g', 'ln1_b', 'ln2_g', 'ln2_b']
    weights = [params[nm] for nm in weight_names]

    kern = functools.partial(_pst_path_kernel, T=T, Tp=Tp, N=N,
                             nheads=num_heads, scale=scale, eps=1e-5)

    return pl.pallas_call(
        kern,
        out_shape=jax.ShapeDtypeStruct((NT, E), jnp.float32),
        grid=(num_layers,),
        in_specs=[const_spec((NT, CK)), const_spec((CK, E)), const_spec((Tp, E))]
                 + [layer_spec(w) for w in weights],
        out_specs=pl.BlockSpec((NT, E), lambda l: (0, 0)),
        compiler_params=pltpu.CompilerParams(
            dimension_semantics=("arbitrary",),
            vmem_limit_bytes=32 * 1024 * 1024),
    )(xp_pad, w_fold, pos_pad, *weights)


# ------------------------------ parameter init ------------------------------

def init_params(key, in_channels, embedding_dim, num_heads, num_layers, dim_ff, ky, kx):
    E, F, L = embedding_dim, dim_ff, num_layers
    keys = jax.random.split(key, 7)
    s = 0.02
    params = {
        # depthwise Conv2d(nin, nin, (ky,kx), groups=nin): weight (Cin,1,ky,kx) -> (Cin, ky*kx)
        'dw_w': s * jax.random.normal(keys[0], (in_channels, ky * kx), jnp.float32),
        'dw_b': jnp.zeros((1, in_channels), jnp.float32),
        # pointwise Conv2d(nin, E, 1): weight (E,Cin,1,1) -> stored transposed (Cin, E)
        'pw_w': s * jax.random.normal(keys[1], (in_channels, E), jnp.float32),
        'pw_b': jnp.zeros((1, E), jnp.float32),
        # nn.Parameter(torch.rand(500, E))
        'pos': jax.random.uniform(keys[2], (500, E), jnp.float32),
        # stacked per-layer transformer weights; matmul operands stored as bf16 once
        'in_w': (s * jax.random.normal(keys[3], (L, E, 3 * E), jnp.float32)).astype(jnp.bfloat16),
        'in_b': jnp.zeros((L, 1, 3 * E), jnp.float32),
        'out_w': (s * jax.random.normal(keys[4], (L, E, E), jnp.float32)).astype(jnp.bfloat16),
        'out_b': jnp.zeros((L, 1, E), jnp.float32),
        'ff1_w': (s * jax.random.normal(keys[5], (L, E, F), jnp.float32)).astype(jnp.bfloat16),
        'ff1_b': jnp.zeros((L, 1, F), jnp.float32),
        'ff2_w': (s * jax.random.normal(keys[6], (L, F, E), jnp.float32)).astype(jnp.bfloat16),
        'ff2_b': jnp.zeros((L, 1, E), jnp.float32),
        'ln1_g': jnp.ones((L, 1, E), jnp.float32),
        'ln1_b': jnp.zeros((L, 1, E), jnp.float32),
        'ln2_g': jnp.ones((L, 1, E), jnp.float32),
        'ln2_b': jnp.zeros((L, 1, E), jnp.float32),
    }
    return params


# ------------------------------ forward pass ------------------------------

def pst_path_forward(x, params, *, patch_size, height, width, num_heads, num_layers):
    N, C, H, W = x.shape
    assert (H, W) == (height, width)
    ph, pw = patch_size
    sx, sy = math.floor(W / pw), math.floor(H / ph)
    kx, ky = W - sx * (pw - 1), H - sy * (ph - 1)
    Ho = (H - ky) // sy + 1
    Wo = (W - kx) // sx + 1
    S = Ho * Wo
    T = S + 1                       # real token count (zero pad token + patches)
    Tp = ((T + 7) // 8) * 8         # token axis padded to a sublane multiple
    E = params['pw_w'].shape[1]
    K = ky * kx
    CK = C * K

    # --- im2col glue (reshape/transpose only), rows in (c, ky, kx) order ---
    if ky == sy and kx == sx and Ho * ky == H and Wo * kx == W:
        # non-overlapping patches -> single space-to-depth
        xp = x.reshape(N, C, Ho, ky, Wo, kx)
        xp = jnp.transpose(xp, (0, 2, 4, 1, 3, 5)).reshape(N, S, CK)
    else:
        patches = []
        for i in range(Ho):
            for j in range(Wo):
                patches.append(
                    x[:, :, i * sy:i * sy + ky, j * sx:j * sx + kx].reshape(N, 1, CK))
        xp = jnp.concatenate(patches, axis=1)
    # zero rows for the padded token 0 and the Tp-T alignment rows
    xp_pad = jnp.pad(xp, ((0, 0), (1, Tp - T), (0, 0))).reshape(N * Tp, CK)

    # --- fold depthwise + pointwise conv into one (CK, E) bf16 matmul weight ---
    w_fold = (params['dw_w'][:, :, None] * params['pw_w'][:, None, :]).reshape(CK, E)
    w_fold = w_fold.astype(jnp.bfloat16)
    b_fold = params['dw_b'] @ params['pw_w'] + params['pw_b']               # (1, E)

    # positional table with the conv bias folded in for real patch tokens; the zero
    # token (row 0) gets only pos[0]; alignment pad rows (>= T) stay exactly zero.
    pos = params['pos'][:T, :]
    pos_pad = jnp.concatenate(
        [pos[0:1, :],
         pos[1:T, :] + b_fold,
         jnp.zeros((Tp - T, E), jnp.float32)], axis=0)                      # (Tp, E)

    # one fused pallas_call: embed (layer-0) + all transformer layers, activation
    # VMEM-resident across the whole encoder
    h = pst_path_pallas(xp_pad, w_fold, pos_pad, params,
                        num_heads=num_heads, num_layers=num_layers,
                        T=T, Tp=Tp, N=N)                                    # (N*Tp, E)

    # layout glue only: drop pad tokens, batch-major -> seq-first (T, N, E)
    return jnp.transpose(h.reshape(N, Tp, E)[:, :T, :], (1, 0, 2))


# ---------------------------------- main ----------------------------------

if __name__ == "__main__":
    # Small config consistent with the module: batch=2, in_channels=4, 16x16 image,
    # 4x4 patches, embedding_dim=128, num_heads=4, num_layers=3, dim_feedforward=1024.
    batch, in_channels, height, width = 2, 4, 16, 16
    patch_size = (4, 4)
    embedding_dim, num_heads, num_layers, dim_ff = 128, 4, 3, 1024

    sx, sy = math.floor(width / patch_size[1]), math.floor(height / patch_size[0])
    kx, ky = width - sx * (patch_size[1] - 1), height - sy * (patch_size[0] - 1)

    key = jax.random.PRNGKey(0)
    k_in, k_param = jax.random.split(key)
    x = jax.random.normal(k_in, (batch, in_channels, height, width), jnp.float32)
    params = init_params(k_param, in_channels, embedding_dim, num_heads, num_layers,
                         dim_ff, ky, kx)

    fwd = jax.jit(functools.partial(
        pst_path_forward, patch_size=patch_size, height=height, width=width,
        num_heads=num_heads, num_layers=num_layers))

    # TODO(synk): nn.Dropout inside TransformerEncoderLayer is treated as identity
    # (inference behaviour); training-mode stochastic dropout is not implemented.
    out = jax.block_until_ready(fwd(x, params))

    S = ((height - ky) // sy + 1) * ((width - kx) // sx + 1)
    assert out.shape == (S + 1, batch, embedding_dim), out.shape
    assert bool(jnp.all(jnp.isfinite(out)))
    print("KERNEL_OK")
</pallas_src>

<mosaic_0001>
module attributes {stable_mosaic.version = 11 : i64} {
  func.func @_pst_path_kernel(%arg0: i32, %arg1: memref<48x64xf32, #tpu.memory_space<vmem>>, %arg2: memref<64x128xbf16, #tpu.memory_space<vmem>>, %arg3: memref<24x128xf32, #tpu.memory_space<vmem>>, %arg4: memref<1x128x384xbf16, #tpu.memory_space<vmem>>, %arg5: memref<1x1x384xf32, #tpu.memory_space<vmem>>, %arg6: memref<1x128x128xbf16, #tpu.memory_space<vmem>>, %arg7: memref<1x1x128xf32, #tpu.memory_space<vmem>>, %arg8: memref<1x128x1024xbf16, #tpu.memory_space<vmem>>, %arg9: memref<1x1x1024xf32, #tpu.memory_space<vmem>>, %arg10: memref<1x1024x128xbf16, #tpu.memory_space<vmem>>, %arg11: memref<1x1x128xf32, #tpu.memory_space<vmem>>, %arg12: memref<1x1x128xf32, #tpu.memory_space<vmem>>, %arg13: memref<1x1x128xf32, #tpu.memory_space<vmem>>, %arg14: memref<1x1x128xf32, #tpu.memory_space<vmem>>, %arg15: memref<1x1x128xf32, #tpu.memory_space<vmem>>, %arg16: memref<48x128xf32, #tpu.memory_space<vmem>>) attributes {dimension_semantics = [#tpu.dimension_semantics<arbitrary>], iteration_bounds = array<i64: 3>, scalar_prefetch = 0 : i64, scratch_operands = 0 : i64, tpu.core_type = #tpu.core_type<tc>, window_params = [{pipeline_mode = #tpu.pipeline_mode<synchronous>, transform_indices = @transform_0, window_bounds = array<i64: 48, 64>}, {pipeline_mode = #tpu.pipeline_mode<synchronous>, transform_indices = @transform_1, window_bounds = array<i64: 64, 128>}, {pipeline_mode = #tpu.pipeline_mode<synchronous>, transform_indices = @transform_2, window_bounds = array<i64: 24, 128>}, {transform_indices = @transform_3, window_bounds = array<i64: 1, 128, 384>}, {transform_indices = @transform_4, window_bounds = array<i64: 1, 1, 384>}, {transform_indices = @transform_5, window_bounds = array<i64: 1, 128, 128>}, {transform_indices = @transform_6, window_bounds = array<i64: 1, 1, 128>}, {transform_indices = @transform_7, window_bounds = array<i64: 1, 128, 1024>}, {transform_indices = @transform_8, window_bounds = array<i64: 1, 1, 1024>}, {transform_indices = @transform_9, window_bounds = array<i64: 1, 1024, 128>}, {transform_indices = @transform_10, window_bounds = array<i64: 1, 1, 128>}, {transform_indices = @transform_11, window_bounds = array<i64: 1, 1, 128>}, {transform_indices = @transform_12, window_bounds = array<i64: 1, 1, 128>}, {transform_indices = @transform_13, window_bounds = array<i64: 1, 1, 128>}, {transform_indices = @transform_14, window_bounds = array<i64: 1, 1, 128>}, {pipeline_mode = #tpu.pipeline_mode<synchronous>, transform_indices = @transform_15, window_bounds = array<i64: 48, 128>}]} {
    %c0_i32 = arith.constant 0 : i32
    %0 = arith.cmpi eq, %arg0, %c0_i32 : i32
    %1 = arith.extui %0 : i1 to i32
    %c0_i32_0 = arith.constant 0 : i32
    %2 = arith.cmpi ne, %1, %c0_i32_0 : i32
    scf.if %2 {
      %c0_89 = arith.constant 0 : index
      %c0_90 = arith.constant 0 : index
      %260 = vector.load %arg1[%c0_89, %c0_90] : memref<48x64xf32, #tpu.memory_space<vmem>>, vector<48x64xf32>
      %261 = arith.truncf %260 : vector<48x64xf32> to vector<48x64xbf16>
      %c0_91 = arith.constant 0 : index
      %c0_92 = arith.constant 0 : index
      %262 = vector.load %arg2[%c0_91, %c0_92] : memref<64x128xbf16, #tpu.memory_space<vmem>>, vector<64x128xbf16>
      %cst_93 = arith.constant dense<0.000000e+00> : vector<48x128xf32>
      %263 = tpu.matmul %261, %262, %cst_93 {dimension_numbers = #tpu.dot_dimension_numbers<[1], [0], [0], [1], [0, 0, 1, 1], [], []>} : vector<48x64xbf16>, vector<64x128xbf16>, vector<48x128xf32> -> vector<48x128xf32>
      %c0_94 = arith.constant 0 : index
      %c0_95 = arith.constant 0 : index
      %264 = vector.load %arg3[%c0_94, %c0_95] : memref<24x128xf32, #tpu.memory_space<vmem>>, vector<24x128xf32>
      %265 = tpu.concatenate %264, %264 in 0 : vector<24x128xf32>, vector<24x128xf32> -> vector<48x128xf32>
      %266 = arith.addf %263, %265 : vector<48x128xf32>
      %c0_96 = arith.constant 0 : index
      %c0_97 = arith.constant 0 : index
      %267 = vector.load %arg16[%c0_96, %c0_97] : memref<48x128xf32, #tpu.memory_space<vmem>>, vector<48x128xf32>
      tpu.vector_store %arg16[%c0_96, %c0_97], %266 {strides = array<i32>} : memref<48x128xf32, #tpu.memory_space<vmem>>, vector<48x128xf32>,
    } else {
    }
    %c0 = arith.constant 0 : index
    %c0_1 = arith.constant 0 : index
    %3 = vector.load %arg16[%c0, %c0_1] : memref<48x128xf32, #tpu.memory_space<vmem>>, vector<48x128xf32>
    %4 = arith.truncf %3 : vector<48x128xf32> to vector<48x128xbf16>
    %c0_2 = arith.constant 0 : index
    %c0_3 = arith.constant 0 : index
    %c0_4 = arith.constant 0 : index
    %5 = vector.load %arg4[%c0_2, %c0_3, %c0_4] : memref<1x128x384xbf16, #tpu.memory_space<vmem>>, vector<1x128x384xbf16>
    %6 = vector.shape_cast %5 : vector<1x128x384xbf16> to vector<128x384xbf16>
    %cst = arith.constant dense<0.000000e+00> : vector<48x384xf32>
    %7 = tpu.matmul %4, %6, %cst {dimension_numbers = #tpu.dot_dimension_numbers<[1], [0], [0], [1], [0, 0, 1, 1], [], []>} : vector<48x128xbf16>, vector<128x384xbf16>, vector<48x384xf32> -> vector<48x384xf32>
    %c0_5 = arith.constant 0 : index
    %c0_6 = arith.constant 0 : index
    %c0_7 = arith.constant 0 : index
    %8 = vector.load %arg5[%c0_5, %c0_6, %c0_7] : memref<1x1x384xf32, #tpu.memory_space<vmem>>, vector<1x1x384xf32>
    %9 = vector.shape_cast %8 : vector<1x1x384xf32> to vector<1x384xf32>
    %10 = vector.broadcast %9 : vector<1x384xf32> to vector<48x384xf32>
    %11 = arith.addf %7, %10 : vector<48x384xf32>
    %12 = vector.extract_strided_slice %11 {offsets = [0, 0], sizes = [48, 128], strides = [1, 1]} : vector<48x384xf32> to vector<48x128xf32>
    %cst_8 = arith.constant 0.176776692 : f32
    %13 = vector.broadcast %cst_8 : f32 to vector<48x128xf32>
    %14 = arith.mulf %12, %13 : vector<48x128xf32>
    %15 = arith.truncf %14 : vector<48x128xf32> to vector<48x128xbf16>
    %16 = vector.extract_strided_slice %11 {offsets = [0, 128], sizes = [48, 128], strides = [1, 1]} : vector<48x384xf32> to vector<48x128xf32>
    %17 = arith.truncf %16 : vector<48x128xf32> to vector<48x128xbf16>
    %18 = vector.extract_strided_slice %11 {offsets = [0, 256], sizes = [48, 128], strides = [1, 1]} : vector<48x384xf32> to vector<48x128xf32>
    %19 = arith.truncf %18 : vector<48x128xf32> to vector<48x128xbf16>
    %20 = tpu.iota {dimensions = array<i32: 1>} : vector<1x24xi32>
    %c17_i32 = arith.constant 17 : i32
    %21 = vector.broadcast %c17_i32 : i32 to vector<1x24xi32>
    %22 = arith.cmpi slt, %20, %21 : vector<1x24xi32>
    %cst_9 = arith.constant 0.000000e+00 : f32
    %cst_10 = arith.constant -1.000000e+30 : f32
    %23 = vector.broadcast %cst_9 : f32 to vector<1x24xf32>
    %24 = vector.broadcast %cst_10 : f32 to vector<1x24xf32>
    %25 = arith.select %22, %23, %24 : vector<1x24xi1>, vector<1x24xf32>
    %26 = vector.extract_strided_slice %15 {offsets = [0, 0], sizes = [24, 128], strides = [1, 1]} : vector<48x128xbf16> to vector<24x128xbf16>
    %27 = vector.extract_strided_slice %17 {offsets = [0, 0], sizes = [24, 128], strides = [1, 1]} : vector<48x128xbf16> to vector<24x128xbf16>
    %28 = vector.extract_strided_slice %19 {offsets = [0, 0], sizes = [24, 128], strides = [1, 1]} : vector<48x128xbf16> to vector<24x128xbf16>
    %29 = vector.extract_strided_slice %26 {offsets = [0, 0], sizes = [24, 32], strides = [1, 1]} : vector<24x128xbf16> to vector<24x32xbf16>
    %30 = vector.extract_strided_slice %27 {offsets = [0, 0], sizes = [24, 32], strides = [1, 1]} : vector<24x128xbf16> to vector<24x32xbf16>
    "tpu.trace_start"() <{level = 10 : i32, message = "td,sd->ts"}> : () -> ()
    %cst_11 = arith.constant dense<0.000000e+00> : vector<24x24xf32>
    %31 = tpu.matmul %29, %30, %cst_11 {dimension_numbers = #tpu.dot_dimension_numbers<[1], [1], [0], [0], [0, 0, 1, 0], [], []>} : vector<24x32xbf16>, vector<24x32xbf16>, vector<24x24xf32> -> vector<24x24xf32>
    "tpu.trace_stop"() : () -> ()
    %32 = vector.broadcast %25 : vector<1x24xf32> to vector<24x24xf32>
    %33 = arith.addf %31, %32 : vector<24x24xf32>
    %cst_12 = arith.constant dense<0xFF800000> : vector<24xf32>
    %34 = vector.multi_reduction <maximumf>, %33, %cst_12 [1] : vector<24x24xf32> to vector<24xf32>
    %35 = vector.shape_cast %34 : vector<24xf32> to vector<24x1xf32>
    %36 = vector.broadcast %35 : vector<24x1xf32> to vector<24x24xf32>
    %37 = arith.subf %33, %36 : vector<24x24xf32>
    %38 = math.exp %37 : vector<24x24xf32>
    %cst_13 = arith.constant dense<0.000000e+00> : vector<24xf32>
    %39 = vector.multi_reduction <add>, %38, %cst_13 [1] : vector<24x24xf32> to vector<24xf32>
    %40 = vector.shape_cast %39 : vector<24xf32> to vector<24x1xf32>
    %41 = tpu.reciprocal %40 {approx = true} : vector<24x1xf32> -> vector<24x1xf32>
    %42 = vector.broadcast %41 : vector<24x1xf32> to vector<24x24xf32>
    %43 = arith.mulf %38, %42 : vector<24x24xf32>
    %44 = arith.truncf %43 : vector<24x24xf32> to vector<24x24xbf16>
    %45 = vector.extract_strided_slice %28 {offsets = [0, 0], sizes = [24, 32], strides = [1, 1]} : vector<24x128xbf16> to vector<24x32xbf16>
    %cst_14 = arith.constant dense<0.000000e+00> : vector<24x32xf32>
    %46 = tpu.matmul %44, %45, %cst_14 {dimension_numbers = #tpu.dot_dimension_numbers<[1], [0], [0], [1], [0, 0, 1, 1], [], []>} : vector<24x24xbf16>, vector<24x32xbf16>, vector<24x32xf32> -> vector<24x32xf32>
    %47 = vector.extract_strided_slice %26 {offsets = [0, 32], sizes = [24, 32], strides = [1, 1]} : vector<24x128xbf16> to vector<24x32xbf16>
    %48 = vector.extract_strided_slice %27 {offsets = [0, 32], sizes = [24, 32], strides = [1, 1]} : vector<24x128xbf16> to vector<24x32xbf16>
    "tpu.trace_start"() <{level = 10 : i32, message = "td,sd->ts"}> : () -> ()
    %cst_15 = arith.constant dense<0.000000e+00> : vector<24x24xf32>
    %49 = tpu.matmul %47, %48, %cst_15 {dimension_numbers = #tpu.dot_dimension_numbers<[1], [1], [0], [0], [0, 0, 1, 0], [], []>} : vector<24x32xbf16>, vector<24x32xbf16>, vector<24x24xf32> -> vector<24x24xf32>
    "tpu.trace_stop"() : () -> ()
    %50 = vector.broadcast %25 : vector<1x24xf32> to vector<24x24xf32>
    %51 = arith.addf %49, %50 : vector<24x24xf32>
    %cst_16 = arith.constant dense<0xFF800000> : vector<24xf32>
    %52 = vector.multi_reduction <maximumf>, %51, %cst_16 [1] : vector<24x24xf32> to vector<24xf32>
    %53 = vector.shape_cast %52 : vector<24xf32> to vector<24x1xf32>
    %54 = vector.broadcast %53 : vector<24x1xf32> to vector<24x24xf32>
    %55 = arith.subf %51, %54 : vector<24x24xf32>
    %56 = math.exp %55 : vector<24x24xf32>
    %cst_17 = arith.constant dense<0.000000e+00> : vector<24xf32>
    %57 = vector.multi_reduction <add>, %56, %cst_17 [1] : vector<24x24xf32> to vector<24xf32>
    %58 = vector.shape_cast %57 : vector<24xf32> to vector<24x1xf32>
    %59 = tpu.reciprocal %58 {approx = true} : vector<24x1xf32> -> vector<24x1xf32>
    %60 = vector.broadcast %59 : vector<24x1xf32> to vector<24x24xf32>
    %61 = arith.mulf %56, %60 : vector<24x24xf32>
    %62 = arith.truncf %61 : vector<24x24xf32> to vector<24x24xbf16>
    %63 = vector.extract_strided_slice %28 {offsets = [0, 32], sizes = [24, 32], strides = [1, 1]} : vector<24x128xbf16> to vector<24x32xbf16>
    %cst_18 = arith.constant dense<0.000000e+00> : vector<24x32xf32>
    %64 = tpu.matmul %62, %63, %cst_18 {dimension_numbers = #tpu.dot_dimension_numbers<[1], [0], [0], [1], [0, 0, 1, 1], [], []>} : vector<24x24xbf16>, vector<24x32xbf16>, vector<24x32xf32> -> vector<24x32xf32>
    %65 = vector.extract_strided_slice %26 {offsets = [0, 64], sizes = [24, 32], strides = [1, 1]} : vector<24x128xbf16> to vector<24x32xbf16>
    %66 = vector.extract_strided_slice %27 {offsets = [0, 64], sizes = [24, 32], strides = [1, 1]} : vector<24x128xbf16> to vector<24x32xbf16>
    "tpu.trace_start"() <{level = 10 : i32, message = "td,sd->ts"}> : () -> ()
    %cst_19 = arith.constant dense<0.000000e+00> : vector<24x24xf32>
    %67 = tpu.matmul %65, %66, %cst_19 {dimension_numbers = #tpu.dot_dimension_numbers<[1], [1], [0], [0], [0, 0, 1, 0], [], []>} : vector<24x32xbf16>, vector<24x32xbf16>, vector<24x24xf32> -> vector<24x24xf32>
    "tpu.trace_stop"() : () -> ()
    %68 = vector.broadcast %25 : vector<1x24xf32> to vector<24x24xf32>
    %69 = arith.addf %67, %68 : vector<24x24xf32>
    %cst_20 = arith.constant dense<0xFF800000> : vector<24xf32>
    %70 = vector.multi_reduction <maximumf>, %69, %cst_20 [1] : vector<24x24xf32> to vector<24xf32>
    %71 = vector.shape_cast %70 : vector<24xf32> to vector<24x1xf32>
    %72 = vector.broadcast %71 : vector<24x1xf32> to vector<24x24xf32>
    %73 = arith.subf %69, %72 : vector<24x24xf32>
    %74 = math.exp %73 : vector<24x24xf32>
    %cst_21 = arith.constant dense<0.000000e+00> : vector<24xf32>
    %75 = vector.multi_reduction <add>, %74, %cst_21 [1] : vector<24x24xf32> to vector<24xf32>
    %76 = vector.shape_cast %75 : vector<24xf32> to vector<24x1xf32>
    %77 = tpu.reciprocal %76 {approx = true} : vector<24x1xf32> -> vector<24x1xf32>
    %78 = vector.broadcast %77 : vector<24x1xf32> to vector<24x24xf32>
    %79 = arith.mulf %74, %78 : vector<24x24xf32>
    %80 = arith.truncf %79 : vector<24x24xf32> to vector<24x24xbf16>
    %81 = vector.extract_strided_slice %28 {offsets = [0, 64], sizes = [24, 32], strides = [1, 1]} : vector<24x128xbf16> to vector<24x32xbf16>
    %cst_22 = arith.constant dense<0.000000e+00> : vector<24x32xf32>
    %82 = tpu.matmul %80, %81, %cst_22 {dimension_numbers = #tpu.dot_dimension_numbers<[1], [0], [0], [1], [0, 0, 1, 1], [], []>} : vector<24x24xbf16>, vector<24x32xbf16>, vector<24x32xf32> -> vector<24x32xf32>
    %83 = vector.extract_strided_slice %26 {offsets = [0, 96], sizes = [24, 32], strides = [1, 1]} : vector<24x128xbf16> to vector<24x32xbf16>
    %84 = vector.extract_strided_slice %27 {offsets = [0, 96], sizes = [24, 32], strides = [1, 1]} : vector<24x128xbf16> to vector<24x32xbf16>
    "tpu.trace_start"() <{level = 10 : i32, message = "td,sd->ts"}> : () -> ()
    %cst_23 = arith.constant dense<0.000000e+00> : vector<24x24xf32>
    %85 = tpu.matmul %83, %84, %cst_23 {dimension_numbers = #tpu.dot_dimension_numbers<[1], [1], [0], [0], [0, 0, 1, 0], [], []>} : vector<24x32xbf16>, vector<24x32xbf16>, vector<24x24xf32> -> vector<24x24xf32>
    "tpu.trace_stop"() : () -> ()
    %86 = vector.broadcast %25 : vector<1x24xf32> to vector<24x24xf32>
    %87 = arith.addf %85, %86 : vector<24x24xf32>
    %cst_24 = arith.constant dense<0xFF800000> : vector<24xf32>
    %88 = vector.multi_reduction <maximumf>, %87, %cst_24 [1] : vector<24x24xf32> to vector<24xf32>
    %89 = vector.shape_cast %88 : vector<24xf32> to vector<24x1xf32>
    %90 = vector.broadcast %89 : vector<24x1xf32> to vector<24x24xf32>
    %91 = arith.subf %87, %90 : vector<24x24xf32>
    %92 = math.exp %91 : vector<24x24xf32>
    %cst_25 = arith.constant dense<0.000000e+00> : vector<24xf32>
    %93 = vector.multi_reduction <add>, %92, %cst_25 [1] : vector<24x24xf32> to vector<24xf32>
    %94 = vector.shape_cast %93 : vector<24xf32> to vector<24x1xf32>
    %95 = tpu.reciprocal %94 {approx = true} : vector<24x1xf32> -> vector<24x1xf32>
    %96 = vector.broadcast %95 : vector<24x1xf32> to vector<24x24xf32>
    %97 = arith.mulf %92, %96 : vector<24x24xf32>
    %98 = arith.truncf %97 : vector<24x24xf32> to vector<24x24xbf16>
    %99 = vector.extract_strided_slice %28 {offsets = [0, 96], sizes = [24, 32], strides = [1, 1]} : vector<24x128xbf16> to vector<24x32xbf16>
    %cst_26 = arith.constant dense<0.000000e+00> : vector<24x32xf32>
    %100 = tpu.matmul %98, %99, %cst_26 {dimension_numbers = #tpu.dot_dimension_numbers<[1], [0], [0], [1], [0, 0, 1, 1], [], []>} : vector<24x24xbf16>, vector<24x32xbf16>, vector<24x32xf32> -> vector<24x32xf32>
    %101 = tpu.concatenate %46, %64, %82, %100 in 1 : vector<24x32xf32>, vector<24x32xf32>, vector<24x32xf32>, vector<24x32xf32> -> vector<24x128xf32>
    %102 = vector.extract_strided_slice %15 {offsets = [24, 0], sizes = [24, 128], strides = [1, 1]} : vector<48x128xbf16> to vector<24x128xbf16>
    %103 = vector.extract_strided_slice %17 {offsets = [24, 0], sizes = [24, 128], strides = [1, 1]} : vector<48x128xbf16> to vector<24x128xbf16>
    %104 = vector.extract_strided_slice %19 {offsets = [24, 0], sizes = [24, 128], strides = [1, 1]} : vector<48x128xbf16> to vector<24x128xbf16>
    %105 = vector.extract_strided_slice %102 {offsets = [0, 0], sizes = [24, 32], strides = [1, 1]} : vector<24x128xbf16> to vector<24x32xbf16>
    %106 = vector.extract_strided_slice %103 {offsets = [0, 0], sizes = [24, 32], strides = [1, 1]} : vector<24x128xbf16> to vector<24x32xbf16>
    "tpu.trace_start"() <{level = 10 : i32, message = "td,sd->ts"}> : () -> ()
    %cst_27 = arith.constant dense<0.000000e+00> : vector<24x24xf32>
    %107 = tpu.matmul %105, %106, %cst_27 {dimension_numbers = #tpu.dot_dimension_numbers<[1], [1], [0], [0], [0, 0, 1, 0], [], []>} : vector<24x32xbf16>, vector<24x32xbf16>, vector<24x24xf32> -> vector<24x24xf32>
    "tpu.trace_stop"() : () -> ()
    %108 = vector.broadcast %25 : vector<1x24xf32> to vector<24x24xf32>
    %109 = arith.addf %107, %108 : vector<24x24xf32>
    %cst_28 = arith.constant dense<0xFF800000> : vector<24xf32>
    %110 = vector.multi_reduction <maximumf>, %109, %cst_28 [1] : vector<24x24xf32> to vector<24xf32>
    %111 = vector.shape_cast %110 : vector<24xf32> to vector<24x1xf32>
    %112 = vector.broadcast %111 : vector<24x1xf32> to vector<24x24xf32>
    %113 = arith.subf %109, %112 : vector<24x24xf32>
    %114 = math.exp %113 : vector<24x24xf32>
    %cst_29 = arith.constant dense<0.000000e+00> : vector<24xf32>
    %115 = vector.multi_reduction <add>, %114, %cst_29 [1] : vector<24x24xf32> to vector<24xf32>
    %116 = vector.shape_cast %115 : vector<24xf32> to vector<24x1xf32>
    %117 = tpu.reciprocal %116 {approx = true} : vector<24x1xf32> -> vector<24x1xf32>
    %118 = vector.broadcast %117 : vector<24x1xf32> to vector<24x24xf32>
    %119 = arith.mulf %114, %118 : vector<24x24xf32>
    %120 = arith.truncf %119 : vector<24x24xf32> to vector<24x24xbf16>
    %121 = vector.extract_strided_slice %104 {offsets = [0, 0], sizes = [24, 32], strides = [1, 1]} : vector<24x128xbf16> to vector<24x32xbf16>
    %cst_30 = arith.constant dense<0.000000e+00> : vector<24x32xf32>
    %122 = tpu.matmul %120, %121, %cst_30 {dimension_numbers = #tpu.dot_dimension_numbers<[1], [0], [0], [1], [0, 0, 1, 1], [], []>} : vector<24x24xbf16>, vector<24x32xbf16>, vector<24x32xf32> -> vector<24x32xf32>
    %123 = vector.extract_strided_slice %102 {offsets = [0, 32], sizes = [24, 32], strides = [1, 1]} : vector<24x128xbf16> to vector<24x32xbf16>
    %124 = vector.extract_strided_slice %103 {offsets = [0, 32], sizes = [24, 32], strides = [1, 1]} : vector<24x128xbf16> to vector<24x32xbf16>
    "tpu.trace_start"() <{level = 10 : i32, message = "td,sd->ts"}> : () -> ()
    %cst_31 = arith.constant dense<0.000000e+00> : vector<24x24xf32>
    %125 = tpu.matmul %123, %124, %cst_31 {dimension_numbers = #tpu.dot_dimension_numbers<[1], [1], [0], [0], [0, 0, 1, 0], [], []>} : vector<24x32xbf16>, vector<24x32xbf16>, vector<24x24xf32> -> vector<24x24xf32>
    "tpu.trace_stop"() : () -> ()
    %126 = vector.broadcast %25 : vector<1x24xf32> to vector<24x24xf32>
    %127 = arith.addf %125, %126 : vector<24x24xf32>
    %cst_32 = arith.constant dense<0xFF800000> : vector<24xf32>
    %128 = vector.multi_reduction <maximumf>, %127, %cst_32 [1] : vector<24x24xf32> to vector<24xf32>
    %129 = vector.shape_cast %128 : vector<24xf32> to vector<24x1xf32>
    %130 = vector.broadcast %129 : vector<24x1xf32> to vector<24x24xf32>
    %131 = arith.subf %127, %130 : vector<24x24xf32>
    %132 = math.exp %131 : vector<24x24xf32>
    %cst_33 = arith.constant dense<0.000000e+00> : vector<24xf32>
    %133 = vector.multi_reduction <add>, %132, %cst_33 [1] : vector<24x24xf32> to vector<24xf32>
    %134 = vector.shape_cast %133 : vector<24xf32> to vector<24x1xf32>
    %135 = tpu.reciprocal %134 {approx = true} : vector<24x1xf32> -> vector<24x1xf32>
    %136 = vector.broadcast %135 : vector<24x1xf32> to vector<24x24xf32>
    %137 = arith.mulf %132, %136 : vector<24x24xf32>
    %138 = arith.truncf %137 : vector<24x24xf32> to vector<24x24xbf16>
    %139 = vector.extract_strided_slice %104 {offsets = [0, 32], sizes = [24, 32], strides = [1, 1]} : vector<24x128xbf16> to vector<24x32xbf16>
    %cst_34 = arith.constant dense<0.000000e+00> : vector<24x32xf32>
    %140 = tpu.matmul %138, %139, %cst_34 {dimension_numbers = #tpu.dot_dimension_numbers<[1], [0], [0], [1], [0, 0, 1, 1], [], []>} : vector<24x24xbf16>, vector<24x32xbf16>, vector<24x32xf32> -> vector<24x32xf32>
    %141 = vector.extract_strided_slice %102 {offsets = [0, 64], sizes = [24, 32], strides = [1, 1]} : vector<24x128xbf16> to vector<24x32xbf16>
    %142 = vector.extract_strided_slice %103 {offsets = [0, 64], sizes = [24, 32], strides = [1, 1]} : vector<24x128xbf16> to vector<24x32xbf16>
    "tpu.trace_start"() <{level = 10 : i32, message = "td,sd->ts"}> : () -> ()
    %cst_35 = arith.constant dense<0.000000e+00> : vector<24x24xf32>
    %143 = tpu.matmul %141, %142, %cst_35 {dimension_numbers = #tpu.dot_dimension_numbers<[1], [1], [0], [0], [0, 0, 1, 0], [], []>} : vector<24x32xbf16>, vector<24x32xbf16>, vector<24x24xf32> -> vector<24x24xf32>
    "tpu.trace_stop"() : () -> ()
    %144 = vector.broadcast %25 : vector<1x24xf32> to vector<24x24xf32>
    %145 = arith.addf %143, %144 : vector<24x24xf32>
    %cst_36 = arith.constant dense<0xFF800000> : vector<24xf32>
    %146 = vector.multi_reduction <maximumf>, %145, %cst_36 [1] : vector<24x24xf32> to vector<24xf32>
    %147 = vector.shape_cast %146 : vector<24xf32> to vector<24x1xf32>
    %148 = vector.broadcast %147 : vector<24x1xf32> to vector<24x24xf32>
    %149 = arith.subf %145, %148 : vector<24x24xf32>
    %150 = math.exp %149 : vector<24x24xf32>
    %cst_37 = arith.constant dense<0.000000e+00> : vector<24xf32>
    %151 = vector.multi_reduction <add>, %150, %cst_37 [1] : vector<24x24xf32> to vector<24xf32>
    %152 = vector.shape_cast %151 : vector<24xf32> to vector<24x1xf32>
    %153 = tpu.reciprocal %152 {approx = true} : vector<24x1xf32> -> vector<24x1xf32>
    %154 = vector.broadcast %153 : vector<24x1xf32> to vector<24x24xf32>
    %155 = arith.mulf %150, %154 : vector<24x24xf32>
    %156 = arith.truncf %155 : vector<24x24xf32> to vector<24x24xbf16>
    %157 = vector.extract_strided_slice %104 {offsets = [0, 64], sizes = [24, 32], strides = [1, 1]} : vector<24x128xbf16> to vector<24x32xbf16>
    %cst_38 = arith.constant dense<0.000000e+00> : vector<24x32xf32>
    %158 = tpu.matmul %156, %157, %cst_38 {dimension_numbers = #tpu.dot_dimension_numbers<[1], [0], [0], [1], [0, 0, 1, 1], [], []>} : vector<24x24xbf16>, vector<24x32xbf16>, vector<24x32xf32> -> vector<24x32xf32>
    %159 = vector.extract_strided_slice %102 {offsets = [0, 96], sizes = [24, 32], strides = [1, 1]} : vector<24x128xbf16> to vector<24x32xbf16>
    %160 = vector.extract_strided_slice %103 {offsets = [0, 96], sizes = [24, 32], strides = [1, 1]} : vector<24x128xbf16> to vector<24x32xbf16>
    "tpu.trace_start"() <{level = 10 : i32, message = "td,sd->ts"}> : () -> ()
    %cst_39 = arith.constant dense<0.000000e+00> : vector<24x24xf32>
    %161 = tpu.matmul %159, %160, %cst_39 {dimension_numbers = #tpu.dot_dimension_numbers<[1], [1], [0], [0], [0, 0, 1, 0], [], []>} : vector<24x32xbf16>, vector<24x32xbf16>, vector<24x24xf32> -> vector<24x24xf32>
    "tpu.trace_stop"() : () -> ()
    %162 = vector.broadcast %25 : vector<1x24xf32> to vector<24x24xf32>
    %163 = arith.addf %161, %162 : vector<24x24xf32>
    %cst_40 = arith.constant dense<0xFF800000> : vector<24xf32>
    %164 = vector.multi_reduction <maximumf>, %163, %cst_40 [1] : vector<24x24xf32> to vector<24xf32>
    %165 = vector.shape_cast %164 : vector<24xf32> to vector<24x1xf32>
    %166 = vector.broadcast %165 : vector<24x1xf32> to vector<24x24xf32>
    %167 = arith.subf %163, %166 : vector<24x24xf32>
    %168 = math.exp %167 : vector<24x24xf32>
    %cst_41 = arith.constant dense<0.000000e+00> : vector<24xf32>
    %169 = vector.multi_reduction <add>, %168, %cst_41 [1] : vector<24x24xf32> to vector<24xf32>
    %170 = vector.shape_cast %169 : vector<24xf32> to vector<24x1xf32>
    %171 = tpu.reciprocal %170 {approx = true} : vector<24x1xf32> -> vector<24x1xf32>
    %172 = vector.broadcast %171 : vector<24x1xf32> to vector<24x24xf32>
    %173 = arith.mulf %168, %172 : vector<24x24xf32>
    %174 = arith.truncf %173 : vector<24x24xf32> to vector<24x24xbf16>
    %175 = vector.extract_strided_slice %104 {offsets = [0, 96], sizes = [24, 32], strides = [1, 1]} : vector<24x128xbf16> to vector<24x32xbf16>
    %cst_42 = arith.constant dense<0.000000e+00> : vector<24x32xf32>
    %176 = tpu.matmul %174, %175, %cst_42 {dimension_numbers = #tpu.dot_dimension_numbers<[1], [0], [0], [1], [0, 0, 1, 1], [], []>} : vector<24x24xbf16>, vector<24x32xbf16>, vector<24x32xf32> -> vector<24x32xf32>
    %177 = tpu.concatenate %122, %140, %158, %176 in 1 : vector<24x32xf32>, vector<24x32xf32>, vector<24x32xf32>, vector<24x32xf32> -> vector<24x128xf32>
    %178 = tpu.concatenate %101, %177 in 0 : vector<24x128xf32>, vector<24x128xf32> -> vector<48x128xf32>
    %179 = arith.truncf %178 : vector<48x128xf32> to vector<48x128xbf16>
    %c0_43 = arith.constant 0 : index
    %c0_44 = arith.constant 0 : index
    %c0_45 = arith.constant 0 : index
    %180 = vector.load %arg6[%c0_43, %c0_44, %c0_45] : memref<1x128x128xbf16, #tpu.memory_space<vmem>>, vector<1x128x128xbf16>
    %181 = vector.shape_cast %180 : vector<1x128x128xbf16> to vector<128x128xbf16>
    %cst_46 = arith.constant dense<0.000000e+00> : vector<48x128xf32>
    %182 = tpu.matmul %179, %181, %cst_46 {dimension_numbers = #tpu.dot_dimension_numbers<[1], [0], [0], [1], [0, 0, 1, 1], [], []>} : vector<48x128xbf16>, vector<128x128xbf16>, vector<48x128xf32> -> vector<48x128xf32>
    %c0_47 = arith.constant 0 : index
    %c0_48 = arith.constant 0 : index
    %c0_49 = arith.constant 0 : index
    %183 = vector.load %arg7[%c0_47, %c0_48, %c0_49] : memref<1x1x128xf32, #tpu.memory_space<vmem>>, vector<1x1x128xf32>
    %184 = vector.shape_cast %183 : vector<1x1x128xf32> to vector<1x128xf32>
    %185 = vector.broadcast %184 : vector<1x128xf32> to vector<48x128xf32>
    %186 = arith.addf %182, %185 : vector<48x128xf32>
    %187 = arith.addf %3, %186 : vector<48x128xf32>
    %cst_50 = arith.constant dense<0.000000e+00> : vector<48xf32>
    %188 = vector.multi_reduction <add>, %187, %cst_50 [1] : vector<48x128xf32> to vector<48xf32>
    %189 = vector.shape_cast %188 : vector<48xf32> to vector<48x1xf32>
    %cst_51 = arith.constant 1.280000e+02 : f32
    %190 = vector.broadcast %cst_51 : f32 to vector<48x1xf32>
    %191 = arith.divf %189, %190 : vector<48x1xf32>
    %192 = vector.broadcast %191 : vector<48x1xf32> to vector<48x128xf32>
    %193 = arith.subf %187, %192 : vector<48x128xf32>
    %194 = arith.mulf %193, %193 : vector<48x128xf32>
    %cst_52 = arith.constant dense<0.000000e+00> : vector<48xf32>
    %195 = vector.multi_reduction <add>, %194, %cst_52 [1] : vector<48x128xf32> to vector<48xf32>
    %196 = vector.shape_cast %195 : vector<48xf32> to vector<48x1xf32>
    %cst_53 = arith.constant 1.280000e+02 : f32
    %197 = vector.broadcast %cst_53 : f32 to vector<48x1xf32>
    %198 = arith.divf %196, %197 : vector<48x1xf32>
    %199 = vector.broadcast %191 : vector<48x1xf32> to vector<48x128xf32>
    %200 = arith.subf %187, %199 : vector<48x128xf32>
    %cst_54 = arith.constant 9.99999974E-6 : f32
    %201 = vector.broadcast %cst_54 : f32 to vector<48x1xf32>
    %202 = arith.addf %198, %201 : vector<48x1xf32>
    %203 = math.rsqrt %202 : vector<48x1xf32>
    %204 = vector.broadcast %203 : vector<48x1xf32> to vector<48x128xf32>
    %205 = arith.mulf %200, %204 : vector<48x128xf32>
    %c0_55 = arith.constant 0 : index
    %c0_56 = arith.constant 0 : index
    %c0_57 = arith.constant 0 : index
    %206 = vector.load %arg12[%c0_55, %c0_56, %c0_57] : memref<1x1x128xf32, #tpu.memory_space<vmem>>, vector<1x1x128xf32>
    %207 = vector.shape_cast %206 : vector<1x1x128xf32> to vector<1x128xf32>
    %208 = vector.broadcast %207 : vector<1x128xf32> to vector<48x128xf32>
    %209 = arith.mulf %205, %208 : vector<48x128xf32>
    %c0_58 = arith.constant 0 : index
    %c0_59 = arith.constant 0 : index
    %c0_60 = arith.constant 0 : index
    %210 = vector.load %arg13[%c0_58, %c0_59, %c0_60] : memref<1x1x128xf32, #tpu.memory_space<vmem>>, vector<1x1x128xf32>
    %211 = vector.shape_cast %210 : vector<1x1x128xf32> to vector<1x128xf32>
    %212 = vector.broadcast %211 : vector<1x128xf32> to vector<48x128xf32>
    %213 = arith.addf %209, %212 : vector<48x128xf32>
    %214 = arith.truncf %213 : vector<48x128xf32> to vector<48x128xbf16>
    %c0_61 = arith.constant 0 : index
    %c0_62 = arith.constant 0 : index
    %c0_63 = arith.constant 0 : index
    %215 = vector.load %arg8[%c0_61, %c0_62, %c0_63] : memref<1x128x1024xbf16, #tpu.memory_space<vmem>>, vector<1x128x1024xbf16>
    %216 = vector.shape_cast %215 : vector<1x128x1024xbf16> to vector<128x1024xbf16>
    %cst_64 = arith.constant dense<0.000000e+00> : vector<48x1024xf32>
    %217 = tpu.matmul %214, %216, %cst_64 {dimension_numbers = #tpu.dot_dimension_numbers<[1], [0], [0], [1], [0, 0, 1, 1], [], []>} : vector<48x128xbf16>, vector<128x1024xbf16>, vector<48x1024xf32> -> vector<48x1024xf32>
    %c0_65 = arith.constant 0 : index
    %c0_66 = arith.constant 0 : index
    %c0_67 = arith.constant 0 : index
    %218 = vector.load %arg9[%c0_65, %c0_66, %c0_67] : memref<1x1x1024xf32, #tpu.memory_space<vmem>>, vector<1x1x1024xf32>
    %219 = vector.shape_cast %218 : vector<1x1x1024xf32> to vector<1x1024xf32>
    %220 = vector.broadcast %219 : vector<1x1024xf32> to vector<48x1024xf32>
    %221 = arith.addf %217, %220 : vector<48x1024xf32>
    %cst_68 = arith.constant 0.000000e+00 : f32
    %222 = vector.broadcast %cst_68 : f32 to vector<48x1024xf32>
    %223 = arith.maximumf %221, %222 : vector<48x1024xf32>
    %224 = arith.truncf %223 : vector<48x1024xf32> to vector<48x1024xbf16>
    %c0_69 = arith.constant 0 : index
    %c0_70 = arith.constant 0 : index
    %c0_71 = arith.constant 0 : index
    %225 = vector.load %arg10[%c0_69, %c0_70, %c0_71] : memref<1x1024x128xbf16, #tpu.memory_space<vmem>>, vector<1x1024x128xbf16>
    %226 = vector.shape_cast %225 : vector<1x1024x128xbf16> to vector<1024x128xbf16>
    %cst_72 = arith.constant dense<0.000000e+00> : vector<48x128xf32>
    %227 = tpu.matmul %224, %226, %cst_72 {dimension_numbers = #tpu.dot_dimension_numbers<[1], [0], [0], [1], [0, 0, 1, 1], [], []>} : vector<48x1024xbf16>, vector<1024x128xbf16>, vector<48x128xf32> -> vector<48x128xf32>
    %c0_73 = arith.constant 0 : index
    %c0_74 = arith.constant 0 : index
    %c0_75 = arith.constant 0 : index
    %228 = vector.load %arg11[%c0_73, %c0_74, %c0_75] : memref<1x1x128xf32, #tpu.memory_space<vmem>>, vector<1x1x128xf32>
    %229 = vector.shape_cast %228 : vector<1x1x128xf32> to vector<1x128xf32>
    %230 = vector.broadcast %229 : vector<1x128xf32> to vector<48x128xf32>
    %231 = arith.addf %227, %230 : vector<48x128xf32>
    %232 = arith.addf %213, %231 : vector<48x128xf32>
    %cst_76 = arith.constant dense<0.000000e+00> : vector<48xf32>
    %233 = vector.multi_reduction <add>, %232, %cst_76 [1] : vector<48x128xf32> to vector<48xf32>
    %234 = vector.shape_cast %233 : vector<48xf32> to vector<48x1xf32>
    %cst_77 = arith.constant 1.280000e+02 : f32
    %235 = vector.broadcast %cst_77 : f32 to vector<48x1xf32>
    %236 = arith.divf %234, %235 : vector<48x1xf32>
    %237 = vector.broadcast %236 : vector<48x1xf32> to vector<48x128xf32>
    %238 = arith.subf %232, %237 : vector<48x128xf32>
    %239 = arith.mulf %238, %238 : vector<48x128xf32>
    %cst_78 = arith.constant dense<0.000000e+00> : vector<48xf32>
    %240 = vector.multi_reduction <add>, %239, %cst_78 [1] : vector<48x128xf32> to vector<48xf32>
    %241 = vector.shape_cast %240 : vector<48xf32> to vector<48x1xf32>
    %cst_79 = arith.constant 1.280000e+02 : f32
    %242 = vector.broadcast %cst_79 : f32 to vector<48x1xf32>
    %243 = arith.divf %241, %242 : vector<48x1xf32>
    %244 = vector.broadcast %236 : vector<48x1xf32> to vector<48x128xf32>
    %245 = arith.subf %232, %244 : vector<48x128xf32>
    %cst_80 = arith.constant 9.99999974E-6 : f32
    %246 = vector.broadcast %cst_80 : f32 to vector<48x1xf32>
    %247 = arith.addf %243, %246 : vector<48x1xf32>
    %248 = math.rsqrt %247 : vector<48x1xf32>
    %249 = vector.broadcast %248 : vector<48x1xf32> to vector<48x128xf32>
    %250 = arith.mulf %245, %249 : vector<48x128xf32>
    %c0_81 = arith.constant 0 : index
    %c0_82 = arith.constant 0 : index
    %c0_83 = arith.constant 0 : index
    %251 = vector.load %arg14[%c0_81, %c0_82, %c0_83] : memref<1x1x128xf32, #tpu.memory_space<vmem>>, vector<1x1x128xf32>
    %252 = vector.shape_cast %251 : vector<1x1x128xf32> to vector<1x128xf32>
    %253 = vector.broadcast %252 : vector<1x128xf32> to vector<48x128xf32>
    %254 = arith.mulf %250, %253 : vector<48x128xf32>
    %c0_84 = arith.constant 0 : index
    %c0_85 = arith.constant 0 : index
    %c0_86 = arith.constant 0 : index
    %255 = vector.load %arg15[%c0_84, %c0_85, %c0_86] : memref<1x1x128xf32, #tpu.memory_space<vmem>>, vector<1x1x128xf32>
    %256 = vector.shape_cast %255 : vector<1x1x128xf32> to vector<1x128xf32>
    %257 = vector.broadcast %256 : vector<1x128xf32> to vector<48x128xf32>
    %258 = arith.addf %254, %257 : vector<48x128xf32>
    %c0_87 = arith.constant 0 : index
    %c0_88 = arith.constant 0 : index
    %259 = vector.load %arg16[%c0_87, %c0_88] : memref<48x128xf32, #tpu.memory_space<vmem>>, vector<48x128xf32>
    tpu.vector_store %arg16[%c0_87, %c0_88], %258 {strides = array<i32>} : memref<48x128xf32, #tpu.memory_space<vmem>>, vector<48x128xf32>,
    return
  }
  func.func @transform_0(%arg0: i32) -> (i32, i32) {
    %c0_i32 = arith.constant 0 : i32
    %c0_i32_0 = arith.constant 0 : i32
    %c0_i32_1 = arith.constant 0 : i32
    return %c0_i32, %c0_i32_0 : i32, i32
  }
  func.func @transform_1(%arg0: i32) -> (i32, i32) {
    %c0_i32 = arith.constant 0 : i32
    %c0_i32_0 = arith.constant 0 : i32
    %c0_i32_1 = arith.constant 0 : i32
    return %c0_i32, %c0_i32_0 : i32, i32
  }
  func.func @transform_2(%arg0: i32) -> (i32, i32) {
    %c0_i32 = arith.constant 0 : i32
    %c0_i32_0 = arith.constant 0 : i32
    %c0_i32_1 = arith.constant 0 : i32
    return %c0_i32, %c0_i32_0 : i32, i32
  }
  func.func @transform_3(%arg0: i32) -> (i32, i32, i32) {
    %c0_i32 = arith.constant 0 : i32
    %c0_i32_0 = arith.constant 0 : i32
    %c0_i32_1 = arith.constant 0 : i32
    return %arg0, %c0_i32, %c0_i32_0 : i32, i32, i32
  }
  func.func @transform_4(%arg0: i32) -> (i32, i32, i32) {
    %c0_i32 = arith.constant 0 : i32
    %c0_i32_0 = arith.constant 0 : i32
    %c0_i32_1 = arith.constant 0 : i32
    return %arg0, %c0_i32, %c0_i32_0 : i32, i32, i32
  }
  func.func @transform_5(%arg0: i32) -> (i32, i32, i32) {
    %c0_i32 = arith.constant 0 : i32
    %c0_i32_0 = arith.constant 0 : i32
    %c0_i32_1 = arith.constant 0 : i32
    return %arg0, %c0_i32, %c0_i32_0 : i32, i32, i32
  }
  func.func @transform_6(%arg0: i32) -> (i32, i32, i32) {
    %c0_i32 = arith.constant 0 : i32
    %c0_i32_0 = arith.constant 0 : i32
    %c0_i32_1 = arith.constant 0 : i32
    return %arg0, %c0_i32, %c0_i32_0 : i32, i32, i32
  }
  func.func @transform_7(%arg0: i32) -> (i32, i32, i32) {
    %c0_i32 = arith.constant 0 : i32
    %c0_i32_0 = arith.constant 0 : i32
    %c0_i32_1 = arith.constant 0 : i32
    return %arg0, %c0_i32, %c0_i32_0 : i32, i32, i32
  }
  func.func @transform_8(%arg0: i32) -> (i32, i32, i32) {
    %c0_i32 = arith.constant 0 : i32
    %c0_i32_0 = arith.constant 0 : i32
    %c0_i32_1 = arith.constant 0 : i32
    return %arg0, %c0_i32, %c0_i32_0 : i32, i32, i32
  }
  func.func @transform_9(%arg0: i32) -> (i32, i32, i32) {
    %c0_i32 = arith.constant 0 : i32
    %c0_i32_0 = arith.constant 0 : i32
    %c0_i32_1 = arith.constant 0 : i32
    return %arg0, %c0_i32, %c0_i32_0 : i32, i32, i32
  }
  func.func @transform_10(%arg0: i32) -> (i32, i32, i32) {
    %c0_i32 = arith.constant 0 : i32
    %c0_i32_0 = arith.constant 0 : i32
    %c0_i32_1 = arith.constant 0 : i32
    return %arg0, %c0_i32, %c0_i32_0 : i32, i32, i32
  }
  func.func @transform_11(%arg0: i32) -> (i32, i32, i32) {
    %c0_i32 = arith.constant 0 : i32
    %c0_i32_0 = arith.constant 0 : i32
    %c0_i32_1 = arith.constant 0 : i32
    return %arg0, %c0_i32, %c0_i32_0 : i32, i32, i32
  }
  func.func @transform_12(%arg0: i32) -> (i32, i32, i32) {
    %c0_i32 = arith.constant 0 : i32
    %c0_i32_0 = arith.constant 0 : i32
    %c0_i32_1 = arith.constant 0 : i32
    return %arg0, %c0_i32, %c0_i32_0 : i32, i32, i32
  }
  func.func @transform_13(%arg0: i32) -> (i32, i32, i32) {
    %c0_i32 = arith.constant 0 : i32
    %c0_i32_0 = arith.constant 0 : i32
    %c0_i32_1 = arith.constant 0 : i32
    return %arg0, %c0_i32, %c0_i32_0 : i32, i32, i32
  }
  func.func @transform_14(%arg0: i32) -> (i32, i32, i32) {
    %c0_i32 = arith.constant 0 : i32
    %c0_i32_0 = arith.constant 0 : i32
    %c0_i32_1 = arith.constant 0 : i32
    return %arg0, %c0_i32, %c0_i32_0 : i32, i32, i32
  }
  func.func @transform_15(%arg0: i32) -> (i32, i32) {
    %c0_i32 = arith.constant 0 : i32
    %c0_i32_0 = arith.constant 0 : i32
    %c0_i32_1 = arith.constant 0 : i32
    return %c0_i32, %c0_i32_0 : i32, i32
  }
}

</mosaic_0001>

<llo_original>
// kernel: pst_path_forward.1
$region0: #{pst_path_forward.1}
  #allocation0 [shape = 'u32[]', space=smem, size = 0x4, offset = 0x4, fixed_abs, tag = 'smem constant byte address 0x4 - core index']
  #allocation1 [shape = 'u32[144,128]{1,0:T(1,128)}', space=vmem, size = 0x12000, scoped, tag = 'internal scratch']
  %s0 = inlined_call_operand.vmem [shape: f32[48,64], index: 0, kind: input, shape index: {}]
  %s1 = inlined_call_operand.vmem [shape: bf16[64,128], index: 1, kind: input, shape index: {}]
  %s2 = inlined_call_operand.vmem [shape: f32[24,128], index: 2, kind: input, shape index: {}]
  %s3 = inlined_call_operand.vmem [shape: bf16[3,128,384], index: 3, kind: input, shape index: {}]
  %s4 = inlined_call_operand.vmem [shape: f32[3,1,384], index: 4, kind: input, shape index: {}]
  %s5 = inlined_call_operand.vmem [shape: bf16[3,128,128], index: 5, kind: input, shape index: {}]
  %s6 = inlined_call_operand.vmem [shape: f32[3,1,128], index: 6, kind: input, shape index: {}]
  %s7 = inlined_call_operand.vmem [shape: bf16[3,128,1024], index: 7, kind: input, shape index: {}]
  %s8 = inlined_call_operand.vmem [shape: f32[3,1,1024], index: 8, kind: input, shape index: {}]
  %s9 = inlined_call_operand.hbm [shape: bf16[3,1024,128], index: 9, kind: input, shape index: {}]
  %s10 = inlined_call_operand.vmem [shape: f32[3,1,128], index: 10, kind: input, shape index: {}]
  %s11 = inlined_call_operand.vmem [shape: f32[3,1,128], index: 11, kind: input, shape index: {}]
  %s12 = inlined_call_operand.vmem [shape: f32[3,1,128], index: 12, kind: input, shape index: {}]
  %s13 = inlined_call_operand.vmem [shape: f32[3,1,128], index: 13, kind: input, shape index: {}]
  %s14 = inlined_call_operand.vmem [shape: f32[3,1,128], index: 14, kind: input, shape index: {}]
  %s15 = inlined_call_operand.vmem [shape: f32[48,128], index: 15, kind: output, shape index: {}]
  %s16 = sld [smem:[#allocation0]]
  $region101: #{pst_path_forward.1} parent=0
    _
  %s18 = ssub.s32 1, %s16
  %s19 = scalar_select 0, %s18, %s16
  $region1: #{pst_path_forward.1} parent=0
    #allocation2 [shape = 'u8[524288]{0}', space=vmem, size = 0x80000, scoped, tag = 'input window, operand 9']
    #allocation3 [shape = 's32[2]{0}', space=sflag, size = 0x8, scoped, tag = 'scoped memory for pst_path_forward.1']
    %20 = vsyncpa [#allocation3], 0
    %s21 = scalar_lea.sflag [#allocation3], 1
    %22 = vsyncpa %s21, 0
    loop: start=0, step=1, limit=5
    $region2: #{pst_path_forward.1} parent=1 // loop_pre_header
      _
    $region3: #{pst_path_forward.1} parent=1 // loop_header
      %s24 = sphi 0, %s28
      %p25 = scmp.ge.s32.totalorder %s24, 5
      %s32 = sphi 0, %s32
      %s34 = sphi 0, %s32
      %s35 = sphi 0, %s34
      %s49 = sphi 0, %s35
      %s53 = sphi 0, %s53
      %s55 = sphi 0, %s53
      %s56 = sphi 0, %s55
      %s70 = sphi 0, %s56
      %s74 = sphi 0, %s74
      %s76 = sphi 0, %s74
      %s77 = sphi 0, %s76
      %s91 = sphi 0, %s77
      %s97 = sphi 0, %s99
      %s100 = sphi 0, %s97
      %s101 = sphi 0, %s100
      %s117 = sphi 0, %s101
      %s123 = sphi 0, %s125
      %s126 = sphi 0, %s123
      %s127 = sphi 0, %s126
      %s143 = sphi 0, %s127
      %s149 = sphi 0, %s151
      %s152 = sphi 0, %s149
      %s153 = sphi 0, %s152
      %s169 = sphi 0, %s153
      %s175 = sphi 0, %s177
      %s178 = sphi 0, %s175
      %s179 = sphi 0, %s178
      %s195 = sphi 0, %s179
      %s201 = sphi 0, %s203
      %s204 = sphi 0, %s201
      %s205 = sphi 0, %s204
      %s221 = sphi 0, %s205
      %s227 = sphi 0, %s229
      %s230 = sphi 0, %s227
      %s231 = sphi 0, %s230
      %s247 = sphi 0, %s231
      %s253 = sphi 0, %s255
      %s256 = sphi 0, %s253
      %s257 = sphi 0, %s256
      %s273 = sphi 0, %s257
      %s279 = sphi 0, %s281
      %s282 = sphi 0, %s279
      %s283 = sphi 0, %s282
      %s299 = sphi 0, %s283
      %s305 = sphi 0, %s307
      %s308 = sphi 0, %s305
      %s309 = sphi 0, %s308
      %s325 = sphi 0, %s309
      %s331 = sphi 0, %s333
      %s334 = sphi 0, %s331
      %s335 = sphi 0, %s334
      %s351 = sphi 0, %s335
      %s357 = sphi 0, %s359
      %s360 = sphi 0, %s357
      %s361 = sphi 0, %s360
      %s377 = sphi 0, %s361
      %s383 = sphi 0, %s385
      %s386 = sphi 0, %s383
      %s387 = sphi 0, %s386
      %s403 = sphi 0, %s387
      %s407 = sphi 0, %s407
      %s409 = sphi 0, %s407
      %s410 = sphi 0, %s409
      %s424 = sphi 0, %s410
    $region4: #{pst_path_forward.1} parent=1 // loop_header_branch
      %27 = sbr.rel (%p25) target = $region8
    $region5: #{pst_path_forward.1} parent=1 // loop_body
      %s29 = ssub.s32 %s24, 1
      %s30 = ssub.s32 %s24, 2
      %s31 = sadd.s32 %s24, 1
      %s33 = sadd.s32 %s32, 1
      %p36 = scmp.eq.s32.totalorder %s24, 2
      %p37 = scmp.ne.s32.totalorder %s32, %s34
      %p38 = scmp.eq.s32.totalorder %s24, 0
      %p39 = por %p37, %p38
      %p40 = scmp.ne.s32.totalorder %s32, %s34
      %p41 = scmp.eq.s32.totalorder %s29, 2
      %p42 = por %p40, %p41
      %p43 = scmp.ne.s32.totalorder %s34, %s35
      %p44 = scmp.eq.s32.totalorder %s29, 0
      %p45 = por %p43, %p44
      %p46 = scmp.ne.s32.totalorder %s34, %s35
      %p47 = scmp.eq.s32.totalorder %s30, 2
      %p48 = por %p46, %p47
      %p50 = scmp.ne.s32.totalorder %s35, %s49
      %p51 = scmp.eq.s32.totalorder %s30, 0
      %p52 = por %p50, %p51
      %s54 = sadd.s32 %s53, 1
      %p57 = scmp.eq.s32.totalorder %s24, 2
      %p58 = scmp.ne.s32.totalorder %s53, %s55
      %p59 = scmp.eq.s32.totalorder %s24, 0
      %p60 = por %p58, %p59
      %p61 = scmp.ne.s32.totalorder %s53, %s55
      %p62 = scmp.eq.s32.totalorder %s29, 2
      %p63 = por %p61, %p62
      %p64 = scmp.ne.s32.totalorder %s55, %s56
      %p65 = scmp.eq.s32.totalorder %s29, 0
      %p66 = por %p64, %p65
      %p67 = scmp.ne.s32.totalorder %s55, %s56
      %p68 = scmp.eq.s32.totalorder %s30, 2
      %p69 = por %p67, %p68
      %p71 = scmp.ne.s32.totalorder %s56, %s70
      %p72 = scmp.eq.s32.totalorder %s30, 0
      %p73 = por %p71, %p72
      %s75 = sadd.s32 %s74, 1
      %p78 = scmp.eq.s32.totalorder %s24, 2
      %p79 = scmp.ne.s32.totalorder %s74, %s76
      %p80 = scmp.eq.s32.totalorder %s24, 0
      %p81 = por %p79, %p80
      %p82 = scmp.ne.s32.totalorder %s74, %s76
      %p83 = scmp.eq.s32.totalorder %s29, 2
      %p84 = por %p82, %p83
      %p85 = scmp.ne.s32.totalorder %s76, %s77
      %p86 = scmp.eq.s32.totalorder %s29, 0
      %p87 = por %p85, %p86
      %p88 = scmp.ne.s32.totalorder %s76, %s77
      %p89 = scmp.eq.s32.totalorder %s30, 2
      %p90 = por %p88, %p89
      %p92 = scmp.ne.s32.totalorder %s77, %s91
      %p93 = scmp.eq.s32.totalorder %s30, 0
      %p94 = por %p92, %p93
      %s95 = ssub.s32 %s24, %s31
      %p96 = scmp.eq.s32.totalorder %s95, 0
      %s98 = sadd.s32 %s97, 1
      %s99 = scalar_select %p96, %s97, %s98
      %p102 = pneg %p96
      %p103 = scmp.eq.s32.totalorder %s24, 2
      %p104 = por %p102, %p103
      %p105 = scmp.ne.s32.totalorder %s97, %s100
      %p106 = scmp.eq.s32.totalorder %s24, 0
      %p107 = por %p105, %p106
      %p108 = scmp.ne.s32.totalorder %s97, %s100
      %p109 = scmp.eq.s32.totalorder %s29, 2
      %p110 = por %p108, %p109
      %p111 = scmp.ne.s32.totalorder %s100, %s101
      %p112 = scmp.eq.s32.totalorder %s29, 0
      %p113 = por %p111, %p112
      %p114 = scmp.ne.s32.totalorder %s100, %s101
      %p115 = scmp.eq.s32.totalorder %s30, 2
      %p116 = por %p114, %p115
      %p118 = scmp.ne.s32.totalorder %s101, %s117
      %p119 = scmp.eq.s32.totalorder %s30, 0
      %p120 = por %p118, %p119
      %s121 = ssub.s32 %s24, %s31
      %p122 = scmp.eq.s32.totalorder %s121, 0
      %s124 = sadd.s32 %s123, 1
      %s125 = scalar_select %p122, %s123, %s124
      %p128 = pneg %p122
      %p129 = scmp.eq.s32.totalorder %s24, 2
      %p130 = por %p128, %p129
      %p131 = scmp.ne.s32.totalorder %s123, %s126
      %p132 = scmp.eq.s32.totalorder %s24, 0
      %p133 = por %p131, %p132
      %p134 = scmp.ne.s32.totalorder %s123, %s126
      %p135 = scmp.eq.s32.totalorder %s29, 2
      %p136 = por %p134, %p135
      %p137 = scmp.ne.s32.totalorder %s126, %s127
      %p138 = scmp.eq.s32.totalorder %s29, 0
      %p139 = por %p137, %p138
      %p140 = scmp.ne.s32.totalorder %s126, %s127
      %p141 = scmp.eq.s32.totalorder %s30, 2
      %p142 = por %p140, %p141
      %p144 = scmp.ne.s32.totalorder %s127, %s143
      %p145 = scmp.eq.s32.totalorder %s30, 0
      %p146 = por %p144, %p145
      %s147 = ssub.s32 %s24, %s31
      %p148 = scmp.eq.s32.totalorder %s147, 0
      %s150 = sadd.s32 %s149, 1
      %s151 = scalar_select %p148, %s149, %s150
      %p154 = pneg %p148
      %p155 = scmp.eq.s32.totalorder %s24, 2
      %p156 = por %p154, %p155
      %p157 = scmp.ne.s32.totalorder %s149, %s152
      %p158 = scmp.eq.s32.totalorder %s24, 0
      %p159 = por %p157, %p158
      %p160 = scmp.ne.s32.totalorder %s149, %s152
      %p161 = scmp.eq.s32.totalorder %s29, 2
      %p162 = por %p160, %p161
      %p163 = scmp.ne.s32.totalorder %s152, %s153
      %p164 = scmp.eq.s32.totalorder %s29, 0
      %p165 = por %p163, %p164
      %p166 = scmp.ne.s32.totalorder %s152, %s153
      %p167 = scmp.eq.s32.totalorder %s30, 2
      %p168 = por %p166, %p167
      %p170 = scmp.ne.s32.totalorder %s153, %s169
      %p171 = scmp.eq.s32.totalorder %s30, 0
      %p172 = por %p170, %p171
      %s173 = ssub.s32 %s24, %s31
      %p174 = scmp.eq.s32.totalorder %s173, 0
      %s176 = sadd.s32 %s175, 1
      %s177 = scalar_select %p174, %s175, %s176
      %p180 = pneg %p174
      %p181 = scmp.eq.s32.totalorder %s24, 2
      %p182 = por %p180, %p181
      %p183 = scmp.ne.s32.totalorder %s175, %s178
      %p184 = scmp.eq.s32.totalorder %s24, 0
      %p185 = por %p183, %p184
      %p186 = scmp.ne.s32.totalorder %s175, %s178
      %p187 = scmp.eq.s32.totalorder %s29, 2
      %p188 = por %p186, %p187
      %p189 = scmp.ne.s32.totalorder %s178, %s179
      %p190 = scmp.eq.s32.totalorder %s29, 0
      %p191 = por %p189, %p190
      %p192 = scmp.ne.s32.totalorder %s178, %s179
      %p193 = scmp.eq.s32.totalorder %s30, 2
      %p194 = por %p192, %p193
      %p196 = scmp.ne.s32.totalorder %s179, %s195
      %p197 = scmp.eq.s32.totalorder %s30, 0
      %p198 = por %p196, %p197
      %s199 = ssub.s32 %s24, %s31
      %p200 = scmp.eq.s32.totalorder %s199, 0
      %s202 = sadd.s32 %s201, 1
      %s203 = scalar_select %p200, %s201, %s202
      %p206 = pneg %p200
      %p207 = scmp.eq.s32.totalorder %s24, 2
      %p208 = por %p206, %p207
      %p209 = scmp.ne.s32.totalorder %s201, %s204
      %p210 = scmp.eq.s32.totalorder %s24, 0
      %p211 = por %p209, %p210
      %p212 = scmp.ne.s32.totalorder %s201, %s204
      %p213 = scmp.eq.s32.totalorder %s29, 2
      %p214 = por %p212, %p213
      %p215 = scmp.ne.s32.totalorder %s204, %s205
      %p216 = scmp.eq.s32.totalorder %s29, 0
      %p217 = por %p215, %p216
      %p218 = scmp.ne.s32.totalorder %s204, %s205
      %p219 = scmp.eq.s32.totalorder %s30, 2
      %p220 = por %p218, %p219
      %p222 = scmp.ne.s32.totalorder %s205, %s221
      %p223 = scmp.eq.s32.totalorder %s30, 0
      %p224 = por %p222, %p223
      %s225 = ssub.s32 %s24, %s31
      %p226 = scmp.eq.s32.totalorder %s225, 0
      %s228 = sadd.s32 %s227, 1
      %s229 = scalar_select %p226, %s227, %s228
      %p232 = pneg %p226
      %p233 = scmp.eq.s32.totalorder %s24, 2
      %p234 = por %p232, %p233
      %p235 = scmp.ne.s32.totalorder %s227, %s230
      %p236 = scmp.eq.s32.totalorder %s24, 0
      %p237 = por %p235, %p236
      %p238 = scmp.ne.s32.totalorder %s227, %s230
      %p239 = scmp.eq.s32.totalorder %s29, 2
      %p240 = por %p238, %p239
      %p241 = scmp.ne.s32.totalorder %s230, %s231
      %p242 = scmp.eq.s32.totalorder %s29, 0
      %p243 = por %p241, %p242
      %p244 = scmp.ne.s32.totalorder %s230, %s231
      %p245 = scmp.eq.s32.totalorder %s30, 2
      %p246 = por %p244, %p245
      %p248 = scmp.ne.s32.totalorder %s231, %s247
      %p249 = scmp.eq.s32.totalorder %s30, 0
      %p250 = por %p248, %p249
      %s251 = ssub.s32 %s24, %s31
      %p252 = scmp.eq.s32.totalorder %s251, 0
      %s254 = sadd.s32 %s253, 1
      %s255 = scalar_select %p252, %s253, %s254
      %p258 = pneg %p252
      %p259 = scmp.eq.s32.totalorder %s24, 2
      %p260 = por %p258, %p259
      %p261 = scmp.ne.s32.totalorder %s253, %s256
      %p262 = scmp.eq.s32.totalorder %s24, 0
      %p263 = por %p261, %p262
      %p264 = scmp.ne.s32.totalorder %s253, %s256
      %p265 = scmp.eq.s32.totalorder %s29, 2
      %p266 = por %p264, %p265
      %p267 = scmp.ne.s32.totalorder %s256, %s257
      %p268 = scmp.eq.s32.totalorder %s29, 0
      %p269 = por %p267, %p268
      %p270 = scmp.ne.s32.totalorder %s256, %s257
      %p271 = scmp.eq.s32.totalorder %s30, 2
      %p272 = por %p270, %p271
      %p274 = scmp.ne.s32.totalorder %s257, %s273
      %p275 = scmp.eq.s32.totalorder %s30, 0
      %p276 = por %p274, %p275
      %s277 = ssub.s32 %s24, %s31
      %p278 = scmp.eq.s32.totalorder %s277, 0
      %s280 = sadd.s32 %s279, 1
      %s281 = scalar_select %p278, %s279, %s280
      %p284 = pneg %p278
      %p285 = scmp.eq.s32.totalorder %s24, 2
      %p286 = por %p284, %p285
      %p287 = scmp.ne.s32.totalorder %s279, %s282
      %p288 = scmp.eq.s32.totalorder %s24, 0
      %p289 = por %p287, %p288
      %p290 = scmp.ne.s32.totalorder %s279, %s282
      %p291 = scmp.eq.s32.totalorder %s29, 2
      %p292 = por %p290, %p291
      %p293 = scmp.ne.s32.totalorder %s282, %s283
      %p294 = scmp.eq.s32.totalorder %s29, 0
      %p295 = por %p293, %p294
      %p296 = scmp.ne.s32.totalorder %s282, %s283
      %p297 = scmp.eq.s32.totalorder %s30, 2
      %p298 = por %p296, %p297
      %p300 = scmp.ne.s32.totalorder %s283, %s299
      %p301 = scmp.eq.s32.totalorder %s30, 0
      %p302 = por %p300, %p301
      %s303 = ssub.s32 %s24, %s31
      %p304 = scmp.eq.s32.totalorder %s303, 0
      %s306 = sadd.s32 %s305, 1
      %s307 = scalar_select %p304, %s305, %s306
      %p310 = pneg %p304
      %p311 = scmp.eq.s32.totalorder %s24, 2
      %p312 = por %p310, %p311
      %p313 = scmp.ne.s32.totalorder %s305, %s308
      %p314 = scmp.eq.s32.totalorder %s24, 0
      %p315 = por %p313, %p314
      %p316 = scmp.ne.s32.totalorder %s305, %s308
      %p317 = scmp.eq.s32.totalorder %s29, 2
      %p318 = por %p316, %p317
      %p319 = scmp.ne.s32.totalorder %s308, %s309
      %p320 = scmp.eq.s32.totalorder %s29, 0
      %p321 = por %p319, %p320
      %p322 = scmp.ne.s32.totalorder %s308, %s309
      %p323 = scmp.eq.s32.totalorder %s30, 2
      %p324 = por %p322, %p323
      %p326 = scmp.ne.s32.totalorder %s309, %s325
      %p327 = scmp.eq.s32.totalorder %s30, 0
      %p328 = por %p326, %p327
      %s329 = ssub.s32 %s24, %s31
      %p330 = scmp.eq.s32.totalorder %s329, 0
      %s332 = sadd.s32 %s331, 1
      %s333 = scalar_select %p330, %s331, %s332
      %p336 = pneg %p330
      %p337 = scmp.eq.s32.totalorder %s24, 2
      %p338 = por %p336, %p337
      %p339 = scmp.ne.s32.totalorder %s331, %s334
      %p340 = scmp.eq.s32.totalorder %s24, 0
      %p341 = por %p339, %p340
      %p342 = scmp.ne.s32.totalorder %s331, %s334
      %p343 = scmp.eq.s32.totalorder %s29, 2
      %p344 = por %p342, %p343
      %p345 = scmp.ne.s32.totalorder %s334, %s335
      %p346 = scmp.eq.s32.totalorder %s29, 0
      %p347 = por %p345, %p346
      %p348 = scmp.ne.s32.totalorder %s334, %s335
      %p349 = scmp.eq.s32.totalorder %s30, 2
      %p350 = por %p348, %p349
      %p352 = scmp.ne.s32.totalorder %s335, %s351
      %p353 = scmp.eq.s32.totalorder %s30, 0
      %p354 = por %p352, %p353
      %s355 = ssub.s32 %s24, %s31
      %p356 = scmp.eq.s32.totalorder %s355, 0
      %s358 = sadd.s32 %s357, 1
      %s359 = scalar_select %p356, %s357, %s358
      %p362 = pneg %p356
      %p363 = scmp.eq.s32.totalorder %s24, 2
      %p364 = por %p362, %p363
      %p365 = scmp.ne.s32.totalorder %s357, %s360
      %p366 = scmp.eq.s32.totalorder %s24, 0
      %p367 = por %p365, %p366
      %p368 = scmp.ne.s32.totalorder %s357, %s360
      %p369 = scmp.eq.s32.totalorder %s29, 2
      %p370 = por %p368, %p369
      %p371 = scmp.ne.s32.totalorder %s360, %s361
      %p372 = scmp.eq.s32.totalorder %s29, 0
      %p373 = por %p371, %p372
      %p374 = scmp.ne.s32.totalorder %s360, %s361
      %p375 = scmp.eq.s32.totalorder %s30, 2
      %p376 = por %p374, %p375
      %p378 = scmp.ne.s32.totalorder %s361, %s377
      %p379 = scmp.eq.s32.totalorder %s30, 0
      %p380 = por %p378, %p379
      %s381 = ssub.s32 %s24, %s31
      %p382 = scmp.eq.s32.totalorder %s381, 0
      %s384 = sadd.s32 %s383, 1
      %s385 = scalar_select %p382, %s383, %s384
      %p388 = pneg %p382
      %p389 = scmp.eq.s32.totalorder %s24, 2
      %p390 = por %p388, %p389
      %p391 = scmp.ne.s32.totalorder %s383, %s386
      %p392 = scmp.eq.s32.totalorder %s24, 0
      %p393 = por %p391, %p392
      %p394 = scmp.ne.s32.totalorder %s383, %s386
      %p395 = scmp.eq.s32.totalorder %s29, 2
      %p396 = por %p394, %p395
      %p397 = scmp.ne.s32.totalorder %s386, %s387
      %p398 = scmp.eq.s32.totalorder %s29, 0
      %p399 = por %p397, %p398
      %p400 = scmp.ne.s32.totalorder %s386, %s387
      %p401 = scmp.eq.s32.totalorder %s30, 2
      %p402 = por %p400, %p401
      %p404 = scmp.ne.s32.totalorder %s387, %s403
      %p405 = scmp.eq.s32.totalorder %s30, 0
      %p406 = por %p404, %p405
      %s408 = sadd.s32 %s407, 1
      %p411 = scmp.eq.s32.totalorder %s24, 2
      %p412 = scmp.ne.s32.totalorder %s407, %s409
      %p413 = scmp.eq.s32.totalorder %s24, 0
      %p414 = por %p412, %p413
      %p415 = scmp.ne.s32.totalorder %s407, %s409
      %p416 = scmp.eq.s32.totalorder %s29, 2
      %p417 = por %p415, %p416
      %p418 = scmp.ne.s32.totalorder %s409, %s410
      %p419 = scmp.eq.s32.totalorder %s29, 0
      %p420 = por %p418, %p419
      %p421 = scmp.ne.s32.totalorder %s409, %s410
      %p422 = scmp.eq.s32.totalorder %s30, 2
      %p423 = por %p421, %p422
      %p425 = scmp.ne.s32.totalorder %s410, %s424
      %p426 = scmp.eq.s32.totalorder %s30, 0
      %p427 = por %p425, %p426
      %p428 = scmp.le.s32.totalorder 1, %s24
      %p429 = scmp.lt.s32.totalorder %s24, 4
      %p430 = pnand %p428, %p429
      %p431 = pneg %p430
      // Predicated region
      $region9: #{pst_path_forward.1} parent=5 // pred_check
        _
      $region10: #{pst_path_forward.1} parent=5 // pred_check_branch
        %433 = sbr.rel (%p430) target = $region12
      $region11: #{pst_path_forward.1} parent=5 // pred_region
        %s434 = ssub.s32 %s24, 1
        // Predicated region
        $region13: #{pst_path_forward.1} parent=11 // pred_check
          %p435 = pneg %p45
        $region14: #{pst_path_forward.1} parent=11 // pred_check_branch
          %437 = sbr.rel (%p435) target = $region16
        $region15: #{pst_path_forward.1} parent=11 // pred_region
          _
        $region16: #{pst_path_forward.1} parent=11 // pred_fallthru
          _
        // Predicated region
        $region17: #{pst_path_forward.1} parent=11 // pred_check
          %p438 = pneg %p66
        $region18: #{pst_path_forward.1} parent=11 // pred_check_branch
          %440 = sbr.rel (%p438) target = $region20
        $region19: #{pst_path_forward.1} parent=11 // pred_region
          _
        $region20: #{pst_path_forward.1} parent=11 // pred_fallthru
          _
        // Predicated region
        $region21: #{pst_path_forward.1} parent=11 // pred_check
          %p441 = pneg %p87
        $region22: #{pst_path_forward.1} parent=11 // pred_check_branch
          %443 = sbr.rel (%p441) target = $region24
        $region23: #{pst_path_forward.1} parent=11 // pred_region
          _
        $region24: #{pst_path_forward.1} parent=11 // pred_fallthru
          _
      $region12: #{pst_path_forward.1} parent=5 // pred_fallthru
        _
      %p444 = scmp.lt.s32.totalorder %s24, 3
      // Predicated region
      $region25: #{pst_path_forward.1} parent=5 // pred_check
        %p445 = pneg %p444
      $region26: #{pst_path_forward.1} parent=5 // pred_check_branch
        %447 = sbr.rel (%p445) target = $region28
      $region27: #{pst_path_forward.1} parent=5 // pred_region
        // Predicated region
        $region29: #{pst_path_forward.1} parent=27 // pred_check
          %p448 = pneg %p107
        $region30: #{pst_path_forward.1} parent=27 // pred_check_branch
          %450 = sbr.rel (%p448) target = $region32
        $region31: #{pst_path_forward.1} parent=27 // pred_region
          %p451 = scmp.lt.s32.totalorder %s24, 2
          %s452 = scalar_select %p451, %s24, 2
          %s453 = smul.addr %s452, 48
          %s454 = smul.addr %s453, 4
          %s455 = scalar_lea.vmem %s3, %s454
        $region32: #{pst_path_forward.1} parent=27 // pred_fallthru
          _
        // Predicated region
        $region33: #{pst_path_forward.1} parent=27 // pred_check
          %p456 = pneg %p133
        $region34: #{pst_path_forward.1} parent=27 // pred_check_branch
          %458 = sbr.rel (%p456) target = $region36
        $region35: #{pst_path_forward.1} parent=27 // pred_region
          %p459 = scmp.lt.s32.totalorder %s24, 2
          %s460 = scalar_select %p459, %s24, 2
          %s461 = smul.addr %s460, 3
          %s462 = scalar_lea.vmem %s4, %s461
        $region36: #{pst_path_forward.1} parent=27 // pred_fallthru
          _
        // Predicated region
        $region37: #{pst_path_forward.1} parent=27 // pred_check
          %p463 = pneg %p159
        $region38: #{pst_path_forward.1} parent=27 // pred_check_branch
          %465 = sbr.rel (%p463) target = $region40
        $region39: #{pst_path_forward.1} parent=27 // pred_region
          %p466 = scmp.lt.s32.totalorder %s24, 2
          %s467 = scalar_select %p466, %s24, 2
          %s468 = smul.addr %s467, 16
          %s469 = smul.addr %s468, 4
          %s470 = scalar_lea.vmem %s5, %s469
        $region40: #{pst_path_forward.1} parent=27 // pred_fallthru
          _
        // Predicated region
        $region41: #{pst_path_forward.1} parent=27 // pred_check
          %p471 = pneg %p185
        $region42: #{pst_path_forward.1} parent=27 // pred_check_branch
          %473 = sbr.rel (%p471) target = $region44
        $region43: #{pst_path_forward.1} parent=27 // pred_region
          %p474 = scmp.lt.s32.totalorder %s24, 2
          %s475 = scalar_select %p474, %s24, 2
          %s476 = scalar_lea.vmem %s6, %s475
        $region44: #{pst_path_forward.1} parent=27 // pred_fallthru
          _
        // Predicated region
        $region45: #{pst_path_forward.1} parent=27 // pred_check
          %p477 = pneg %p211
        $region46: #{pst_path_forward.1} parent=27 // pred_check_branch
          %479 = sbr.rel (%p477) target = $region48
        $region47: #{pst_path_forward.1} parent=27 // pred_region
          %p480 = scmp.lt.s32.totalorder %s24, 2
          %s481 = scalar_select %p480, %s24, 2
          %s482 = smul.addr %s481, 128
          %s483 = smul.addr %s482, 4
          %s484 = scalar_lea.vmem %s7, %s483
        $region48: #{pst_path_forward.1} parent=27 // pred_fallthru
          _
        // Predicated region
        $region49: #{pst_path_forward.1} parent=27 // pred_check
          %p485 = pneg %p237
        $region50: #{pst_path_forward.1} parent=27 // pred_check_branch
          %487 = sbr.rel (%p485) target = $region52
        $region51: #{pst_path_forward.1} parent=27 // pred_region
          %p488 = scmp.lt.s32.totalorder %s24, 2
          %s489 = scalar_select %p488, %s24, 2
          %s490 = smul.addr %s489, 8
          %s491 = scalar_lea.vmem %s8, %s490
        $region52: #{pst_path_forward.1} parent=27 // pred_fallthru
          _
        // Predicated region
        $region53: #{pst_path_forward.1} parent=27 // pred_check
          %p492 = pneg %p263
        $region54: #{pst_path_forward.1} parent=27 // pred_check_branch
          %494 = sbr.rel (%p492) target = $region56
        $region55: #{pst_path_forward.1} parent=27 // pred_region
          %s495 = sand.u32 %s253, 1
          %s496 = scalar_lea.sflag [#allocation3], %s495
          %s497 = sand.u32 %s253, 1
          %s498 = smul.addr %s497, 512
          %s499 = scalar_lea.vmem [#allocation2], %s498
          %s501 = ssub.s32 8192, 8192
          %502 = vsyncadd %s496, %s501
          %s503 = smul.addr %s24, 128
          %s504 = smul.addr %s503, 64
          %s505 = scalar_lea.hbm %s9, %s504
          %s506 = sshll.u32 %s499, 4
          %s507 = int_to_ptr.vmem [resolvable:$true] %s506
          %512 = dma.hbm_to_vmem [thread:$0]  %s505, 8192, %s507, %s496, 64, 64, 4
        $region56: #{pst_path_forward.1} parent=27 // pred_fallthru
          _
        // Predicated region
        $region57: #{pst_path_forward.1} parent=27 // pred_check
          %p513 = pneg %p289
        $region58: #{pst_path_forward.1} parent=27 // pred_check_branch
          %515 = sbr.rel (%p513) target = $region60
        $region59: #{pst_path_forward.1} parent=27 // pred_region
          %p516 = scmp.lt.s32.totalorder %s24, 2
          %s517 = scalar_select %p516, %s24, 2
          %s518 = scalar_lea.vmem %s10, %s517
        $region60: #{pst_path_forward.1} parent=27 // pred_fallthru
          _
        // Predicated region
        $region61: #{pst_path_forward.1} parent=27 // pred_check
          %p519 = pneg %p315
        $region62: #{pst_path_forward.1} parent=27 // pred_check_branch
          %521 = sbr.rel (%p519) target = $region64
        $region63: #{pst_path_forward.1} parent=27 // pred_region
          %p522 = scmp.lt.s32.totalorder %s24, 2
          %s523 = scalar_select %p522, %s24, 2
          %s524 = scalar_lea.vmem %s11, %s523
        $region64: #{pst_path_forward.1} parent=27 // pred_fallthru
          _
        // Predicated region
        $region65: #{pst_path_forward.1} parent=27 // pred_check
          %p525 = pneg %p341
        $region66: #{pst_path_forward.1} parent=27 // pred_check_branch
          %527 = sbr.rel (%p525) target = $region68
        $region67: #{pst_path_forward.1} parent=27 // pred_region
          %p528 = scmp.lt.s32.totalorder %s24, 2
          %s529 = scalar_select %p528, %s24, 2
          %s530 = scalar_lea.vmem %s12, %s529
        $region68: #{pst_path_forward.1} parent=27 // pred_fallthru
          _
        // Predicated region
        $region69: #{pst_path_forward.1} parent=27 // pred_check
          %p531 = pneg %p367
        $region70: #{pst_path_forward.1} parent=27 // pred_check_branch
          %533 = sbr.rel (%p531) target = $region72
        $region71: #{pst_path_forward.1} parent=27 // pred_region
          %p534 = scmp.lt.s32.totalorder %s24, 2
          %s535 = scalar_select %p534, %s24, 2
          %s536 = scalar_lea.vmem %s13, %s535
        $region72: #{pst_path_forward.1} parent=27 // pred_fallthru
          _
        // Predicated region
        $region73: #{pst_path_forward.1} parent=27 // pred_check
          %p537 = pneg %p393
        $region74: #{pst_path_forward.1} parent=27 // pred_check_branch
          %539 = sbr.rel (%p537) target = $region76
        $region75: #{pst_path_forward.1} parent=27 // pred_region
          %p540 = scmp.lt.s32.totalorder %s24, 2
          %s541 = scalar_select %p540, %s24, 2
          %s542 = scalar_lea.vmem %s14, %s541
        $region76: #{pst_path_forward.1} parent=27 // pred_fallthru
          _
      $region28: #{pst_path_forward.1} parent=5 // pred_fallthru
        _
      %p543 = scmp.le.s32.totalorder 1, %s24
      %p544 = scmp.lt.s32.totalorder %s24, 4
      %p545 = pnand %p543, %p544
      %p546 = pneg %p545
      // Predicated region
      $region77: #{pst_path_forward.1} parent=5 // pred_check
        _
      $region78: #{pst_path_forward.1} parent=5 // pred_check_branch
        %548 = sbr.rel (%p545) target = $region80
      $region79: #{pst_path_forward.1} parent=5 // pred_region
        %s549 = ssub.s32 %s24, 1
        %s550 = sand.u32 %s256, 1
        %s551 = scalar_lea.sflag [#allocation3], %s550
        %s552 = sand.u32 %s256, 1
        %s553 = smul.addr %s552, 512
        %s554 = scalar_lea.vmem [#allocation2], %s553
        // Predicated region
        $region81: #{pst_path_forward.1} parent=79 // pred_check
          %p555 = pneg %p269
        $region82: #{pst_path_forward.1} parent=79 // pred_check_branch
          %557 = sbr.rel (%p555) target = $region84
        $region83: #{pst_path_forward.1} parent=79 // pred_region
          %558 = dma.done %s551, 8192
        $region84: #{pst_path_forward.1} parent=79 // pred_fallthru
          _
        %p559 = pneg %p45
        %p560 = pneg %p42
        %p561 = pneg %p66
        %p562 = pneg %p63
        %p563 = pneg %p87
        %p564 = pneg %p84
        %p565 = scmp.lt.s32.totalorder %s29, 2
        %s566 = scalar_select %p565, %s29, 2
        %s567 = smul.addr %s566, 48
        %s568 = smul.addr %s567, 4
        %s569 = scalar_lea.vmem %s3, %s568
        %p570 = pneg %p113
        %p571 = pneg %p110
        %p572 = scmp.lt.s32.totalorder %s29, 2
        %s573 = scalar_select %p572, %s29, 2
        %s574 = smul.addr %s573, 3
        %s575 = scalar_lea.vmem %s4, %s574
        %p576 = pneg %p139
        %p577 = pneg %p136
        %p578 = scmp.lt.s32.totalorder %s29, 2
        %s579 = scalar_select %p578, %s29, 2
        %s580 = smul.addr %s579, 16
        %s581 = smul.addr %s580, 4
        %s582 = scalar_lea.vmem %s5, %s581
        %p583 = pneg %p165
        %p584 = pneg %p162
        %p585 = scmp.lt.s32.totalorder %s29, 2
        %s586 = scalar_select %p585, %s29, 2
        %s587 = scalar_lea.vmem %s6, %s586
        %p588 = pneg %p191
        %p589 = pneg %p188
        %p590 = scmp.lt.s32.totalorder %s29, 2
        %s591 = scalar_select %p590, %s29, 2
        %s592 = smul.addr %s591, 128
        %s593 = smul.addr %s592, 4
        %s594 = scalar_lea.vmem %s7, %s593
        %p595 = pneg %p217
        %p596 = pneg %p214
        %p597 = scmp.lt.s32.totalorder %s29, 2
        %s598 = scalar_select %p597, %s29, 2
        %s599 = smul.addr %s598, 8
        %s600 = scalar_lea.vmem %s8, %s599
        %p601 = pneg %p243
        %p602 = pneg %p240
        %s603 = sand.u32 %s256, 1
        %s604 = scalar_lea.sflag [#allocation3], %s603
        %s605 = sand.u32 %s256, 1
        %s606 = smul.addr %s605, 512
        %s607 = scalar_lea.vmem [#allocation2], %s606
        %p608 = pneg %p269
        %p609 = pneg %p266
        %p610 = scmp.lt.s32.totalorder %s29, 2
        %s611 = scalar_select %p610, %s29, 2
        %s612 = scalar_lea.vmem %s10, %s611
        %p613 = pneg %p295
        %p614 = pneg %p292
        %p615 = scmp.lt.s32.totalorder %s29, 2
        %s616 = scalar_select %p615, %s29, 2
        %s617 = scalar_lea.vmem %s11, %s616
        %p618 = pneg %p321
        %p619 = pneg %p318
        %p620 = scmp.lt.s32.totalorder %s29, 2
        %s621 = scalar_select %p620, %s29, 2
        %s622 = scalar_lea.vmem %s12, %s621
        %p623 = pneg %p347
        %p624 = pneg %p344
        %p625 = scmp.lt.s32.totalorder %s29, 2
        %s626 = scalar_select %p625, %s29, 2
        %s627 = scalar_lea.vmem %s13, %s626
        %p628 = pneg %p373
        %p629 = pneg %p370
        %p630 = scmp.lt.s32.totalorder %s29, 2
        %s631 = scalar_select %p630, %s29, 2
        %s632 = scalar_lea.vmem %s14, %s631
        %p633 = pneg %p399
        %p634 = pneg %p396
        %p635 = pneg %p420
        %p636 = pneg %p417
        %p637 = scmp.lt.s32.totalorder %s29, 2
        %s638 = scalar_select %p637, %s29, 2
        %s639 = smul.addr %s638, 48
        %s640 = smul.addr %s639, 4
        %s641 = scalar_lea.vmem %s3, %s640
        %p642 = scmp.lt.s32.totalorder %s29, 2
        %s643 = scalar_select %p642, %s29, 2
        %s644 = smul.addr %s643, 3
        %s645 = scalar_lea.vmem %s4, %s644
        %p646 = scmp.lt.s32.totalorder %s29, 2
        %s647 = scalar_select %p646, %s29, 2
        %s648 = smul.addr %s647, 16
        %s649 = smul.addr %s648, 4
        %s650 = scalar_lea.vmem %s5, %s649
        %p651 = scmp.lt.s32.totalorder %s29, 2
        %s652 = scalar_select %p651, %s29, 2
        %s653 = scalar_lea.vmem %s6, %s652
        %p654 = scmp.lt.s32.totalorder %s29, 2
        %s655 = scalar_select %p654, %s29, 2
        %s656 = smul.addr %s655, 128
        %s657 = smul.addr %s656, 4
        %s658 = scalar_lea.vmem %s7, %s657
        %p659 = scmp.lt.s32.totalorder %s29, 2
        %s660 = scalar_select %p659, %s29, 2
        %s661 = smul.addr %s660, 8
        %s662 = scalar_lea.vmem %s8, %s661
        %p663 = scmp.lt.s32.totalorder %s29, 2
        %s664 = scalar_select %p663, %s29, 2
        %s665 = scalar_lea.vmem %s10, %s664
        %p666 = scmp.lt.s32.totalorder %s29, 2
        %s667 = scalar_select %p666, %s29, 2
        %s668 = scalar_lea.vmem %s11, %s667
        %p669 = scmp.lt.s32.totalorder %s29, 2
        %s670 = scalar_select %p669, %s29, 2
        %s671 = scalar_lea.vmem %s12, %s670
        %p672 = scmp.lt.s32.totalorder %s29, 2
        %s673 = scalar_select %p672, %s29, 2
        %s674 = scalar_lea.vmem %s13, %s673
        %p675 = scmp.lt.s32.totalorder %s29, 2
        %s676 = scalar_select %p675, %s29, 2
        %s677 = scalar_lea.vmem %s14, %s676
        %p679 = scmp.eq.s32.totalorder %s29, 0
        // Predicated region
        $region85: #{pst_path_forward.1} parent=79 // pred_check
          %p680 = pneg %p679
        $region86: #{pst_path_forward.1} parent=79 // pred_check_branch
          %682 = sbr.rel (%p680) target = $region88
        $region87: #{pst_path_forward.1} parent=79 // pred_region
          %v683 = vld [vmem:[%s0] sm:$0xff]
          %v684 = vld [vmem:[%s0 + $0x8] sm:$0xff]
          %v685 = vld [vmem:[%s0 + $0x10] sm:$0xff]
          %v686 = vld [vmem:[%s0 + $0x18] sm:$0xff]
          %v687 = vld [vmem:[%s0 + $0x20] sm:$0xff]
          %v688 = vld [vmem:[%s0 + $0x28] sm:$0xff]
          %v689 = vpack.c.bf16 %v684, %v683
          %v690 = vpack.c.bf16 %v686, %v685
          %v691 = vpack.c.bf16 %v688, %v687
          %v692 = vld [vmem:[%s1] sm:$0xf]
          %v693 = vld [vmem:[%s1 + $0x4] sm:$0xf]
          %v694 = vld [vmem:[%s1 + $0x8] sm:$0xf]
          %v695 = vld [vmem:[%s1 + $0xc] sm:$0xf]
          %v696 = vld [vmem:[%s1 + $0x10] sm:$0xf]
          %v697 = vld [vmem:[%s1 + $0x14] sm:$0xf]
          %v698 = vld [vmem:[%s1 + $0x18] sm:$0xf]
          %v699 = vld [vmem:[%s1 + $0x1c] sm:$0xf]
          %v700 = vld [vmem:[%s2] sm:$0xff]
          %v701 = vld [vmem:[%s2 + $0x8] sm:$0xff]
          %v702 = vld [vmem:[%s2 + $0x10] sm:$0xff]
          %v711 = vunpack.c.l.b16 %v692
          %v712 = vunpack.c.l.b16 %v693
          %v713 = vunpack.c.l.b16 %v694
          %v714 = vunpack.c.l.b16 %v695
          %v715 = vunpack.c.l.b16 %v696
          %v716 = vunpack.c.l.b16 %v697
          %v717 = vunpack.c.l.b16 %v698
          %v718 = vunpack.c.l.b16 %v699
          %v719 = vpack.c.b16 %v712, %v711
          %v720 = vpack.c.b16 %v714, %v713
          %v721 = vpack.c.b16 %v716, %v715
          %v722 = vpack.c.b16 %v718, %v717
          %vm727 = vcmask 523264
          %v729 = vsel %vm727, %v689, 0
          %v732 = vsel %vm727, %v690, 0
          %v735 = vsel %vm727, %v691, 0
          %737 = vmatprep.subr.bf16.mxu0 0
          %738 = vmatpush1.bf16.msra.mxu0 %v719
          %739 = vmatprep.subr.bf16.mxu0 0
          %740 = vmatpush1.bf16.msra.mxu0 %v720
          %741 = vmatprep.subr.bf16.mxu0 0
          %742 = vmatpush1.bf16.msra.mxu0 %v721
          %743 = vmatprep.subr.bf16.mxu0 0
          %744 = vmatpush1.bf16.msra.mxu0 %v722
          %745 = vmatprep.subr.bf16.mxu0 0
          %746 = vmatpush1.bf16.msra.mxu0 0
          %747 = vmatprep.subr.bf16.mxu0 0
          %748 = vmatpush1.bf16.msra.mxu0 0
          %749 = vmatprep.subr.bf16.mxu0 0
          %750 = vmatpush1.bf16.msra.mxu0 0
          %751 = vmatprep.subr.bf16.mxu0 0
          %752 = vmatpush1.bf16.msra.mxu0 0
          %753 = vmatprep.subr.bf16.mxu0 0
          %754 = vmatpush1.bf16.msra.mxu0 0
          %755 = vmatprep.subr.bf16.mxu0 0
          %756 = vmatpush1.bf16.msra.mxu0 0
          %757 = vmatprep.subr.bf16.mxu0 0
          %758 = vmatpush1.bf16.msra.mxu0 0
          %759 = vmatprep.subr.bf16.mxu0 0
          %760 = vmatpush1.bf16.msra.mxu0 0
          %761 = vmatprep.subr.bf16.mxu0 0
          %762 = vmatpush1.bf16.msra.mxu0 0
          %763 = vmatprep.subr.bf16.mxu0 0
          %764 = vmatpush1.bf16.msra.mxu0 0
          %765 = vmatprep.subr.bf16.mxu0 0
          %766 = vmatpush1.bf16.msra.mxu0 0
          %767 = vmatprep.subr.bf16.mxu0 0
          %768 = vmatpush1.bf16.msra.mxu0 0
          %769 = vmatprep.mubr.bf16.mxu0 0
          %770 = vmatmul.mubr.bf16.gmra.mrb[0].mxu0 %v729
          %v771 = vpop.f32.mrb[0].mxu0
          %v772 = vadd.f32 %v700, %v771
          %v773 = vpop.f32.mrb[0].mxu0
          %v774 = vpop.f32.mrb[0].mxu0
          %v775 = vadd.f32 %v701, %v774
          %v776 = vpop.f32.mrb[0].mxu0
          %777 = vmatprep.mubr.bf16.mxu0 0
          %778 = vmatmul.mubr.bf16.gmra.mrb[0].mxu0 %v732
          %v779 = vpop.f32.mrb[0].mxu0
          %v780 = vadd.f32 %v702, %v779
          %v781 = vpop.f32.mrb[0].mxu0
          %v782 = vpop.f32.mrb[0].mxu0
          %v783 = vadd.f32 %v700, %v782
          %v784 = vpop.f32.mrb[0].mxu0
          %785 = vmatprep.mubr.bf16.mxu0 0
          %786 = vmatmul.mubr.bf16.gmra.mrb[0].mxu0 %v735
          %v787 = vpop.f32.mrb[0].mxu0
          %v788 = vadd.f32 %v701, %v787
          %v789 = vpop.f32.mrb[0].mxu0
          %v790 = vpop.f32.mrb[0].mxu0
          %v791 = vadd.f32 %v702, %v790
          %v792 = vpop.f32.mrb[0].mxu0
          %793 = vdwg.mxu0
          %794 = vst [vmem:[%s15] sm:$0xff] %v772
          %795 = vst [vmem:[%s15 + $0x8] sm:$0xff] %v775
          %796 = vst [vmem:[%s15 + $0x10] sm:$0xff] %v780
          %797 = vst [vmem:[%s15 + $0x18] sm:$0xff] %v783
          %798 = vst [vmem:[%s15 + $0x20] sm:$0xff] %v788
          %799 = vst [vmem:[%s15 + $0x28] sm:$0xff] %v791
        $region88: #{pst_path_forward.1} parent=79 // pred_fallthru
          _
        %v800 = vld [vmem:[%s15] sm:$0xff]
        %v801 = vld [vmem:[%s15 + $0x8] sm:$0xff]
        %v802 = vld [vmem:[%s15 + $0x10] sm:$0xff]
        %v803 = vld [vmem:[%s15 + $0x18] sm:$0xff]
        %v804 = vld [vmem:[%s15 + $0x20] sm:$0xff]
        %v805 = vld [vmem:[%s15 + $0x28] sm:$0xff]
        %v806 = vpack.c.bf16 %v801, %v800
        %v807 = vpack.c.bf16 %v803, %v802
        %v808 = vpack.c.bf16 %v805, %v804
        %v809 = vld [vmem:[%s641] sm:$0xff]
        %v810 = vld [vmem:[%s641 + $0x8] sm:$0xf]
        %v811 = vld [vmem:[%s641 + $0xc] sm:$0xff]
        %v812 = vld [vmem:[%s641 + $0x14] sm:$0xf]
        %v813 = vld [vmem:[%s641 + $0x18] sm:$0xff]
        %v814 = vld [vmem:[%s641 + $0x20] sm:$0xf]
        %v815 = vld [vmem:[%s641 + $0x24] sm:$0xff]
        %v816 = vld [vmem:[%s641 + $0x2c] sm:$0xf]
        %v817 = vld [vmem:[%s641 + $0x30] sm:$0xff]
        %v818 = vld [vmem:[%s641 + $0x38] sm:$0xf]
        %v819 = vld [vmem:[%s641 + $0x3c] sm:$0xff]
        %v820 = vld [vmem:[%s641 + $0x44] sm:$0xf]
        %v821 = vld [vmem:[%s641 + $0x48] sm:$0xff]
        %v822 = vld [vmem:[%s641 + $0x50] sm:$0xf]
        %v823 = vld [vmem:[%s641 + $0x54] sm:$0xff]
        %v824 = vld [vmem:[%s641 + $0x5c] sm:$0xf]
        %v825 = vld [vmem:[%s641 + $0x60] sm:$0xff]
        %v826 = vld [vmem:[%s641 + $0x68] sm:$0xf]
        %v827 = vld [vmem:[%s641 + $0x6c] sm:$0xff]
        %v828 = vld [vmem:[%s641 + $0x74] sm:$0xf]
        %v829 = vld [vmem:[%s641 + $0x78] sm:$0xff]
        %v830 = vld [vmem:[%s641 + $0x80] sm:$0xf]
        %v831 = vld [vmem:[%s641 + $0x84] sm:$0xff]
        %v832 = vld [vmem:[%s641 + $0x8c] sm:$0xf]
        %v833 = vld [vmem:[%s641 + $0x90] sm:$0xff]
        %v834 = vld [vmem:[%s641 + $0x98] sm:$0xf]
        %v835 = vld [vmem:[%s641 + $0x9c] sm:$0xff]
        %v836 = vld [vmem:[%s641 + $0xa4] sm:$0xf]
        %v837 = vld [vmem:[%s641 + $0xa8] sm:$0xff]
        %v838 = vld [vmem:[%s641 + $0xb0] sm:$0xf]
        %v839 = vld [vmem:[%s641 + $0xb4] sm:$0xff]
        %v840 = vld [vmem:[%s641 + $0xbc] sm:$0xf]
        %v841 = vld [vmem:[%s645] sm:$0x7]
        %v843 = vlaneseq
        %v844 = vshrl.u32 %v843, 7
        %v845 = vsub.s32 0, %v844
        %v846 = vrot.slane %v841, %v845
        %v847 = vlaneseq
        %v848 = vshrl.u32 %v847, 7
        %v849 = vsub.s32 1, %v848
        %v850 = vrot.slane %v841, %v849
        %v851 = vlaneseq
        %v852 = vshrl.u32 %v851, 7
        %v853 = vsub.s32 2, %v852
        %v854 = vrot.slane %v841, %v853
        %v890 = vunpack.c.l.b16 %v809
        %v891 = vunpack.c.h.b16 %v809
        %v892 = vunpack.c.l.b16 %v810
        %v893 = vunpack.c.l.b16 %v811
        %v894 = vunpack.c.h.b16 %v811
        %v895 = vunpack.c.l.b16 %v812
        %v896 = vunpack.c.l.b16 %v813
        %v897 = vunpack.c.h.b16 %v813
        %v898 = vunpack.c.l.b16 %v814
        %v899 = vunpack.c.l.b16 %v815
        %v900 = vunpack.c.h.b16 %v815
        %v901 = vunpack.c.l.b16 %v816
        %v902 = vunpack.c.l.b16 %v817
        %v903 = vunpack.c.h.b16 %v817
        %v904 = vunpack.c.l.b16 %v818
        %v905 = vunpack.c.l.b16 %v819
        %v906 = vunpack.c.h.b16 %v819
        %v907 = vunpack.c.l.b16 %v820
        %v908 = vunpack.c.l.b16 %v821
        %v909 = vunpack.c.h.b16 %v821
        %v910 = vunpack.c.l.b16 %v822
        %v911 = vunpack.c.l.b16 %v823
        %v912 = vunpack.c.h.b16 %v823
        %v913 = vunpack.c.l.b16 %v824
        %v914 = vunpack.c.l.b16 %v825
        %v915 = vunpack.c.h.b16 %v825
        %v916 = vunpack.c.l.b16 %v826
        %v917 = vunpack.c.l.b16 %v827
        %v918 = vunpack.c.h.b16 %v827
        %v919 = vunpack.c.l.b16 %v828
        %v920 = vunpack.c.l.b16 %v829
        %v921 = vunpack.c.h.b16 %v829
        %v922 = vunpack.c.l.b16 %v830
        %v923 = vunpack.c.l.b16 %v831
        %v924 = vunpack.c.h.b16 %v831
        %v925 = vunpack.c.l.b16 %v832
        %v926 = vunpack.c.l.b16 %v833
        %v927 = vunpack.c.h.b16 %v833
        %v928 = vunpack.c.l.b16 %v834
        %v929 = vunpack.c.l.b16 %v835
        %v930 = vunpack.c.h.b16 %v835
        %v931 = vunpack.c.l.b16 %v836
        %v932 = vunpack.c.l.b16 %v837
        %v933 = vunpack.c.h.b16 %v837
        %v934 = vunpack.c.l.b16 %v838
        %v935 = vunpack.c.l.b16 %v839
        %v936 = vunpack.c.h.b16 %v839
        %v937 = vunpack.c.l.b16 %v840
        %v938 = vpack.c.b16 %v893, %v890
        %v939 = vpack.c.b16 %v894, %v891
        %v940 = vpack.c.b16 %v895, %v892
        %v941 = vpack.c.b16 %v899, %v896
        %v942 = vpack.c.b16 %v900, %v897
        %v943 = vpack.c.b16 %v901, %v898
        %v944 = vpack.c.b16 %v905, %v902
        %v945 = vpack.c.b16 %v906, %v903
        %v946 = vpack.c.b16 %v907, %v904
        %v947 = vpack.c.b16 %v911, %v908
        %v948 = vpack.c.b16 %v912, %v909
        %v949 = vpack.c.b16 %v913, %v910
        %v950 = vpack.c.b16 %v917, %v914
        %v951 = vpack.c.b16 %v918, %v915
        %v952 = vpack.c.b16 %v919, %v916
        %v953 = vpack.c.b16 %v923, %v920
        %v954 = vpack.c.b16 %v924, %v921
        %v955 = vpack.c.b16 %v925, %v922
        %v956 = vpack.c.b16 %v929, %v926
        %v957 = vpack.c.b16 %v930, %v927
        %v958 = vpack.c.b16 %v931, %v928
        %v959 = vpack.c.b16 %v935, %v932
        %v960 = vpack.c.b16 %v936, %v933
        %v961 = vpack.c.b16 %v937, %v934
        %986 = vmatprep.subr.bf16.mxu0 %v939
        %987 = vmatpush1.bf16.msra.mxu0 %v938
        %988 = vmatprep.subr.bf16.mxu0 %v942
        %989 = vmatpush1.bf16.msra.mxu0 %v941
        %990 = vmatprep.subr.bf16.mxu0 %v945
        %991 = vmatpush1.bf16.msra.mxu0 %v944
        %992 = vmatprep.subr.bf16.mxu0 %v948
        %993 = vmatpush1.bf16.msra.mxu0 %v947
        %994 = vmatprep.subr.bf16.mxu0 %v951
        %995 = vmatpush1.bf16.msra.mxu0 %v950
        %996 = vmatprep.subr.bf16.mxu0 %v954
        %997 = vmatpush1.bf16.msra.mxu0 %v953
        %998 = vmatprep.subr.bf16.mxu0 %v957
        %999 = vmatpush1.bf16.msra.mxu0 %v956
        %1000 = vmatprep.subr.bf16.mxu0 %v960
        %1001 = vmatpush1.bf16.msra.mxu0 %v959
        %1002 = vmatprep.subr.bf16.mxu0 0
        %1003 = vmatpush1.bf16.msra.mxu0 0
        %1004 = vmatprep.subr.bf16.mxu0 0
        %1005 = vmatpush1.bf16.msra.mxu0 0
        %1006 = vmatprep.subr.bf16.mxu0 0
        %1007 = vmatpush1.bf16.msra.mxu0 0
        %1008 = vmatprep.subr.bf16.mxu0 0
        %1009 = vmatpush1.bf16.msra.mxu0 0
        %1010 = vmatprep.subr.bf16.mxu0 0
        %1011 = vmatpush1.bf16.msra.mxu0 0
        %1012 = vmatprep.subr.bf16.mxu0 0
        %1013 = vmatpush1.bf16.msra.mxu0 0
        %1014 = vmatprep.subr.bf16.mxu0 0
        %1015 = vmatpush1.bf16.msra.mxu0 0
        %1016 = vmatprep.subr.bf16.mxu0 0
        %1017 = vmatpush1.bf16.msra.mxu0 0
        %1018 = vmatprep.mubr.bf16.mxu0 0
        %1019 = vmatmul.mubr.bf16.gmra.mrb[0].mxu0 %v806
        %v1020 = vpop.f32.mrb[0].mxu0
        %v1021 = vadd.f32 %v846, %v1020
        %v1022 = vpop.f32.mrb[0].mxu0
        %v1023 = vadd.f32 %v850, %v1022
        %v1024 = vpop.f32.mrb[0].mxu0
        %v1025 = vadd.f32 %v846, %v1024
        %v1026 = vpop.f32.mrb[0].mxu0
        %v1027 = vadd.f32 %v850, %v1026
        %1028 = vmatprep.mubr.bf16.mxu0 0
        %1029 = vmatmul.mubr.bf16.gmra.mrb[0].mxu0 %v807
        %v1030 = vpop.f32.mrb[0].mxu0
        %v1031 = vadd.f32 %v846, %v1030
        %v1032 = vpop.f32.mrb[0].mxu0
        %v1033 = vadd.f32 %v850, %v1032
        %v1034 = vpop.f32.mrb[0].mxu0
        %v1035 = vadd.f32 %v846, %v1034
        %v1036 = vpop.f32.mrb[0].mxu0
        %v1037 = vadd.f32 %v850, %v1036
        %1038 = vmatprep.mubr.bf16.mxu0 0
        %1039 = vmatmul.mubr.bf16.gmra.mrb[0].mxu0 %v808
        %v1040 = vpop.f32.mrb[0].mxu0
        %v1041 = vadd.f32 %v846, %v1040
        %v1042 = vpop.f32.mrb[0].mxu0
        %v1043 = vadd.f32 %v850, %v1042
        %v1044 = vpop.f32.mrb[0].mxu0
        %v1045 = vadd.f32 %v846, %v1044
        %v1046 = vpop.f32.mrb[0].mxu0
        %v1047 = vadd.f32 %v850, %v1046
        %1048 = vdwg.mxu0
        %1049 = vmatprep.subr.bf16.mxu0 0
        %1050 = vmatpush1.bf16.msra.mxu0 %v940
        %1051 = vmatprep.subr.bf16.mxu0 0
        %1052 = vmatpush1.bf16.msra.mxu0 %v943
        %1053 = vmatprep.subr.bf16.mxu0 0
        %1054 = vmatpush1.bf16.msra.mxu0 %v946
        %1055 = vmatprep.subr.bf16.mxu0 0
        %1056 = vmatpush1.bf16.msra.mxu0 %v949
        %1057 = vmatprep.subr.bf16.mxu0 0
        %1058 = vmatpush1.bf16.msra.mxu0 %v952
        %1059 = vmatprep.subr.bf16.mxu0 0
        %1060 = vmatpush1.bf16.msra.mxu0 %v955
        %1061 = vmatprep.subr.bf16.mxu0 0
        %1062 = vmatpush1.bf16.msra.mxu0 %v958
        %1063 = vmatprep.subr.bf16.mxu0 0
        %1064 = vmatpush1.bf16.msra.mxu0 %v961
        %1065 = vmatprep.subr.bf16.mxu0 0
        %1066 = vmatpush1.bf16.msra.mxu0 0
        %1067 = vmatprep.subr.bf16.mxu0 0
        %1068 = vmatpush1.bf16.msra.mxu0 0
        %1069 = vmatprep.subr.bf16.mxu0 0
        %1070 = vmatpush1.bf16.msra.mxu0 0
        %1071 = vmatprep.subr.bf16.mxu0 0
        %1072 = vmatpush1.bf16.msra.mxu0 0
        %1073 = vmatprep.subr.bf16.mxu0 0
        %1074 = vmatpush1.bf16.msra.mxu0 0
        %1075 = vmatprep.subr.bf16.mxu0 0
        %1076 = vmatpush1.bf16.msra.mxu0 0
        %1077 = vmatprep.subr.bf16.mxu0 0
        %1078 = vmatpush1.bf16.msra.mxu0 0
        %1079 = vmatprep.subr.bf16.mxu0 0
        %1080 = vmatpush1.bf16.msra.mxu0 0
        %1081 = vmatprep.mubr.bf16.mxu0 0
        %1082 = vmatmul.mubr.bf16.gmra.mrb[0].mxu0 %v806
        %v1083 = vpop.f32.mrb[0].mxu0
        %v1084 = vadd.f32 %v854, %v1083
        %v1085 = vpop.f32.mrb[0].mxu0
        %v1086 = vpop.f32.mrb[0].mxu0
        %v1087 = vadd.f32 %v854, %v1086
        %v1088 = vpop.f32.mrb[0].mxu0
        %1089 = vmatprep.mubr.bf16.mxu0 0
        %1090 = vmatmul.mubr.bf16.gmra.mrb[0].mxu0 %v807
        %v1091 = vpop.f32.mrb[0].mxu0
        %v1092 = vadd.f32 %v854, %v1091
        %v1093 = vpop.f32.mrb[0].mxu0
        %v1094 = vpop.f32.mrb[0].mxu0
        %v1095 = vadd.f32 %v854, %v1094
        %v1096 = vpop.f32.mrb[0].mxu0
        %1097 = vmatprep.mubr.bf16.mxu0 0
        %1098 = vmatmul.mubr.bf16.gmra.mrb[0].mxu0 %v808
        %v1099 = vpop.f32.mrb[0].mxu0
        %v1100 = vadd.f32 %v854, %v1099
        %v1101 = vpop.f32.mrb[0].mxu0
        %v1102 = vpop.f32.mrb[0].mxu0
        %v1103 = vadd.f32 %v854, %v1102
        %v1104 = vpop.f32.mrb[0].mxu0
        %1105 = vdwg.mxu0
        %v1106 = vmul.f32 %v1021, 0.17677669
        %v1107 = vmul.f32 %v1025, 0.17677669
        %v1108 = vmul.f32 %v1031, 0.17677669
        %v1109 = vmul.f32 %v1035, 0.17677669
        %v1110 = vmul.f32 %v1041, 0.17677669
        %v1111 = vmul.f32 %v1045, 0.17677669
        %v1112 = vpack.c.bf16 %v1107, %v1106
        %v1113 = vpack.c.bf16 %v1109, %v1108
        %v1114 = vpack.c.bf16 %v1111, %v1110
        %v1115 = vpack.c.bf16 %v1027, %v1023
        %v1116 = vpack.c.bf16 %v1037, %v1033
        %v1117 = vpack.c.bf16 %v1047, %v1043
        %v1118 = vpack.c.bf16 %v1087, %v1084
        %v1119 = vpack.c.bf16 %v1095, %v1092
        %v1120 = vpack.c.bf16 %v1103, %v1100
        %v1121 = vlaneseq
        %v1122 = vand.u32 %v1121, 127
        %vm1123 = vcmp.lt.s32.totalorder %v1122, 17
        %v1124 = vsel %vm1123, 0.0, -1e+30
        %vm1125 = vcmask 261120
        %v1127 = vsel %vm1125, %v1112, 0
        %v1130 = vsel %vm1125, %v1113, 0
        %v1133 = vsel %vm1125, %v1115, 0
        %v1136 = vsel %vm1125, %v1116, 0
        %1138 = vmatprep.subr.bf16.mxu0 0
        %1139 = vmatpush1.bf16.xpose.msra.mxu0 %v1133
        %1140 = vmatprep.subr.bf16.mxu0 0
        %1141 = vmatpush1.bf16.xpose.msra.mxu0 %v1136
        %1142 = vmatprep.subr.bf16.mxu0 0
        %1143 = vmatpush1.bf16.xpose.msra.mxu0 0
        %1144 = vmatprep.subr.bf16.mxu0 0
        %1145 = vmatpush1.bf16.xpose.msra.mxu0 0
        %1146 = vmatprep.subr.bf16.mxu0 0
        %1147 = vmatpush1.bf16.xpose.msra.mxu0 0
        %1148 = vmatprep.subr.bf16.mxu0 0
        %1149 = vmatpush1.bf16.xpose.msra.mxu0 0
        %1150 = vmatprep.subr.bf16.mxu0 0
        %1151 = vmatpush1.bf16.xpose.msra.mxu0 0
        %1152 = vmatprep.subr.bf16.mxu0 0
        %1153 = vmatpush1.bf16.xpose.msra.mxu0 0
        %1154 = vmatprep.subr.bf16.mxu0 0
        %1155 = vmatpush1.bf16.xpose.msra.mxu0 0
        %1156 = vmatprep.subr.bf16.mxu0 0
        %1157 = vmatpush1.bf16.xpose.msra.mxu0 0
        %1158 = vmatprep.subr.bf16.mxu0 0
        %1159 = vmatpush1.bf16.xpose.msra.mxu0 0
        %1160 = vmatprep.subr.bf16.mxu0 0
        %1161 = vmatpush1.bf16.xpose.msra.mxu0 0
        %1162 = vmatprep.subr.bf16.mxu0 0
        %1163 = vmatpush1.bf16.xpose.msra.mxu0 0
        %1164 = vmatprep.subr.bf16.mxu0 0
        %1165 = vmatpush1.bf16.xpose.msra.mxu0 0
        %1166 = vmatprep.subr.bf16.mxu0 0
        %1167 = vmatpush1.bf16.xpose.msra.mxu0 0
        %1168 = vmatprep.subr.bf16.mxu0 0
        %1169 = vmatpush1.bf16.xpose.msra.mxu0 0
        %1170 = vmatprep.mubr.bf16.mxu0 0
        %1171 = vmatmul.mubr.bf16.gmra.mrb[0].mxu0 %v1127
        %v1172 = vpop.f32.mrb[0].mxu0
        %v1173 = vadd.f32 %v1124, %v1172
        %v1174 = vpop.f32.mrb[0].mxu0
        %v1175 = vpop.f32.mrb[0].mxu0
        %v1176 = vadd.f32 %v1124, %v1175
        %v1177 = vpop.f32.mrb[0].mxu0
        %1178 = vmatprep.mubr.bf16.mxu0 0
        %1179 = vmatmul.mubr.bf16.gmra.mrb[0].mxu0 %v1130
        %v1180 = vpop.f32.mrb[0].mxu0
        %v1181 = vadd.f32 %v1124, %v1180
        %v1182 = vpop.f32.mrb[0].mxu0
        %v1183 = vpop.f32.mrb[0].mxu0
        %v1184 = vpop.f32.mrb[0].mxu0
        %1185 = vdwg.mxu0
        %vm1186 = vcmask 195584
        %v1187 = vsel %vm1186, %v1173, -inf
        %1188 = vmax.xlane.f32.xlu0 %v1187
        %v1189 = vpop.xlane.xlu0 %1188
        %v1190 = vsel %vm1186, %v1176, -inf
        %1191 = vmax.xlane.f32.xlu0 %v1190
        %v1192 = vpop.xlane.xlu0 %1191
        %v1193 = vsel %vm1186, %v1181, -inf
        %1194 = vmax.xlane.f32.xlu0 %v1193
        %v1195 = vpop.xlane.xlu0 %1194
        %v1196 = vsub.f32 %v1173, %v1189
        %v1197 = vsub.f32 %v1176, %v1192
        %v1198 = vsub.f32 %v1181, %v1195
        %v1199 = vmul.f32 %v1196, 1.442695
        %v1200 = vpow.pop %v1199
        %v1201 = vmul.f32 %v1197, 1.442695
        %v1202 = vpow.pop %v1201
        %v1203 = vmul.f32 %v1198, 1.442695
        %v1204 = vpow.pop %v1203
        %v1205 = vsel %vm1186, %v1200, 0.0
        %1206 = vadd.xlane.f32.xlu0 %v1205
        %v1207 = vpop.xlane.xlu0 %1206
        %v1208 = vsel %vm1186, %v1202, 0.0
        %1209 = vadd.xlane.f32.xlu0 %v1208
        %v1210 = vpop.xlane.xlu0 %1209
        %v1211 = vsel %vm1186, %v1204, 0.0
        %1212 = vadd.xlane.f32.xlu0 %v1211
        %v1213 = vpop.xlane.xlu0 %1212
        %v1214 = vrcp.pop %v1207
        %v1215 = vrcp.pop %v1210
        %v1216 = vrcp.pop %v1213
        %v1217 = vmul.f32 %v1200, %v1214
        %v1218 = vmul.f32 %v1202, %v1215
        %v1219 = vmul.f32 %v1204, %v1216
        %v1220 = vpack.c.bf16 %v1218, %v1217
        %v1221 = vpack.c.bf16 %v1219, %v1219
        %v1223 = vsel %vm1186, %v1220, 0
        %v1226 = vsel %vm1186, %v1221, 0
        %vm1228 = vcmask 1043456
        %v1230 = vsel %vm1228, %v1119, 0
        %1232 = vmatprep.subr.bf16.mxu0 0
        %1233 = vmatpush1.bf16.msra.mxu0 %v1118
        %1234 = vmatprep.subr.bf16.mxu0 0
        %1235 = vmatpush1.bf16.msra.mxu0 %v1230
        %1236 = vmatprep.subr.bf16.mxu0 0
        %1237 = vmatpush1.bf16.msra.mxu0 0
        %1238 = vmatprep.subr.bf16.mxu0 0
        %1239 = vmatpush1.bf16.msra.mxu0 0
        %1240 = vmatprep.subr.bf16.mxu0 0
        %1241 = vmatpush1.bf16.msra.mxu0 0
        %1242 = vmatprep.subr.bf16.mxu0 0
        %1243 = vmatpush1.bf16.msra.mxu0 0
        %1244 = vmatprep.subr.bf16.mxu0 0
        %1245 = vmatpush1.bf16.msra.mxu0 0
        %1246 = vmatprep.subr.bf16.mxu0 0
        %1247 = vmatpush1.bf16.msra.mxu0 0
        %1248 = vmatprep.subr.bf16.mxu0 0
        %1249 = vmatpush1.bf16.msra.mxu0 0
        %1250 = vmatprep.subr.bf16.mxu0 0
        %1251 = vmatpush1.bf16.msra.mxu0 0
        %1252 = vmatprep.subr.bf16.mxu0 0
        %1253 = vmatpush1.bf16.msra.mxu0 0
        %1254 = vmatprep.subr.bf16.mxu0 0
        %1255 = vmatpush1.bf16.msra.mxu0 0
        %1256 = vmatprep.subr.bf16.mxu0 0
        %1257 = vmatpush1.bf16.msra.mxu0 0
        %1258 = vmatprep.subr.bf16.mxu0 0
        %1259 = vmatpush1.bf16.msra.mxu0 0
        %1260 = vmatprep.subr.bf16.mxu0 0
        %1261 = vmatpush1.bf16.msra.mxu0 0
        %1262 = vmatprep.subr.bf16.mxu0 0
        %1263 = vmatpush1.bf16.msra.mxu0 0
        %1264 = vmatprep.mubr.bf16.mxu0 0
        %1265 = vmatmul.mubr.bf16.gmra.mrb[0].mxu0 %v1223
        %v1266 = vpop.f32.mrb[0].mxu0
        %v1267 = vadd.f32 0.0, %v1266
        %v1268 = vpop.f32.mrb[0].mxu0
        %v1269 = vpop.f32.mrb[0].mxu0
        %v1270 = vadd.f32 0.0, %v1269
        %v1271 = vpop.f32.mrb[0].mxu0
        %1272 = vmatprep.mubr.bf16.mxu0 0
        %1273 = vmatmul.mubr.bf16.gmra.mrb[0].mxu0 %v1226
        %v1274 = vpop.f32.mrb[0].mxu0
        %v1275 = vadd.f32 0.0, %v1274
        %v1276 = vpop.f32.mrb[0].mxu0
        %v1277 = vpop.f32.mrb[0].mxu0
        %v1278 = vpop.f32.mrb[0].mxu0
        %1279 = vdwg.mxu0
        %1282 = vrot.lane.b32.xlu0 %v1112, 96
        %v1283 = vpop.permute.xlu0 %1282
        %1284 = vrot.lane.b32.xlu0 %v1113, 96
        %v1285 = vpop.permute.xlu0 %1284
        %1288 = vrot.lane.b32.xlu0 %v1115, 96
        %v1289 = vpop.permute.xlu0 %1288
        %1290 = vrot.lane.b32.xlu0 %v1116, 96
        %v1291 = vpop.permute.xlu0 %1290
        %v1293 = vsel %vm1125, %v1283, 0
        %v1296 = vsel %vm1125, %v1285, 0
        %v1299 = vsel %vm1125, %v1289, 0
        %v1302 = vsel %vm1125, %v1291, 0
        %1304 = vmatprep.subr.bf16.mxu0 0
        %1305 = vmatpush1.bf16.xpose.msra.mxu0 %v1299
        %1306 = vmatprep.subr.bf16.mxu0 0
        %1307 = vmatpush1.bf16.xpose.msra.mxu0 %v1302
        %1308 = vmatprep.subr.bf16.mxu0 0
        %1309 = vmatpush1.bf16.xpose.msra.mxu0 0
        %1310 = vmatprep.subr.bf16.mxu0 0
        %1311 = vmatpush1.bf16.xpose.msra.mxu0 0
        %1312 = vmatprep.subr.bf16.mxu0 0
        %1313 = vmatpush1.bf16.xpose.msra.mxu0 0
        %1314 = vmatprep.subr.bf16.mxu0 0
        %1315 = vmatpush1.bf16.xpose.msra.mxu0 0
        %1316 = vmatprep.subr.bf16.mxu0 0
        %1317 = vmatpush1.bf16.xpose.msra.mxu0 0
        %1318 = vmatprep.subr.bf16.mxu0 0
        %1319 = vmatpush1.bf16.xpose.msra.mxu0 0
        %1320 = vmatprep.subr.bf16.mxu0 0
        %1321 = vmatpush1.bf16.xpose.msra.mxu0 0
        %1322 = vmatprep.subr.bf16.mxu0 0
        %1323 = vmatpush1.bf16.xpose.msra.mxu0 0
        %1324 = vmatprep.subr.bf16.mxu0 0
        %1325 = vmatpush1.bf16.xpose.msra.mxu0 0
        %1326 = vmatprep.subr.bf16.mxu0 0
        %1327 = vmatpush1.bf16.xpose.msra.mxu0 0
        %1328 = vmatprep.subr.bf16.mxu0 0
        %1329 = vmatpush1.bf16.xpose.msra.mxu0 0
        %1330 = vmatprep.subr.bf16.mxu0 0
        %1331 = vmatpush1.bf16.xpose.msra.mxu0 0
        %1332 = vmatprep.subr.bf16.mxu0 0
        %1333 = vmatpush1.bf16.xpose.msra.mxu0 0
        %1334 = vmatprep.subr.bf16.mxu0 0
        %1335 = vmatpush1.bf16.xpose.msra.mxu0 0
        %1336 = vmatprep.mubr.bf16.mxu0 0
        %1337 = vmatmul.mubr.bf16.gmra.mrb[0].mxu0 %v1293
        %v1338 = vpop.f32.mrb[0].mxu0
        %v1339 = vadd.f32 %v1124, %v1338
        %v1340 = vpop.f32.mrb[0].mxu0
        %v1341 = vpop.f32.mrb[0].mxu0
        %v1342 = vadd.f32 %v1124, %v1341
        %v1343 = vpop.f32.mrb[0].mxu0
        %1344 = vmatprep.mubr.bf16.mxu0 0
        %1345 = vmatmul.mubr.bf16.gmra.mrb[0].mxu0 %v1296
        %v1346 = vpop.f32.mrb[0].mxu0
        %v1347 = vadd.f32 %v1124, %v1346
        %v1348 = vpop.f32.mrb[0].mxu0
        %v1349 = vpop.f32.mrb[0].mxu0
        %v1350 = vpop.f32.mrb[0].mxu0
        %1351 = vdwg.mxu0
        %v1352 = vsel %vm1186, %v1339, -inf
        %1353 = vmax.xlane.f32.xlu0 %v1352
        %v1354 = vpop.xlane.xlu0 %1353
        %v1355 = vsel %vm1186, %v1342, -inf
        %1356 = vmax.xlane.f32.xlu0 %v1355
        %v1357 = vpop.xlane.xlu0 %1356
        %v1358 = vsel %vm1186, %v1347, -inf
        %1359 = vmax.xlane.f32.xlu0 %v1358
        %v1360 = vpop.xlane.xlu0 %1359
        %v1361 = vsub.f32 %v1339, %v1354
        %v1362 = vsub.f32 %v1342, %v1357
        %v1363 = vsub.f32 %v1347, %v1360
        %v1364 = vmul.f32 %v1361, 1.442695
        %v1365 = vpow.pop %v1364
        %v1366 = vmul.f32 %v1362, 1.442695
        %v1367 = vpow.pop %v1366
        %v1368 = vmul.f32 %v1363, 1.442695
        %v1369 = vpow.pop %v1368
        %v1370 = vsel %vm1186, %v1365, 0.0
        %1371 = vadd.xlane.f32.xlu0 %v1370
        %v1372 = vpop.xlane.xlu0 %1371
        %v1373 = vsel %vm1186, %v1367, 0.0
        %1374 = vadd.xlane.f32.xlu0 %v1373
        %v1375 = vpop.xlane.xlu0 %1374
        %v1376 = vsel %vm1186, %v1369, 0.0
        %1377 = vadd.xlane.f32.xlu0 %v1376
        %v1378 = vpop.xlane.xlu0 %1377
        %v1379 = vrcp.pop %v1372
        %v1380 = vrcp.pop %v1375
        %v1381 = vrcp.pop %v1378
        %v1382 = vmul.f32 %v1365, %v1379
        %v1383 = vmul.f32 %v1367, %v1380
        %v1384 = vmul.f32 %v1369, %v1381
        %v1385 = vpack.c.bf16 %v1383, %v1382
        %v1386 = vpack.c.bf16 %v1384, %v1384
        %1389 = vrot.lane.b32.xlu0 %v1118, 96
        %v1390 = vpop.permute.xlu0 %1389
        %1391 = vrot.lane.b32.xlu0 %v1119, 96
        %v1392 = vpop.permute.xlu0 %1391
        %v1395 = vsel %vm1186, %v1385, 0
        %v1398 = vsel %vm1186, %v1386, 0
        %v1401 = vsel %vm1228, %v1392, 0
        %1403 = vmatprep.subr.bf16.mxu0 0
        %1404 = vmatpush1.bf16.msra.mxu0 %v1390
        %1405 = vmatprep.subr.bf16.mxu0 0
        %1406 = vmatpush1.bf16.msra.mxu0 %v1401
        %1407 = vmatprep.subr.bf16.mxu0 0
        %1408 = vmatpush1.bf16.msra.mxu0 0
        %1409 = vmatprep.subr.bf16.mxu0 0
        %1410 = vmatpush1.bf16.msra.mxu0 0
        %1411 = vmatprep.subr.bf16.mxu0 0
        %1412 = vmatpush1.bf16.msra.mxu0 0
        %1413 = vmatprep.subr.bf16.mxu0 0
        %1414 = vmatpush1.bf16.msra.mxu0 0
        %1415 = vmatprep.subr.bf16.mxu0 0
        %1416 = vmatpush1.bf16.msra.mxu0 0
        %1417 = vmatprep.subr.bf16.mxu0 0
        %1418 = vmatpush1.bf16.msra.mxu0 0
        %1419 = vmatprep.subr.bf16.mxu0 0
        %1420 = vmatpush1.bf16.msra.mxu0 0
        %1421 = vmatprep.subr.bf16.mxu0 0
        %1422 = vmatpush1.bf16.msra.mxu0 0
        %1423 = vmatprep.subr.bf16.mxu0 0
        %1424 = vmatpush1.bf16.msra.mxu0 0
        %1425 = vmatprep.subr.bf16.mxu0 0
        %1426 = vmatpush1.bf16.msra.mxu0 0
        %1427 = vmatprep.subr.bf16.mxu0 0
        %1428 = vmatpush1.bf16.msra.mxu0 0
        %1429 = vmatprep.subr.bf16.mxu0 0
        %1430 = vmatpush1.bf16.msra.mxu0 0
        %1431 = vmatprep.subr.bf16.mxu0 0
        %1432 = vmatpush1.bf16.msra.mxu0 0
        %1433 = vmatprep.subr.bf16.mxu0 0
        %1434 = vmatpush1.bf16.msra.mxu0 0
        %1435 = vmatprep.mubr.bf16.mxu0 0
        %1436 = vmatmul.mubr.bf16.gmra.mrb[0].mxu0 %v1395
        %v1437 = vpop.f32.mrb[0].mxu0
        %v1438 = vadd.f32 0.0, %v1437
        %v1439 = vpop.f32.mrb[0].mxu0
        %v1440 = vpop.f32.mrb[0].mxu0
        %v1441 = vadd.f32 0.0, %v1440
        %v1442 = vpop.f32.mrb[0].mxu0
        %1443 = vmatprep.mubr.bf16.mxu0 0
        %1444 = vmatmul.mubr.bf16.gmra.mrb[0].mxu0 %v1398
        %v1445 = vpop.f32.mrb[0].mxu0
        %v1446 = vadd.f32 0.0, %v1445
        %v1447 = vpop.f32.mrb[0].mxu0
        %v1448 = vpop.f32.mrb[0].mxu0
        %v1449 = vpop.f32.mrb[0].mxu0
        %1450 = vdwg.mxu0
        %1451 = vrot.lane.b32.xlu0 %v1112, 64
        %v1452 = vpop.permute.xlu0 %1451
        %1453 = vrot.lane.b32.xlu0 %v1113, 64
        %v1454 = vpop.permute.xlu0 %1453
        %1455 = vrot.lane.b32.xlu0 %v1115, 64
        %v1456 = vpop.permute.xlu0 %1455
        %1457 = vrot.lane.b32.xlu0 %v1116, 64
        %v1458 = vpop.permute.xlu0 %1457
        %v1460 = vsel %vm1125, %v1452, 0
        %v1463 = vsel %vm1125, %v1454, 0
        %v1466 = vsel %vm1125, %v1456, 0
        %v1469 = vsel %vm1125, %v1458, 0
        %1471 = vmatprep.subr.bf16.mxu0 0
        %1472 = vmatpush1.bf16.xpose.msra.mxu0 %v1466
        %1473 = vmatprep.subr.bf16.mxu0 0
        %1474 = vmatpush1.bf16.xpose.msra.mxu0 %v1469
        %1475 = vmatprep.subr.bf16.mxu0 0
        %1476 = vmatpush1.bf16.xpose.msra.mxu0 0
        %1477 = vmatprep.subr.bf16.mxu0 0
        %1478 = vmatpush1.bf16.xpose.msra.mxu0 0
        %1479 = vmatprep.subr.bf16.mxu0 0
        %1480 = vmatpush1.bf16.xpose.msra.mxu0 0
        %1481 = vmatprep.subr.bf16.mxu0 0
        %1482 = vmatpush1.bf16.xpose.msra.mxu0 0
        %1483 = vmatprep.subr.bf16.mxu0 0
        %1484 = vmatpush1.bf16.xpose.msra.mxu0 0
        %1485 = vmatprep.subr.bf16.mxu0 0
        %1486 = vmatpush1.bf16.xpose.msra.mxu0 0
        %1487 = vmatprep.subr.bf16.mxu0 0
        %1488 = vmatpush1.bf16.xpose.msra.mxu0 0
        %1489 = vmatprep.subr.bf16.mxu0 0
        %1490 = vmatpush1.bf16.xpose.msra.mxu0 0
        %1491 = vmatprep.subr.bf16.mxu0 0
        %1492 = vmatpush1.bf16.xpose.msra.mxu0 0
        %1493 = vmatprep.subr.bf16.mxu0 0
        %1494 = vmatpush1.bf16.xpose.msra.mxu0 0
        %1495 = vmatprep.subr.bf16.mxu0 0
        %1496 = vmatpush1.bf16.xpose.msra.mxu0 0
        %1497 = vmatprep.subr.bf16.mxu0 0
        %1498 = vmatpush1.bf16.xpose.msra.mxu0 0
        %1499 = vmatprep.subr.bf16.mxu0 0
        %1500 = vmatpush1.bf16.xpose.msra.mxu0 0
        %1501 = vmatprep.subr.bf16.mxu0 0
        %1502 = vmatpush1.bf16.xpose.msra.mxu0 0
        %1503 = vmatprep.mubr.bf16.mxu0 0
        %1504 = vmatmul.mubr.bf16.gmra.mrb[0].mxu0 %v1460
        %v1505 = vpop.f32.mrb[0].mxu0
        %v1506 = vadd.f32 %v1124, %v1505
        %v1507 = vpop.f32.mrb[0].mxu0
        %v1508 = vpop.f32.mrb[0].mxu0
        %v1509 = vadd.f32 %v1124, %v1508
        %v1510 = vpop.f32.mrb[0].mxu0
        %1511 = vmatprep.mubr.bf16.mxu0 0
        %1512 = vmatmul.mubr.bf16.gmra.mrb[0].mxu0 %v1463
        %v1513 = vpop.f32.mrb[0].mxu0
        %v1514 = vadd.f32 %v1124, %v1513
        %v1515 = vpop.f32.mrb[0].mxu0
        %v1516 = vpop.f32.mrb[0].mxu0
        %v1517 = vpop.f32.mrb[0].mxu0
        %1518 = vdwg.mxu0
        %v1519 = vsel %vm1186, %v1506, -inf
        %1520 = vmax.xlane.f32.xlu0 %v1519
        %v1521 = vpop.xlane.xlu0 %1520
        %v1522 = vsel %vm1186, %v1509, -inf
        %1523 = vmax.xlane.f32.xlu0 %v1522
        %v1524 = vpop.xlane.xlu0 %1523
        %v1525 = vsel %vm1186, %v1514, -inf
        %1526 = vmax.xlane.f32.xlu0 %v1525
        %v1527 = vpop.xlane.xlu0 %1526
        %v1528 = vsub.f32 %v1506, %v1521
        %v1529 = vsub.f32 %v1509, %v1524
        %v1530 = vsub.f32 %v1514, %v1527
        %v1531 = vmul.f32 %v1528, 1.442695
        %v1532 = vpow.pop %v1531
        %v1533 = vmul.f32 %v1529, 1.442695
        %v1534 = vpow.pop %v1533
        %v1535 = vmul.f32 %v1530, 1.442695
        %v1536 = vpow.pop %v1535
        %v1537 = vsel %vm1186, %v1532, 0.0
        %1538 = vadd.xlane.f32.xlu0 %v1537
        %v1539 = vpop.xlane.xlu0 %1538
        %v1540 = vsel %vm1186, %v1534, 0.0
        %1541 = vadd.xlane.f32.xlu0 %v1540
        %v1542 = vpop.xlane.xlu0 %1541
        %v1543 = vsel %vm1186, %v1536, 0.0
        %1544 = vadd.xlane.f32.xlu0 %v1543
        %v1545 = vpop.xlane.xlu0 %1544
        %v1546 = vrcp.pop %v1539
        %v1547 = vrcp.pop %v1542
        %v1548 = vrcp.pop %v1545
        %v1549 = vmul.f32 %v1532, %v1546
        %v1550 = vmul.f32 %v1534, %v1547
        %v1551 = vmul.f32 %v1536, %v1548
        %v1552 = vpack.c.bf16 %v1550, %v1549
        %v1553 = vpack.c.bf16 %v1551, %v1551
        %1554 = vrot.lane.b32.xlu0 %v1118, 64
        %v1555 = vpop.permute.xlu0 %1554
        %1556 = vrot.lane.b32.xlu0 %v1119, 64
        %v1557 = vpop.permute.xlu0 %1556
        %v1560 = vsel %vm1186, %v1552, 0
        %v1563 = vsel %vm1186, %v1553, 0
        %v1566 = vsel %vm1228, %v1557, 0
        %1568 = vmatprep.subr.bf16.mxu0 0
        %1569 = vmatpush1.bf16.msra.mxu0 %v1555
        %1570 = vmatprep.subr.bf16.mxu0 0
        %1571 = vmatpush1.bf16.msra.mxu0 %v1566
        %1572 = vmatprep.subr.bf16.mxu0 0
        %1573 = vmatpush1.bf16.msra.mxu0 0
        %1574 = vmatprep.subr.bf16.mxu0 0
        %1575 = vmatpush1.bf16.msra.mxu0 0
        %1576 = vmatprep.subr.bf16.mxu0 0
        %1577 = vmatpush1.bf16.msra.mxu0 0
        %1578 = vmatprep.subr.bf16.mxu0 0
        %1579 = vmatpush1.bf16.msra.mxu0 0
        %1580 = vmatprep.subr.bf16.mxu0 0
        %1581 = vmatpush1.bf16.msra.mxu0 0
        %1582 = vmatprep.subr.bf16.mxu0 0
        %1583 = vmatpush1.bf16.msra.mxu0 0
        %1584 = vmatprep.subr.bf16.mxu0 0
        %1585 = vmatpush1.bf16.msra.mxu0 0
        %1586 = vmatprep.subr.bf16.mxu0 0
        %1587 = vmatpush1.bf16.msra.mxu0 0
        %1588 = vmatprep.subr.bf16.mxu0 0
        %1589 = vmatpush1.bf16.msra.mxu0 0
        %1590 = vmatprep.subr.bf16.mxu0 0
        %1591 = vmatpush1.bf16.msra.mxu0 0
        %1592 = vmatprep.subr.bf16.mxu0 0
        %1593 = vmatpush1.bf16.msra.mxu0 0
        %1594 = vmatprep.subr.bf16.mxu0 0
        %1595 = vmatpush1.bf16.msra.mxu0 0
        %1596 = vmatprep.subr.bf16.mxu0 0
        %1597 = vmatpush1.bf16.msra.mxu0 0
        %1598 = vmatprep.subr.bf16.mxu0 0
        %1599 = vmatpush1.bf16.msra.mxu0 0
        %1600 = vmatprep.mubr.bf16.mxu0 0
        %1601 = vmatmul.mubr.bf16.gmra.mrb[0].mxu0 %v1560
        %v1602 = vpop.f32.mrb[0].mxu0
        %v1603 = vadd.f32 0.0, %v1602
        %v1604 = vpop.f32.mrb[0].mxu0
        %v1605 = vpop.f32.mrb[0].mxu0
        %v1606 = vadd.f32 0.0, %v1605
        %v1607 = vpop.f32.mrb[0].mxu0
        %1608 = vmatprep.mubr.bf16.mxu0 0
        %1609 = vmatmul.mubr.bf16.gmra.mrb[0].mxu0 %v1563
        %v1610 = vpop.f32.mrb[0].mxu0
        %v1611 = vadd.f32 0.0, %v1610
        %v1612 = vpop.f32.mrb[0].mxu0
        %v1613 = vpop.f32.mrb[0].mxu0
        %v1614 = vpop.f32.mrb[0].mxu0
        %1615 = vdwg.mxu0
        %1616 = vrot.lane.b32.xlu0 %v1112, 32
        %v1617 = vpop.permute.xlu0 %1616
        %1618 = vrot.lane.b32.xlu0 %v1113, 32
        %v1619 = vpop.permute.xlu0 %1618
        %1620 = vrot.lane.b32.xlu0 %v1115, 32
        %v1621 = vpop.permute.xlu0 %1620
        %1622 = vrot.lane.b32.xlu0 %v1116, 32
        %v1623 = vpop.permute.xlu0 %1622
        %v1625 = vsel %vm1125, %v1617, 0
        %v1628 = vsel %vm1125, %v1619, 0
        %v1631 = vsel %vm1125, %v1621, 0
        %v1634 = vsel %vm1125, %v1623, 0
        %1636 = vmatprep.subr.bf16.mxu0 0
        %1637 = vmatpush1.bf16.xpose.msra.mxu0 %v1631
        %1638 = vmatprep.subr.bf16.mxu0 0
        %1639 = vmatpush1.bf16.xpose.msra.mxu0 %v1634
        %1640 = vmatprep.subr.bf16.mxu0 0
        %1641 = vmatpush1.bf16.xpose.msra.mxu0 0
        %1642 = vmatprep.subr.bf16.mxu0 0
        %1643 = vmatpush1.bf16.xpose.msra.mxu0 0
        %1644 = vmatprep.subr.bf16.mxu0 0
        %1645 = vmatpush1.bf16.xpose.msra.mxu0 0
        %1646 = vmatprep.subr.bf16.mxu0 0
        %1647 = vmatpush1.bf16.xpose.msra.mxu0 0
        %1648 = vmatprep.subr.bf16.mxu0 0
        %1649 = vmatpush1.bf16.xpose.msra.mxu0 0
        %1650 = vmatprep.subr.bf16.mxu0 0
        %1651 = vmatpush1.bf16.xpose.msra.mxu0 0
        %1652 = vmatprep.subr.bf16.mxu0 0
        %1653 = vmatpush1.bf16.xpose.msra.mxu0 0
        %1654 = vmatprep.subr.bf16.mxu0 0
        %1655 = vmatpush1.bf16.xpose.msra.mxu0 0
        %1656 = vmatprep.subr.bf16.mxu0 0
        %1657 = vmatpush1.bf16.xpose.msra.mxu0 0
        %1658 = vmatprep.subr.bf16.mxu0 0
        %1659 = vmatpush1.bf16.xpose.msra.mxu0 0
        %1660 = vmatprep.subr.bf16.mxu0 0
        %1661 = vmatpush1.bf16.xpose.msra.mxu0 0
        %1662 = vmatprep.subr.bf16.mxu0 0
        %1663 = vmatpush1.bf16.xpose.msra.mxu0 0
        %1664 = vmatprep.subr.bf16.mxu0 0
        %1665 = vmatpush1.bf16.xpose.msra.mxu0 0
        %1666 = vmatprep.subr.bf16.mxu0 0
        %1667 = vmatpush1.bf16.xpose.msra.mxu0 0
        %1668 = vmatprep.mubr.bf16.mxu0 0
        %1669 = vmatmul.mubr.bf16.gmra.mrb[0].mxu0 %v1625
        %v1670 = vpop.f32.mrb[0].mxu0
        %v1671 = vadd.f32 %v1124, %v1670
        %v1672 = vpop.f32.mrb[0].mxu0
        %v1673 = vpop.f32.mrb[0].mxu0
        %v1674 = vadd.f32 %v1124, %v1673
        %v1675 = vpop.f32.mrb[0].mxu0
        %1676 = vmatprep.mubr.bf16.mxu0 0
        %1677 = vmatmul.mubr.bf16.gmra.mrb[0].mxu0 %v1628
        %v1678 = vpop.f32.mrb[0].mxu0
        %v1679 = vadd.f32 %v1124, %v1678
        %v1680 = vpop.f32.mrb[0].mxu0
        %v1681 = vpop.f32.mrb[0].mxu0
        %v1682 = vpop.f32.mrb[0].mxu0
        %1683 = vdwg.mxu0
        %v1684 = vsel %vm1186, %v1671, -inf
        %1685 = vmax.xlane.f32.xlu0 %v1684
        %v1686 = vpop.xlane.xlu0 %1685
        %v1687 = vsel %vm1186, %v1674, -inf
        %1688 = vmax.xlane.f32.xlu0 %v1687
        %v1689 = vpop.xlane.xlu0 %1688
        %v1690 = vsel %vm1186, %v1679, -inf
        %1691 = vmax.xlane.f32.xlu0 %v1690
        %v1692 = vpop.xlane.xlu0 %1691
        %v1693 = vsub.f32 %v1671, %v1686
        %v1694 = vsub.f32 %v1674, %v1689
        %v1695 = vsub.f32 %v1679, %v1692
        %v1696 = vmul.f32 %v1693, 1.442695
        %v1697 = vpow.pop %v1696
        %v1698 = vmul.f32 %v1694, 1.442695
        %v1699 = vpow.pop %v1698
        %v1700 = vmul.f32 %v1695, 1.442695
        %v1701 = vpow.pop %v1700
        %v1702 = vsel %vm1186, %v1697, 0.0
        %1703 = vadd.xlane.f32.xlu0 %v1702
        %v1704 = vpop.xlane.xlu0 %1703
        %v1705 = vsel %vm1186, %v1699, 0.0
        %1706 = vadd.xlane.f32.xlu0 %v1705
        %v1707 = vpop.xlane.xlu0 %1706
        %v1708 = vsel %vm1186, %v1701, 0.0
        %1709 = vadd.xlane.f32.xlu0 %v1708
        %v1710 = vpop.xlane.xlu0 %1709
        %v1711 = vrcp.pop %v1704
        %v1712 = vrcp.pop %v1707
        %v1713 = vrcp.pop %v1710
        %v1714 = vmul.f32 %v1697, %v1711
        %v1715 = vmul.f32 %v1699, %v1712
        %v1716 = vmul.f32 %v1701, %v1713
        %v1717 = vpack.c.bf16 %v1715, %v1714
        %v1718 = vpack.c.bf16 %v1716, %v1716
        %1719 = vrot.lane.b32.xlu0 %v1118, 32
        %v1720 = vpop.permute.xlu0 %1719
        %1721 = vrot.lane.b32.xlu0 %v1119, 32
        %v1722 = vpop.permute.xlu0 %1721
        %v1725 = vsel %vm1186, %v1717, 0
        %v1728 = vsel %vm1186, %v1718, 0
        %v1731 = vsel %vm1228, %v1722, 0
        %1733 = vmatprep.subr.bf16.mxu0 0
        %1734 = vmatpush1.bf16.msra.mxu0 %v1720
        %1735 = vmatprep.subr.bf16.mxu0 0
        %1736 = vmatpush1.bf16.msra.mxu0 %v1731
        %1737 = vmatprep.subr.bf16.mxu0 0
        %1738 = vmatpush1.bf16.msra.mxu0 0
        %1739 = vmatprep.subr.bf16.mxu0 0
        %1740 = vmatpush1.bf16.msra.mxu0 0
        %1741 = vmatprep.subr.bf16.mxu0 0
        %1742 = vmatpush1.bf16.msra.mxu0 0
        %1743 = vmatprep.subr.bf16.mxu0 0
        %1744 = vmatpush1.bf16.msra.mxu0 0
        %1745 = vmatprep.subr.bf16.mxu0 0
        %1746 = vmatpush1.bf16.msra.mxu0 0
        %1747 = vmatprep.subr.bf16.mxu0 0
        %1748 = vmatpush1.bf16.msra.mxu0 0
        %1749 = vmatprep.subr.bf16.mxu0 0
        %1750 = vmatpush1.bf16.msra.mxu0 0
        %1751 = vmatprep.subr.bf16.mxu0 0
        %1752 = vmatpush1.bf16.msra.mxu0 0
        %1753 = vmatprep.subr.bf16.mxu0 0
        %1754 = vmatpush1.bf16.msra.mxu0 0
        %1755 = vmatprep.subr.bf16.mxu0 0
        %1756 = vmatpush1.bf16.msra.mxu0 0
        %1757 = vmatprep.subr.bf16.mxu0 0
        %1758 = vmatpush1.bf16.msra.mxu0 0
        %1759 = vmatprep.subr.bf16.mxu0 0
        %1760 = vmatpush1.bf16.msra.mxu0 0
        %1761 = vmatprep.subr.bf16.mxu0 0
        %1762 = vmatpush1.bf16.msra.mxu0 0
        %1763 = vmatprep.subr.bf16.mxu0 0
        %1764 = vmatpush1.bf16.msra.mxu0 0
        %1765 = vmatprep.mubr.bf16.mxu0 0
        %1766 = vmatmul.mubr.bf16.gmra.mrb[0].mxu0 %v1725
        %v1767 = vpop.f32.mrb[0].mxu0
        %v1768 = vadd.f32 0.0, %v1767
        %v1769 = vpop.f32.mrb[0].mxu0
        %v1770 = vpop.f32.mrb[0].mxu0
        %v1771 = vadd.f32 0.0, %v1770
        %v1772 = vpop.f32.mrb[0].mxu0
        %1773 = vmatprep.mubr.bf16.mxu0 0
        %1774 = vmatmul.mubr.bf16.gmra.mrb[0].mxu0 %v1728
        %v1775 = vpop.f32.mrb[0].mxu0
        %v1776 = vadd.f32 0.0, %v1775
        %v1777 = vpop.f32.mrb[0].mxu0
        %v1778 = vpop.f32.mrb[0].mxu0
        %v1779 = vpop.f32.mrb[0].mxu0
        %1780 = vdwg.mxu0
        %1784 = vrot.lane.b32.xlu0 %v1438, 32
        %v1785 = vpop.permute.xlu0 %1784
        %1786 = vrot.lane.b32.xlu0 %v1441, 32
        %v1787 = vpop.permute.xlu0 %1786
        %1788 = vrot.lane.b32.xlu0 %v1446, 32
        %v1789 = vpop.permute.xlu0 %1788
        %1796 = vrot.lane.b32.xlu0 %v1603, 64
        %v1797 = vpop.permute.xlu0 %1796
        %1798 = vrot.lane.b32.xlu0 %v1606, 64
        %v1799 = vpop.permute.xlu0 %1798
        %1800 = vrot.lane.b32.xlu0 %v1611, 64
        %v1801 = vpop.permute.xlu0 %1800
        %1808 = vrot.lane.b32.xlu0 %v1768, 96
        %v1809 = vpop.permute.xlu0 %1808
        %1810 = vrot.lane.b32.xlu0 %v1771, 96
        %v1811 = vpop.permute.xlu0 %1810
        %1812 = vrot.lane.b32.xlu0 %v1776, 96
        %v1813 = vpop.permute.xlu0 %1812
        %v1817 = vsel %vm1125, %v1267, %v1785
        %v1818 = vsel %vm1125, %v1270, %v1787
        %v1819 = vsel %vm1125, %v1275, %v1789
        %vm1820 = vcmask 523264
        %v1821 = vsel %vm1820, %v1817, %v1797
        %v1822 = vsel %vm1820, %v1818, %v1799
        %v1823 = vsel %vm1820, %v1819, %v1801
        %vm1824 = vcmask 785408
        %v1825 = vsel %vm1824, %v1821, %v1809
        %v1826 = vsel %vm1824, %v1822, %v1811
        %v1827 = vsel %vm1824, %v1823, %v1813
        %vm1829 = vcmask 1043456
        %v1830 = vrot.slane %v1113, 4
        %v1831 = vrot.slane %v1114, 4
        %v1832 = vsel %vm1829, %v1830, %v1831
        %v1834 = vrot.slane %v1116, 4
        %v1835 = vrot.slane %v1117, 4
        %v1836 = vsel %vm1829, %v1834, %v1835
        %v1838 = vsel %vm1125, %v1832, 0
        %v1841 = vsel %vm1125, %v1831, 0
        %v1844 = vsel %vm1125, %v1836, 0
        %v1847 = vsel %vm1125, %v1835, 0
        %1849 = vmatprep.subr.bf16.mxu0 0
        %1850 = vmatpush1.bf16.xpose.msra.mxu0 %v1844
        %1851 = vmatprep.subr.bf16.mxu0 0
        %1852 = vmatpush1.bf16.xpose.msra.mxu0 %v1847
        %1853 = vmatprep.subr.bf16.mxu0 0
        %1854 = vmatpush1.bf16.xpose.msra.mxu0 0
        %1855 = vmatprep.subr.bf16.mxu0 0
        %1856 = vmatpush1.bf16.xpose.msra.mxu0 0
        %1857 = vmatprep.subr.bf16.mxu0 0
        %1858 = vmatpush1.bf16.xpose.msra.mxu0 0
        %1859 = vmatprep.subr.bf16.mxu0 0
        %1860 = vmatpush1.bf16.xpose.msra.mxu0 0
        %1861 = vmatprep.subr.bf16.mxu0 0
        %1862 = vmatpush1.bf16.xpose.msra.mxu0 0
        %1863 = vmatprep.subr.bf16.mxu0 0
        %1864 = vmatpush1.bf16.xpose.msra.mxu0 0
        %1865 = vmatprep.subr.bf16.mxu0 0
        %1866 = vmatpush1.bf16.xpose.msra.mxu0 0
        %1867 = vmatprep.subr.bf16.mxu0 0
        %1868 = vmatpush1.bf16.xpose.msra.mxu0 0
        %1869 = vmatprep.subr.bf16.mxu0 0
        %1870 = vmatpush1.bf16.xpose.msra.mxu0 0
        %1871 = vmatprep.subr.bf16.mxu0 0
        %1872 = vmatpush1.bf16.xpose.msra.mxu0 0
        %1873 = vmatprep.subr.bf16.mxu0 0
        %1874 = vmatpush1.bf16.xpose.msra.mxu0 0
        %1875 = vmatprep.subr.bf16.mxu0 0
        %1876 = vmatpush1.bf16.xpose.msra.mxu0 0
        %1877 = vmatprep.subr.bf16.mxu0 0
        %1878 = vmatpush1.bf16.xpose.msra.mxu0 0
        %1879 = vmatprep.subr.bf16.mxu0 0
        %1880 = vmatpush1.bf16.xpose.msra.mxu0 0
        %1881 = vmatprep.mubr.bf16.mxu0 0
        %1882 = vmatmul.mubr.bf16.gmra.mrb[0].mxu0 %v1838
        %v1883 = vpop.f32.mrb[0].mxu0
        %v1884 = vadd.f32 %v1124, %v1883
        %v1885 = vpop.f32.mrb[0].mxu0
        %v1886 = vpop.f32.mrb[0].mxu0
        %v1887 = vadd.f32 %v1124, %v1886
        %v1888 = vpop.f32.mrb[0].mxu0
        %1889 = vmatprep.mubr.bf16.mxu0 0
        %1890 = vmatmul.mubr.bf16.gmra.mrb[0].mxu0 %v1841
        %v1891 = vpop.f32.mrb[0].mxu0
        %v1892 = vadd.f32 %v1124, %v1891
        %v1893 = vpop.f32.mrb[0].mxu0
        %v1894 = vpop.f32.mrb[0].mxu0
        %v1895 = vpop.f32.mrb[0].mxu0
        %1896 = vdwg.mxu0
        %v1897 = vsel %vm1186, %v1884, -inf
        %1898 = vmax.xlane.f32.xlu0 %v1897
        %v1899 = vpop.xlane.xlu0 %1898
        %v1900 = vsel %vm1186, %v1887, -inf
        %1901 = vmax.xlane.f32.xlu0 %v1900
        %v1902 = vpop.xlane.xlu0 %1901
        %v1903 = vsel %vm1186, %v1892, -inf
        %1904 = vmax.xlane.f32.xlu0 %v1903
        %v1905 = vpop.xlane.xlu0 %1904
        %v1906 = vsub.f32 %v1884, %v1899
        %v1907 = vsub.f32 %v1887, %v1902
        %v1908 = vsub.f32 %v1892, %v1905
        %v1909 = vmul.f32 %v1906, 1.442695
        %v1910 = vpow.pop %v1909
        %v1911 = vmul.f32 %v1907, 1.442695
        %v1912 = vpow.pop %v1911
        %v1913 = vmul.f32 %v1908, 1.442695
        %v1914 = vpow.pop %v1913
        %v1915 = vsel %vm1186, %v1910, 0.0
        %1916 = vadd.xlane.f32.xlu0 %v1915
        %v1917 = vpop.xlane.xlu0 %1916
        %v1918 = vsel %vm1186, %v1912, 0.0
        %1919 = vadd.xlane.f32.xlu0 %v1918
        %v1920 = vpop.xlane.xlu0 %1919
        %v1921 = vsel %vm1186, %v1914, 0.0
        %1922 = vadd.xlane.f32.xlu0 %v1921
        %v1923 = vpop.xlane.xlu0 %1922
        %v1924 = vrcp.pop %v1917
        %v1925 = vrcp.pop %v1920
        %v1926 = vrcp.pop %v1923
        %v1927 = vmul.f32 %v1910, %v1924
        %v1928 = vmul.f32 %v1912, %v1925
        %v1929 = vmul.f32 %v1914, %v1926
        %v1930 = vpack.c.bf16 %v1928, %v1927
        %v1931 = vpack.c.bf16 %v1929, %v1929
        %v1933 = vrot.slane %v1119, 4
        %v1934 = vrot.slane %v1120, 4
        %v1935 = vsel %vm1829, %v1933, %v1934
        %v1938 = vsel %vm1186, %v1930, 0
        %v1941 = vsel %vm1186, %v1931, 0
        %v1944 = vsel %vm1228, %v1934, 0
        %1946 = vmatprep.subr.bf16.mxu0 0
        %1947 = vmatpush1.bf16.msra.mxu0 %v1935
        %1948 = vmatprep.subr.bf16.mxu0 0
        %1949 = vmatpush1.bf16.msra.mxu0 %v1944
        %1950 = vmatprep.subr.bf16.mxu0 0
        %1951 = vmatpush1.bf16.msra.mxu0 0
        %1952 = vmatprep.subr.bf16.mxu0 0
        %1953 = vmatpush1.bf16.msra.mxu0 0
        %1954 = vmatprep.subr.bf16.mxu0 0
        %1955 = vmatpush1.bf16.msra.mxu0 0
        %1956 = vmatprep.subr.bf16.mxu0 0
        %1957 = vmatpush1.bf16.msra.mxu0 0
        %1958 = vmatprep.subr.bf16.mxu0 0
        %1959 = vmatpush1.bf16.msra.mxu0 0
        %1960 = vmatprep.subr.bf16.mxu0 0
        %1961 = vmatpush1.bf16.msra.mxu0 0
        %1962 = vmatprep.subr.bf16.mxu0 0
        %1963 = vmatpush1.bf16.msra.mxu0 0
        %1964 = vmatprep.subr.bf16.mxu0 0
        %1965 = vmatpush1.bf16.msra.mxu0 0
        %1966 = vmatprep.subr.bf16.mxu0 0
        %1967 = vmatpush1.bf16.msra.mxu0 0
        %1968 = vmatprep.subr.bf16.mxu0 0
        %1969 = vmatpush1.bf16.msra.mxu0 0
        %1970 = vmatprep.subr.bf16.mxu0 0
        %1971 = vmatpush1.bf16.msra.mxu0 0
        %1972 = vmatprep.subr.bf16.mxu0 0
        %1973 = vmatpush1.bf16.msra.mxu0 0
        %1974 = vmatprep.subr.bf16.mxu0 0
        %1975 = vmatpush1.bf16.msra.mxu0 0
        %1976 = vmatprep.subr.bf16.mxu0 0
        %1977 = vmatpush1.bf16.msra.mxu0 0
        %1978 = vmatprep.mubr.bf16.mxu0 0
        %1979 = vmatmul.mubr.bf16.gmra.mrb[0].mxu0 %v1938
        %v1980 = vpop.f32.mrb[0].mxu0
        %v1981 = vadd.f32 0.0, %v1980
        %v1982 = vpop.f32.mrb[0].mxu0
        %v1983 = vpop.f32.mrb[0].mxu0
        %v1984 = vadd.f32 0.0, %v1983
        %v1985 = vpop.f32.mrb[0].mxu0
        %1986 = vmatprep.mubr.bf16.mxu0 0
        %1987 = vmatmul.mubr.bf16.gmra.mrb[0].mxu0 %v1941
        %v1988 = vpop.f32.mrb[0].mxu0
        %v1989 = vadd.f32 0.0, %v1988
        %v1990 = vpop.f32.mrb[0].mxu0
        %v1991 = vpop.f32.mrb[0].mxu0
        %v1992 = vpop.f32.mrb[0].mxu0
        %1993 = vdwg.mxu0
        %1994 = vrot.lane.b32.xlu0 %v1832, 96
        %v1995 = vpop.permute.xlu0 %1994
        %1996 = vrot.lane.b32.xlu0 %v1831, 96
        %v1997 = vpop.permute.xlu0 %1996
        %1998 = vrot.lane.b32.xlu0 %v1836, 96
        %v1999 = vpop.permute.xlu0 %1998
        %2000 = vrot.lane.b32.xlu0 %v1835, 96
        %v2001 = vpop.permute.xlu0 %2000
        %v2003 = vsel %vm1125, %v1995, 0
        %v2006 = vsel %vm1125, %v1997, 0
        %v2009 = vsel %vm1125, %v1999, 0
        %v2012 = vsel %vm1125, %v2001, 0
        %2014 = vmatprep.subr.bf16.mxu0 0
        %2015 = vmatpush1.bf16.xpose.msra.mxu0 %v2009
        %2016 = vmatprep.subr.bf16.mxu0 0
        %2017 = vmatpush1.bf16.xpose.msra.mxu0 %v2012
        %2018 = vmatprep.subr.bf16.mxu0 0
        %2019 = vmatpush1.bf16.xpose.msra.mxu0 0
        %2020 = vmatprep.subr.bf16.mxu0 0
        %2021 = vmatpush1.bf16.xpose.msra.mxu0 0
        %2022 = vmatprep.subr.bf16.mxu0 0
        %2023 = vmatpush1.bf16.xpose.msra.mxu0 0
        %2024 = vmatprep.subr.bf16.mxu0 0
        %2025 = vmatpush1.bf16.xpose.msra.mxu0 0
        %2026 = vmatprep.subr.bf16.mxu0 0
        %2027 = vmatpush1.bf16.xpose.msra.mxu0 0
        %2028 = vmatprep.subr.bf16.mxu0 0
        %2029 = vmatpush1.bf16.xpose.msra.mxu0 0
        %2030 = vmatprep.subr.bf16.mxu0 0
        %2031 = vmatpush1.bf16.xpose.msra.mxu0 0
        %2032 = vmatprep.subr.bf16.mxu0 0
        %2033 = vmatpush1.bf16.xpose.msra.mxu0 0
        %2034 = vmatprep.subr.bf16.mxu0 0
        %2035 = vmatpush1.bf16.xpose.msra.mxu0 0
        %2036 = vmatprep.subr.bf16.mxu0 0
        %2037 = vmatpush1.bf16.xpose.msra.mxu0 0
        %2038 = vmatprep.subr.bf16.mxu0 0
        %2039 = vmatpush1.bf16.xpose.msra.mxu0 0
        %2040 = vmatprep.subr.bf16.mxu0 0
        %2041 = vmatpush1.bf16.xpose.msra.mxu0 0
        %2042 = vmatprep.subr.bf16.mxu0 0
        %2043 = vmatpush1.bf16.xpose.msra.mxu0 0
        %2044 = vmatprep.subr.bf16.mxu0 0
        %2045 = vmatpush1.bf16.xpose.msra.mxu0 0
        %2046 = vmatprep.mubr.bf16.mxu0 0
        %2047 = vmatmul.mubr.bf16.gmra.mrb[0].mxu0 %v2003
        %v2048 = vpop.f32.mrb[0].mxu0
        %v2049 = vadd.f32 %v1124, %v2048
        %v2050 = vpop.f32.mrb[0].mxu0
        %v2051 = vpop.f32.mrb[0].mxu0
        %v2052 = vadd.f32 %v1124, %v2051
        %v2053 = vpop.f32.mrb[0].mxu0
        %2054 = vmatprep.mubr.bf16.mxu0 0
        %2055 = vmatmul.mubr.bf16.gmra.mrb[0].mxu0 %v2006
        %v2056 = vpop.f32.mrb[0].mxu0
        %v2057 = vadd.f32 %v1124, %v2056
        %v2058 = vpop.f32.mrb[0].mxu0
        %v2059 = vpop.f32.mrb[0].mxu0
        %v2060 = vpop.f32.mrb[0].mxu0
        %2061 = vdwg.mxu0
        %v2062 = vsel %vm1186, %v2049, -inf
        %2063 = vmax.xlane.f32.xlu0 %v2062
        %v2064 = vpop.xlane.xlu0 %2063
        %v2065 = vsel %vm1186, %v2052, -inf
        %2066 = vmax.xlane.f32.xlu0 %v2065
        %v2067 = vpop.xlane.xlu0 %2066
        %v2068 = vsel %vm1186, %v2057, -inf
        %2069 = vmax.xlane.f32.xlu0 %v2068
        %v2070 = vpop.xlane.xlu0 %2069
        %v2071 = vsub.f32 %v2049, %v2064
        %v2072 = vsub.f32 %v2052, %v2067
        %v2073 = vsub.f32 %v2057, %v2070
        %v2074 = vmul.f32 %v2071, 1.442695
        %v2075 = vpow.pop %v2074
        %v2076 = vmul.f32 %v2072, 1.442695
        %v2077 = vpow.pop %v2076
        %v2078 = vmul.f32 %v2073, 1.442695
        %v2079 = vpow.pop %v2078
        %v2080 = vsel %vm1186, %v2075, 0.0
        %2081 = vadd.xlane.f32.xlu0 %v2080
        %v2082 = vpop.xlane.xlu0 %2081
        %v2083 = vsel %vm1186, %v2077, 0.0
        %2084 = vadd.xlane.f32.xlu0 %v2083
        %v2085 = vpop.xlane.xlu0 %2084
        %v2086 = vsel %vm1186, %v2079, 0.0
        %2087 = vadd.xlane.f32.xlu0 %v2086
        %v2088 = vpop.xlane.xlu0 %2087
        %v2089 = vrcp.pop %v2082
        %v2090 = vrcp.pop %v2085
        %v2091 = vrcp.pop %v2088
        %v2092 = vmul.f32 %v2075, %v2089
        %v2093 = vmul.f32 %v2077, %v2090
        %v2094 = vmul.f32 %v2079, %v2091
        %v2095 = vpack.c.bf16 %v2093, %v2092
        %v2096 = vpack.c.bf16 %v2094, %v2094
        %2097 = vrot.lane.b32.xlu0 %v1935, 96
        %v2098 = vpop.permute.xlu0 %2097
        %2099 = vrot.lane.b32.xlu0 %v1934, 96
        %v2100 = vpop.permute.xlu0 %2099
        %v2103 = vsel %vm1186, %v2095, 0
        %v2106 = vsel %vm1186, %v2096, 0
        %v2109 = vsel %vm1228, %v2100, 0
        %2111 = vmatprep.subr.bf16.mxu0 0
        %2112 = vmatpush1.bf16.msra.mxu0 %v2098
        %2113 = vmatprep.subr.bf16.mxu0 0
        %2114 = vmatpush1.bf16.msra.mxu0 %v2109
        %2115 = vmatprep.subr.bf16.mxu0 0
        %2116 = vmatpush1.bf16.msra.mxu0 0
        %2117 = vmatprep.subr.bf16.mxu0 0
        %2118 = vmatpush1.bf16.msra.mxu0 0
        %2119 = vmatprep.subr.bf16.mxu0 0
        %2120 = vmatpush1.bf16.msra.mxu0 0
        %2121 = vmatprep.subr.bf16.mxu0 0
        %2122 = vmatpush1.bf16.msra.mxu0 0
        %2123 = vmatprep.subr.bf16.mxu0 0
        %2124 = vmatpush1.bf16.msra.mxu0 0
        %2125 = vmatprep.subr.bf16.mxu0 0
        %2126 = vmatpush1.bf16.msra.mxu0 0
        %2127 = vmatprep.subr.bf16.mxu0 0
        %2128 = vmatpush1.bf16.msra.mxu0 0
        %2129 = vmatprep.subr.bf16.mxu0 0
        %2130 = vmatpush1.bf16.msra.mxu0 0
        %2131 = vmatprep.subr.bf16.mxu0 0
        %2132 = vmatpush1.bf16.msra.mxu0 0
        %2133 = vmatprep.subr.bf16.mxu0 0
        %2134 = vmatpush1.bf16.msra.mxu0 0
        %2135 = vmatprep.subr.bf16.mxu0 0
        %2136 = vmatpush1.bf16.msra.mxu0 0
        %2137 = vmatprep.subr.bf16.mxu0 0
        %2138 = vmatpush1.bf16.msra.mxu0 0
        %2139 = vmatprep.subr.bf16.mxu0 0
        %2140 = vmatpush1.bf16.msra.mxu0 0
        %2141 = vmatprep.subr.bf16.mxu0 0
        %2142 = vmatpush1.bf16.msra.mxu0 0
        %2143 = vmatprep.mubr.bf16.mxu0 0
        %2144 = vmatmul.mubr.bf16.gmra.mrb[0].mxu0 %v2103
        %v2145 = vpop.f32.mrb[0].mxu0
        %v2146 = vadd.f32 0.0, %v2145
        %v2147 = vpop.f32.mrb[0].mxu0
        %v2148 = vpop.f32.mrb[0].mxu0
        %v2149 = vadd.f32 0.0, %v2148
        %v2150 = vpop.f32.mrb[0].mxu0
        %2151 = vmatprep.mubr.bf16.mxu0 0
        %2152 = vmatmul.mubr.bf16.gmra.mrb[0].mxu0 %v2106
        %v2153 = vpop.f32.mrb[0].mxu0
        %v2154 = vadd.f32 0.0, %v2153
        %v2155 = vpop.f32.mrb[0].mxu0
        %v2156 = vpop.f32.mrb[0].mxu0
        %v2157 = vpop.f32.mrb[0].mxu0
        %2158 = vdwg.mxu0
        %2159 = vrot.lane.b32.xlu0 %v1832, 64
        %v2160 = vpop.permute.xlu0 %2159
        %2161 = vrot.lane.b32.xlu0 %v1831, 64
        %v2162 = vpop.permute.xlu0 %2161
        %2163 = vrot.lane.b32.xlu0 %v1836, 64
        %v2164 = vpop.permute.xlu0 %2163
        %2165 = vrot.lane.b32.xlu0 %v1835, 64
        %v2166 = vpop.permute.xlu0 %2165
        %v2168 = vsel %vm1125, %v2160, 0
        %v2171 = vsel %vm1125, %v2162, 0
        %v2174 = vsel %vm1125, %v2164, 0
        %v2177 = vsel %vm1125, %v2166, 0
        %2179 = vmatprep.subr.bf16.mxu0 0
        %2180 = vmatpush1.bf16.xpose.msra.mxu0 %v2174
        %2181 = vmatprep.subr.bf16.mxu0 0
        %2182 = vmatpush1.bf16.xpose.msra.mxu0 %v2177
        %2183 = vmatprep.subr.bf16.mxu0 0
        %2184 = vmatpush1.bf16.xpose.msra.mxu0 0
        %2185 = vmatprep.subr.bf16.mxu0 0
        %2186 = vmatpush1.bf16.xpose.msra.mxu0 0
        %2187 = vmatprep.subr.bf16.mxu0 0
        %2188 = vmatpush1.bf16.xpose.msra.mxu0 0
        %2189 = vmatprep.subr.bf16.mxu0 0
        %2190 = vmatpush1.bf16.xpose.msra.mxu0 0
        %2191 = vmatprep.subr.bf16.mxu0 0
        %2192 = vmatpush1.bf16.xpose.msra.mxu0 0
        %2193 = vmatprep.subr.bf16.mxu0 0
        %2194 = vmatpush1.bf16.xpose.msra.mxu0 0
        %2195 = vmatprep.subr.bf16.mxu0 0
        %2196 = vmatpush1.bf16.xpose.msra.mxu0 0
        %2197 = vmatprep.subr.bf16.mxu0 0
        %2198 = vmatpush1.bf16.xpose.msra.mxu0 0
        %2199 = vmatprep.subr.bf16.mxu0 0
        %2200 = vmatpush1.bf16.xpose.msra.mxu0 0
        %2201 = vmatprep.subr.bf16.mxu0 0
        %2202 = vmatpush1.bf16.xpose.msra.mxu0 0
        %2203 = vmatprep.subr.bf16.mxu0 0
        %2204 = vmatpush1.bf16.xpose.msra.mxu0 0
        %2205 = vmatprep.subr.bf16.mxu0 0
        %2206 = vmatpush1.bf16.xpose.msra.mxu0 0
        %2207 = vmatprep.subr.bf16.mxu0 0
        %2208 = vmatpush1.bf16.xpose.msra.mxu0 0
        %2209 = vmatprep.subr.bf16.mxu0 0
        %2210 = vmatpush1.bf16.xpose.msra.mxu0 0
        %2211 = vmatprep.mubr.bf16.mxu0 0
        %2212 = vmatmul.mubr.bf16.gmra.mrb[0].mxu0 %v2168
        %v2213 = vpop.f32.mrb[0].mxu0
        %v2214 = vadd.f32 %v1124, %v2213
        %v2215 = vpop.f32.mrb[0].mxu0
        %v2216 = vpop.f32.mrb[0].mxu0
        %v2217 = vadd.f32 %v1124, %v2216
        %v2218 = vpop.f32.mrb[0].mxu0
        %2219 = vmatprep.mubr.bf16.mxu0 0
        %2220 = vmatmul.mubr.bf16.gmra.mrb[0].mxu0 %v2171
        %v2221 = vpop.f32.mrb[0].mxu0
        %v2222 = vadd.f32 %v1124, %v2221
        %v2223 = vpop.f32.mrb[0].mxu0
        %v2224 = vpop.f32.mrb[0].mxu0
        %v2225 = vpop.f32.mrb[0].mxu0
        %2226 = vdwg.mxu0
        %v2227 = vsel %vm1186, %v2214, -inf
        %2228 = vmax.xlane.f32.xlu0 %v2227
        %v2229 = vpop.xlane.xlu0 %2228
        %v2230 = vsel %vm1186, %v2217, -inf
        %2231 = vmax.xlane.f32.xlu0 %v2230
        %v2232 = vpop.xlane.xlu0 %2231
        %v2233 = vsel %vm1186, %v2222, -inf
        %2234 = vmax.xlane.f32.xlu0 %v2233
        %v2235 = vpop.xlane.xlu0 %2234
        %v2236 = vsub.f32 %v2214, %v2229
        %v2237 = vsub.f32 %v2217, %v2232
        %v2238 = vsub.f32 %v2222, %v2235
        %v2239 = vmul.f32 %v2236, 1.442695
        %v2240 = vpow.pop %v2239
        %v2241 = vmul.f32 %v2237, 1.442695
        %v2242 = vpow.pop %v2241
        %v2243 = vmul.f32 %v2238, 1.442695
        %v2244 = vpow.pop %v2243
        %v2245 = vsel %vm1186, %v2240, 0.0
        %2246 = vadd.xlane.f32.xlu0 %v2245
        %v2247 = vpop.xlane.xlu0 %2246
        %v2248 = vsel %vm1186, %v2242, 0.0
        %2249 = vadd.xlane.f32.xlu0 %v2248
        %v2250 = vpop.xlane.xlu0 %2249
        %v2251 = vsel %vm1186, %v2244, 0.0
        %2252 = vadd.xlane.f32.xlu0 %v2251
        %v2253 = vpop.xlane.xlu0 %2252
        %v2254 = vrcp.pop %v2247
        %v2255 = vrcp.pop %v2250
        %v2256 = vrcp.pop %v2253
        %v2257 = vmul.f32 %v2240, %v2254
        %v2258 = vmul.f32 %v2242, %v2255
        %v2259 = vmul.f32 %v2244, %v2256
        %v2260 = vpack.c.bf16 %v2258, %v2257
        %v2261 = vpack.c.bf16 %v2259, %v2259
        %2262 = vrot.lane.b32.xlu0 %v1935, 64
        %v2263 = vpop.permute.xlu0 %2262
        %2264 = vrot.lane.b32.xlu0 %v1934, 64
        %v2265 = vpop.permute.xlu0 %2264
        %v2268 = vsel %vm1186, %v2260, 0
        %v2271 = vsel %vm1186, %v2261, 0
        %v2274 = vsel %vm1228, %v2265, 0
        %2276 = vmatprep.subr.bf16.mxu0 0
        %2277 = vmatpush1.bf16.msra.mxu0 %v2263
        %2278 = vmatprep.subr.bf16.mxu0 0
        %2279 = vmatpush1.bf16.msra.mxu0 %v2274
        %2280 = vmatprep.subr.bf16.mxu0 0
        %2281 = vmatpush1.bf16.msra.mxu0 0
        %2282 = vmatprep.subr.bf16.mxu0 0
        %2283 = vmatpush1.bf16.msra.mxu0 0
        %2284 = vmatprep.subr.bf16.mxu0 0
        %2285 = vmatpush1.bf16.msra.mxu0 0
        %2286 = vmatprep.subr.bf16.mxu0 0
        %2287 = vmatpush1.bf16.msra.mxu0 0
        %2288 = vmatprep.subr.bf16.mxu0 0
        %2289 = vmatpush1.bf16.msra.mxu0 0
        %2290 = vmatprep.subr.bf16.mxu0 0
        %2291 = vmatpush1.bf16.msra.mxu0 0
        %2292 = vmatprep.subr.bf16.mxu0 0
        %2293 = vmatpush1.bf16.msra.mxu0 0
        %2294 = vmatprep.subr.bf16.mxu0 0
        %2295 = vmatpush1.bf16.msra.mxu0 0
        %2296 = vmatprep.subr.bf16.mxu0 0
        %2297 = vmatpush1.bf16.msra.mxu0 0
        %2298 = vmatprep.subr.bf16.mxu0 0
        %2299 = vmatpush1.bf16.msra.mxu0 0
        %2300 = vmatprep.subr.bf16.mxu0 0
        %2301 = vmatpush1.bf16.msra.mxu0 0
        %2302 = vmatprep.subr.bf16.mxu0 0
        %2303 = vmatpush1.bf16.msra.mxu0 0
        %2304 = vmatprep.subr.bf16.mxu0 0
        %2305 = vmatpush1.bf16.msra.mxu0 0
        %2306 = vmatprep.subr.bf16.mxu0 0
        %2307 = vmatpush1.bf16.msra.mxu0 0
        %2308 = vmatprep.mubr.bf16.mxu0 0
        %2309 = vmatmul.mubr.bf16.gmra.mrb[0].mxu0 %v2268
        %v2310 = vpop.f32.mrb[0].mxu0
        %v2311 = vadd.f32 0.0, %v2310
        %v2312 = vpop.f32.mrb[0].mxu0
        %v2313 = vpop.f32.mrb[0].mxu0
        %v2314 = vadd.f32 0.0, %v2313
        %v2315 = vpop.f32.mrb[0].mxu0
        %2316 = vmatprep.mubr.bf16.mxu0 0
        %2317 = vmatmul.mubr.bf16.gmra.mrb[0].mxu0 %v2271
        %v2318 = vpop.f32.mrb[0].mxu0
        %v2319 = vadd.f32 0.0, %v2318
        %v2320 = vpop.f32.mrb[0].mxu0
        %v2321 = vpop.f32.mrb[0].mxu0
        %v2322 = vpop.f32.mrb[0].mxu0
        %2323 = vdwg.mxu0
        %2324 = vrot.lane.b32.xlu0 %v1832, 32
        %v2325 = vpop.permute.xlu0 %2324
        %2326 = vrot.lane.b32.xlu0 %v1831, 32
        %v2327 = vpop.permute.xlu0 %2326
        %2328 = vrot.lane.b32.xlu0 %v1836, 32
        %v2329 = vpop.permute.xlu0 %2328
        %2330 = vrot.lane.b32.xlu0 %v1835, 32
        %v2331 = vpop.permute.xlu0 %2330
        %v2333 = vsel %vm1125, %v2325, 0
        %v2336 = vsel %vm1125, %v2327, 0
        %v2339 = vsel %vm1125, %v2329, 0
        %v2342 = vsel %vm1125, %v2331, 0
        %2344 = vmatprep.subr.bf16.mxu0 0
        %2345 = vmatpush1.bf16.xpose.msra.mxu0 %v2339
        %2346 = vmatprep.subr.bf16.mxu0 0
        %2347 = vmatpush1.bf16.xpose.msra.mxu0 %v2342
        %2348 = vmatprep.subr.bf16.mxu0 0
        %2349 = vmatpush1.bf16.xpose.msra.mxu0 0
        %2350 = vmatprep.subr.bf16.mxu0 0
        %2351 = vmatpush1.bf16.xpose.msra.mxu0 0
        %2352 = vmatprep.subr.bf16.mxu0 0
        %2353 = vmatpush1.bf16.xpose.msra.mxu0 0
        %2354 = vmatprep.subr.bf16.mxu0 0
        %2355 = vmatpush1.bf16.xpose.msra.mxu0 0
        %2356 = vmatprep.subr.bf16.mxu0 0
        %2357 = vmatpush1.bf16.xpose.msra.mxu0 0
        %2358 = vmatprep.subr.bf16.mxu0 0
        %2359 = vmatpush1.bf16.xpose.msra.mxu0 0
        %2360 = vmatprep.subr.bf16.mxu0 0
        %2361 = vmatpush1.bf16.xpose.msra.mxu0 0
        %2362 = vmatprep.subr.bf16.mxu0 0
        %2363 = vmatpush1.bf16.xpose.msra.mxu0 0
        %2364 = vmatprep.subr.bf16.mxu0 0
        %2365 = vmatpush1.bf16.xpose.msra.mxu0 0
        %2366 = vmatprep.subr.bf16.mxu0 0
        %2367 = vmatpush1.bf16.xpose.msra.mxu0 0
        %2368 = vmatprep.subr.bf16.mxu0 0
        %2369 = vmatpush1.bf16.xpose.msra.mxu0 0
        %2370 = vmatprep.subr.bf16.mxu0 0
        %2371 = vmatpush1.bf16.xpose.msra.mxu0 0
        %2372 = vmatprep.subr.bf16.mxu0 0
        %2373 = vmatpush1.bf16.xpose.msra.mxu0 0
        %2374 = vmatprep.subr.bf16.mxu0 0
        %2375 = vmatpush1.bf16.xpose.msra.mxu0 0
        %2376 = vmatprep.mubr.bf16.mxu0 0
        %2377 = vmatmul.mubr.bf16.gmra.mrb[0].mxu0 %v2333
        %v2378 = vpop.f32.mrb[0].mxu0
        %v2379 = vadd.f32 %v1124, %v2378
        %v2380 = vpop.f32.mrb[0].mxu0
        %v2381 = vpop.f32.mrb[0].mxu0
        %v2382 = vadd.f32 %v1124, %v2381
        %v2383 = vpop.f32.mrb[0].mxu0
        %2384 = vmatprep.mubr.bf16.mxu0 0
        %2385 = vmatmul.mubr.bf16.gmra.mrb[0].mxu0 %v2336
        %v2386 = vpop.f32.mrb[0].mxu0
        %v2387 = vadd.f32 %v1124, %v2386
        %v2388 = vpop.f32.mrb[0].mxu0
        %v2389 = vpop.f32.mrb[0].mxu0
        %v2390 = vpop.f32.mrb[0].mxu0
        %2391 = vdwg.mxu0
        %v2392 = vsel %vm1186, %v2379, -inf
        %2393 = vmax.xlane.f32.xlu0 %v2392
        %v2394 = vpop.xlane.xlu0 %2393
        %v2395 = vsel %vm1186, %v2382, -inf
        %2396 = vmax.xlane.f32.xlu0 %v2395
        %v2397 = vpop.xlane.xlu0 %2396
        %v2398 = vsel %vm1186, %v2387, -inf
        %2399 = vmax.xlane.f32.xlu0 %v2398
        %v2400 = vpop.xlane.xlu0 %2399
        %v2401 = vsub.f32 %v2379, %v2394
        %v2402 = vsub.f32 %v2382, %v2397
        %v2403 = vsub.f32 %v2387, %v2400
        %v2404 = vmul.f32 %v2401, 1.442695
        %v2405 = vpow.pop %v2404
        %v2406 = vmul.f32 %v2402, 1.442695
        %v2407 = vpow.pop %v2406
        %v2408 = vmul.f32 %v2403, 1.442695
        %v2409 = vpow.pop %v2408
        %v2410 = vsel %vm1186, %v2405, 0.0
        %2411 = vadd.xlane.f32.xlu0 %v2410
        %v2412 = vpop.xlane.xlu0 %2411
        %v2413 = vsel %vm1186, %v2407, 0.0
        %2414 = vadd.xlane.f32.xlu0 %v2413
        %v2415 = vpop.xlane.xlu0 %2414
        %v2416 = vsel %vm1186, %v2409, 0.0
        %2417 = vadd.xlane.f32.xlu0 %v2416
        %v2418 = vpop.xlane.xlu0 %2417
        %v2419 = vrcp.pop %v2412
        %v2420 = vrcp.pop %v2415
        %v2421 = vrcp.pop %v2418
        %v2422 = vmul.f32 %v2405, %v2419
        %v2423 = vmul.f32 %v2407, %v2420
        %v2424 = vmul.f32 %v2409, %v2421
        %v2425 = vpack.c.bf16 %v2423, %v2422
        %v2426 = vpack.c.bf16 %v2424, %v2424
        %2427 = vrot.lane.b32.xlu0 %v1935, 32
        %v2428 = vpop.permute.xlu0 %2427
        %2429 = vrot.lane.b32.xlu0 %v1934, 32
        %v2430 = vpop.permute.xlu0 %2429
        %v2433 = vsel %vm1186, %v2425, 0
        %v2436 = vsel %vm1186, %v2426, 0
        %v2439 = vsel %vm1228, %v2430, 0
        %2441 = vmatprep.subr.bf16.mxu0 0
        %2442 = vmatpush1.bf16.msra.mxu0 %v2428
        %2443 = vmatprep.subr.bf16.mxu0 0
        %2444 = vmatpush1.bf16.msra.mxu0 %v2439
        %2445 = vmatprep.subr.bf16.mxu0 0
        %2446 = vmatpush1.bf16.msra.mxu0 0
        %2447 = vmatprep.subr.bf16.mxu0 0
        %2448 = vmatpush1.bf16.msra.mxu0 0
        %2449 = vmatprep.subr.bf16.mxu0 0
        %2450 = vmatpush1.bf16.msra.mxu0 0
        %2451 = vmatprep.subr.bf16.mxu0 0
        %2452 = vmatpush1.bf16.msra.mxu0 0
        %2453 = vmatprep.subr.bf16.mxu0 0
        %2454 = vmatpush1.bf16.msra.mxu0 0
        %2455 = vmatprep.subr.bf16.mxu0 0
        %2456 = vmatpush1.bf16.msra.mxu0 0
        %2457 = vmatprep.subr.bf16.mxu0 0
        %2458 = vmatpush1.bf16.msra.mxu0 0
        %2459 = vmatprep.subr.bf16.mxu0 0
        %2460 = vmatpush1.bf16.msra.mxu0 0
        %2461 = vmatprep.subr.bf16.mxu0 0
        %2462 = vmatpush1.bf16.msra.mxu0 0
        %2463 = vmatprep.subr.bf16.mxu0 0
        %2464 = vmatpush1.bf16.msra.mxu0 0
        %2465 = vmatprep.subr.bf16.mxu0 0
        %2466 = vmatpush1.bf16.msra.mxu0 0
        %2467 = vmatprep.subr.bf16.mxu0 0
        %2468 = vmatpush1.bf16.msra.mxu0 0
        %2469 = vmatprep.subr.bf16.mxu0 0
        %2470 = vmatpush1.bf16.msra.mxu0 0
        %2471 = vmatprep.subr.bf16.mxu0 0
        %2472 = vmatpush1.bf16.msra.mxu0 0
        %2473 = vmatprep.mubr.bf16.mxu0 0
        %2474 = vmatmul.mubr.bf16.gmra.mrb[0].mxu0 %v2433
        %v2475 = vpop.f32.mrb[0].mxu0
        %v2476 = vadd.f32 0.0, %v2475
        %v2477 = vpop.f32.mrb[0].mxu0
        %v2478 = vpop.f32.mrb[0].mxu0
        %v2479 = vadd.f32 0.0, %v2478
        %v2480 = vpop.f32.mrb[0].mxu0
        %2481 = vmatprep.mubr.bf16.mxu0 0
        %2482 = vmatmul.mubr.bf16.gmra.mrb[0].mxu0 %v2436
        %v2483 = vpop.f32.mrb[0].mxu0
        %v2484 = vadd.f32 0.0, %v2483
        %v2485 = vpop.f32.mrb[0].mxu0
        %v2486 = vpop.f32.mrb[0].mxu0
        %v2487 = vpop.f32.mrb[0].mxu0
        %2488 = vdwg.mxu0
        %2492 = vrot.lane.b32.xlu0 %v2146, 32
        %v2493 = vpop.permute.xlu0 %2492
        %2494 = vrot.lane.b32.xlu0 %v2149, 32
        %v2495 = vpop.permute.xlu0 %2494
        %2496 = vrot.lane.b32.xlu0 %v2154, 32
        %v2497 = vpop.permute.xlu0 %2496
        %2504 = vrot.lane.b32.xlu0 %v2311, 64
        %v2505 = vpop.permute.xlu0 %2504
        %2506 = vrot.lane.b32.xlu0 %v2314, 64
        %v2507 = vpop.permute.xlu0 %2506
        %2508 = vrot.lane.b32.xlu0 %v2319, 64
        %v2509 = vpop.permute.xlu0 %2508
        %2516 = vrot.lane.b32.xlu0 %v2476, 96
        %v2517 = vpop.permute.xlu0 %2516
        %2518 = vrot.lane.b32.xlu0 %v2479, 96
        %v2519 = vpop.permute.xlu0 %2518
        %2520 = vrot.lane.b32.xlu0 %v2484, 96
        %v2521 = vpop.permute.xlu0 %2520
        %v2525 = vsel %vm1125, %v1981, %v2493
        %v2526 = vsel %vm1125, %v1984, %v2495
        %v2527 = vsel %vm1125, %v1989, %v2497
        %v2528 = vsel %vm1820, %v2525, %v2505
        %v2529 = vsel %vm1820, %v2526, %v2507
        %v2530 = vsel %vm1820, %v2527, %v2509
        %v2531 = vsel %vm1824, %v2528, %v2517
        %v2532 = vsel %vm1824, %v2529, %v2519
        %v2533 = vsel %vm1824, %v2530, %v2521
        %v2534 = vpack.c.bf16 %v1826, %v1825
        %v2535 = vpack.c.bf16 %v2531, %v1827
        %v2536 = vpack.c.bf16 %v2533, %v2532
        %v2537 = vld [vmem:[%s650] sm:$0xf]
        %v2538 = vld [vmem:[%s650 + $0x4] sm:$0xf]
        %v2539 = vld [vmem:[%s650 + $0x8] sm:$0xf]
        %v2540 = vld [vmem:[%s650 + $0xc] sm:$0xf]
        %v2541 = vld [vmem:[%s650 + $0x10] sm:$0xf]
        %v2542 = vld [vmem:[%s650 + $0x14] sm:$0xf]
        %v2543 = vld [vmem:[%s650 + $0x18] sm:$0xf]
        %v2544 = vld [vmem:[%s650 + $0x1c] sm:$0xf]
        %v2545 = vld [vmem:[%s650 + $0x20] sm:$0xf]
        %v2546 = vld [vmem:[%s650 + $0x24] sm:$0xf]
        %v2547 = vld [vmem:[%s650 + $0x28] sm:$0xf]
        %v2548 = vld [vmem:[%s650 + $0x2c] sm:$0xf]
        %v2549 = vld [vmem:[%s650 + $0x30] sm:$0xf]
        %v2550 = vld [vmem:[%s650 + $0x34] sm:$0xf]
        %v2551 = vld [vmem:[%s650 + $0x38] sm:$0xf]
        %v2552 = vld [vmem:[%s650 + $0x3c] sm:$0xf]
        %v2553 = vld [vmem:[%s653] sm:$0x1]
        %v2555 = vlaneseq
        %v2556 = vshrl.u32 %v2555, 7
        %v2557 = vsub.s32 0, %v2556
        %v2558 = vrot.slane %v2553, %v2557
        %v2576 = vunpack.c.l.b16 %v2537
        %v2577 = vunpack.c.l.b16 %v2538
        %v2578 = vunpack.c.l.b16 %v2539
        %v2579 = vunpack.c.l.b16 %v2540
        %v2580 = vunpack.c.l.b16 %v2541
        %v2581 = vunpack.c.l.b16 %v2542
        %v2582 = vunpack.c.l.b16 %v2543
        %v2583 = vunpack.c.l.b16 %v2544
        %v2584 = vunpack.c.l.b16 %v2545
        %v2585 = vunpack.c.l.b16 %v2546
        %v2586 = vunpack.c.l.b16 %v2547
        %v2587 = vunpack.c.l.b16 %v2548
        %v2588 = vunpack.c.l.b16 %v2549
        %v2589 = vunpack.c.l.b16 %v2550
        %v2590 = vunpack.c.l.b16 %v2551
        %v2591 = vunpack.c.l.b16 %v2552
        %v2592 = vpack.c.b16 %v2577, %v2576
        %v2593 = vpack.c.b16 %v2579, %v2578
        %v2594 = vpack.c.b16 %v2581, %v2580
        %v2595 = vpack.c.b16 %v2583, %v2582
        %v2596 = vpack.c.b16 %v2585, %v2584
        %v2597 = vpack.c.b16 %v2587, %v2586
        %v2598 = vpack.c.b16 %v2589, %v2588
        %v2599 = vpack.c.b16 %v2591, %v2590
        %2608 = vmatprep.subr.bf16.mxu0 0
        %2609 = vmatpush1.bf16.msra.mxu0 %v2592
        %2610 = vmatprep.subr.bf16.mxu0 0
        %2611 = vmatpush1.bf16.msra.mxu0 %v2593
        %2612 = vmatprep.subr.bf16.mxu0 0
        %2613 = vmatpush1.bf16.msra.mxu0 %v2594
        %2614 = vmatprep.subr.bf16.mxu0 0
        %2615 = vmatpush1.bf16.msra.mxu0 %v2595
        %2616 = vmatprep.subr.bf16.mxu0 0
        %2617 = vmatpush1.bf16.msra.mxu0 %v2596
        %2618 = vmatprep.subr.bf16.mxu0 0
        %2619 = vmatpush1.bf16.msra.mxu0 %v2597
        %2620 = vmatprep.subr.bf16.mxu0 0
        %2621 = vmatpush1.bf16.msra.mxu0 %v2598
        %2622 = vmatprep.subr.bf16.mxu0 0
        %2623 = vmatpush1.bf16.msra.mxu0 %v2599
        %2624 = vmatprep.subr.bf16.mxu0 0
        %2625 = vmatpush1.bf16.msra.mxu0 0
        %2626 = vmatprep.subr.bf16.mxu0 0
        %2627 = vmatpush1.bf16.msra.mxu0 0
        %2628 = vmatprep.subr.bf16.mxu0 0
        %2629 = vmatpush1.bf16.msra.mxu0 0
        %2630 = vmatprep.subr.bf16.mxu0 0
        %2631 = vmatpush1.bf16.msra.mxu0 0
        %2632 = vmatprep.subr.bf16.mxu0 0
        %2633 = vmatpush1.bf16.msra.mxu0 0
        %2634 = vmatprep.subr.bf16.mxu0 0
        %2635 = vmatpush1.bf16.msra.mxu0 0
        %2636 = vmatprep.subr.bf16.mxu0 0
        %2637 = vmatpush1.bf16.msra.mxu0 0
        %2638 = vmatprep.subr.bf16.mxu0 0
        %2639 = vmatpush1.bf16.msra.mxu0 0
        %2640 = vmatprep.mubr.bf16.mxu0 0
        %2641 = vmatmul.mubr.bf16.gmra.mrb[0].mxu0 %v2534
        %v2642 = vpop.f32.mrb[0].mxu0
        %v2643 = vadd.f32 %v2558, %v2642
        %v2644 = vpop.f32.mrb[0].mxu0
        %v2645 = vpop.f32.mrb[0].mxu0
        %v2646 = vadd.f32 %v2558, %v2645
        %v2647 = vpop.f32.mrb[0].mxu0
        %2648 = vmatprep.mubr.bf16.mxu0 0
        %2649 = vmatmul.mubr.bf16.gmra.mrb[0].mxu0 %v2535
        %v2650 = vpop.f32.mrb[0].mxu0
        %v2651 = vadd.f32 %v2558, %v2650
        %v2652 = vpop.f32.mrb[0].mxu0
        %v2653 = vpop.f32.mrb[0].mxu0
        %v2654 = vadd.f32 %v2558, %v2653
        %v2655 = vpop.f32.mrb[0].mxu0
        %2656 = vmatprep.mubr.bf16.mxu0 0
        %2657 = vmatmul.mubr.bf16.gmra.mrb[0].mxu0 %v2536
        %v2658 = vpop.f32.mrb[0].mxu0
        %v2659 = vadd.f32 %v2558, %v2658
        %v2660 = vpop.f32.mrb[0].mxu0
        %v2661 = vpop.f32.mrb[0].mxu0
        %v2662 = vadd.f32 %v2558, %v2661
        %v2663 = vpop.f32.mrb[0].mxu0
        %2664 = vdwg.mxu0
        %v2665 = vadd.f32 %v800, %v2643
        %v2666 = vadd.f32 %v801, %v2646
        %v2667 = vadd.f32 %v802, %v2651
        %v2668 = vadd.f32 %v803, %v2654
        %v2669 = vadd.f32 %v804, %v2659
        %v2670 = vadd.f32 %v805, %v2662
        %2671 = vadd.xlane.f32.xlu0 %v2665
        %v2672 = vpop.xlane.xlu0 %2671
        %2673 = vadd.xlane.f32.xlu0 %v2666
        %v2674 = vpop.xlane.xlu0 %2673
        %2675 = vadd.xlane.f32.xlu0 %v2667
        %v2676 = vpop.xlane.xlu0 %2675
        %2677 = vadd.xlane.f32.xlu0 %v2668
        %v2678 = vpop.xlane.xlu0 %2677
        %2679 = vadd.xlane.f32.xlu0 %v2669
        %v2680 = vpop.xlane.xlu0 %2679
        %2681 = vadd.xlane.f32.xlu0 %v2670
        %v2682 = vpop.xlane.xlu0 %2681
        %v2683 = vrcp.pop 128.0
        %v2684 = vmul.f32 %v2672, %v2683
        %v2685 = vmul.f32 %v2674, %v2683
        %v2686 = vmul.f32 %v2676, %v2683
        %v2687 = vmul.f32 %v2678, %v2683
        %v2688 = vmul.f32 %v2680, %v2683
        %v2689 = vmul.f32 %v2682, %v2683
        %v2690 = vsub.f32 %v2665, %v2684
        %v2691 = vsub.f32 %v2666, %v2685
        %v2692 = vsub.f32 %v2667, %v2686
        %v2693 = vsub.f32 %v2668, %v2687
        %v2694 = vsub.f32 %v2669, %v2688
        %v2695 = vsub.f32 %v2670, %v2689
        %v2696 = vmul.f32 %v2690, %v2690
        %v2697 = vmul.f32 %v2691, %v2691
        %v2698 = vmul.f32 %v2692, %v2692
        %v2699 = vmul.f32 %v2693, %v2693
        %v2700 = vmul.f32 %v2694, %v2694
        %v2701 = vmul.f32 %v2695, %v2695
        %2702 = vadd.xlane.f32.xlu0 %v2696
        %v2703 = vpop.xlane.xlu0 %2702
        %2704 = vadd.xlane.f32.xlu0 %v2697
        %v2705 = vpop.xlane.xlu0 %2704
        %2706 = vadd.xlane.f32.xlu0 %v2698
        %v2707 = vpop.xlane.xlu0 %2706
        %2708 = vadd.xlane.f32.xlu0 %v2699
        %v2709 = vpop.xlane.xlu0 %2708
        %2710 = vadd.xlane.f32.xlu0 %v2700
        %v2711 = vpop.xlane.xlu0 %2710
        %2712 = vadd.xlane.f32.xlu0 %v2701
        %v2713 = vpop.xlane.xlu0 %2712
        %v2714 = vmul.f32 %v2703, %v2683
        %v2715 = vmul.f32 %v2705, %v2683
        %v2716 = vmul.f32 %v2707, %v2683
        %v2717 = vmul.f32 %v2709, %v2683
        %v2718 = vmul.f32 %v2711, %v2683
        %v2719 = vmul.f32 %v2713, %v2683
        %v2720 = vadd.f32 %v2714, 1e-05
        %v2721 = vadd.f32 %v2715, 1e-05
        %v2722 = vadd.f32 %v2716, 1e-05
        %v2723 = vadd.f32 %v2717, 1e-05
        %v2724 = vadd.f32 %v2718, 1e-05
        %v2725 = vadd.f32 %v2719, 1e-05
        %v2726 = vrsqrt.pop %v2720
        %v2727 = vrsqrt.pop %v2721
        %v2728 = vrsqrt.pop %v2722
        %v2729 = vrsqrt.pop %v2723
        %v2730 = vrsqrt.pop %v2724
        %v2731 = vrsqrt.pop %v2725
        %v2732 = vmul.f32 %v2690, %v2726
        %v2733 = vmul.f32 %v2691, %v2727
        %v2734 = vmul.f32 %v2692, %v2728
        %v2735 = vmul.f32 %v2693, %v2729
        %v2736 = vmul.f32 %v2694, %v2730
        %v2737 = vmul.f32 %v2695, %v2731
        %v2738 = vld [vmem:[%s668] sm:$0x1]
        %v2740 = vlaneseq
        %v2741 = vshrl.u32 %v2740, 7
        %v2742 = vsub.s32 0, %v2741
        %v2743 = vrot.slane %v2738, %v2742
        %v2745 = vmul.f32 %v2732, %v2743
        %v2746 = vmul.f32 %v2733, %v2743
        %v2747 = vmul.f32 %v2734, %v2743
        %v2748 = vmul.f32 %v2735, %v2743
        %v2749 = vmul.f32 %v2736, %v2743
        %v2750 = vmul.f32 %v2737, %v2743
        %v2751 = vld [vmem:[%s671] sm:$0x1]
        %v2753 = vlaneseq
        %v2754 = vshrl.u32 %v2753, 7
        %v2755 = vsub.s32 0, %v2754
        %v2756 = vrot.slane %v2751, %v2755
        %v2758 = vadd.f32 %v2745, %v2756
        %v2759 = vadd.f32 %v2746, %v2756
        %v2760 = vadd.f32 %v2747, %v2756
        %v2761 = vadd.f32 %v2748, %v2756
        %v2762 = vadd.f32 %v2749, %v2756
        %v2763 = vadd.f32 %v2750, %v2756
        %v2764 = vpack.c.bf16 %v2759, %v2758
        %v2765 = vpack.c.bf16 %v2761, %v2760
        %v2766 = vpack.c.bf16 %v2763, %v2762
        %v2767 = vld [vmem:[%s658] sm:$0xff]
        %v2768 = vld [vmem:[%s658 + $0x8] sm:$0xff]
        %v2769 = vld [vmem:[%s658 + $0x10] sm:$0xff]
        %v2770 = vld [vmem:[%s658 + $0x18] sm:$0xff]
        %v2771 = vld [vmem:[%s658 + $0x20] sm:$0xff]
        %v2772 = vld [vmem:[%s658 + $0x28] sm:$0xff]
        %v2773 = vld [vmem:[%s658 + $0x30] sm:$0xff]
        %v2774 = vld [vmem:[%s658 + $0x38] sm:$0xff]
        %v2775 = vld [vmem:[%s658 + $0x40] sm:$0xff]
        %v2776 = vld [vmem:[%s658 + $0x48] sm:$0xff]
        %v2777 = vld [vmem:[%s658 + $0x50] sm:$0xff]
        %v2778 = vld [vmem:[%s658 + $0x58] sm:$0xff]
        %v2779 = vld [vmem:[%s658 + $0x60] sm:$0xff]
        %v2780 = vld [vmem:[%s658 + $0x68] sm:$0xff]
        %v2781 = vld [vmem:[%s658 + $0x70] sm:$0xff]
        %v2782 = vld [vmem:[%s658 + $0x78] sm:$0xff]
        %v2783 = vld [vmem:[%s658 + $0x80] sm:$0xff]
        %v2784 = vld [vmem:[%s658 + $0x88] sm:$0xff]
        %v2785 = vld [vmem:[%s658 + $0x90] sm:$0xff]
        %v2786 = vld [vmem:[%s658 + $0x98] sm:$0xff]
        %v2787 = vld [vmem:[%s658 + $0xa0] sm:$0xff]
        %v2788 = vld [vmem:[%s658 + $0xa8] sm:$0xff]
        %v2789 = vld [vmem:[%s658 + $0xb0] sm:$0xff]
        %v2790 = vld [vmem:[%s658 + $0xb8] sm:$0xff]
        %v2791 = vld [vmem:[%s658 + $0xc0] sm:$0xff]
        %v2792 = vld [vmem:[%s658 + $0xc8] sm:$0xff]
        %v2793 = vld [vmem:[%s658 + $0xd0] sm:$0xff]
        %v2794 = vld [vmem:[%s658 + $0xd8] sm:$0xff]
        %v2795 = vld [vmem:[%s658 + $0xe0] sm:$0xff]
        %v2796 = vld [vmem:[%s658 + $0xe8] sm:$0xff]
        %v2797 = vld [vmem:[%s658 + $0xf0] sm:$0xff]
        %v2798 = vld [vmem:[%s658 + $0xf8] sm:$0xff]
        %v2799 = vld [vmem:[%s658 + $0x100] sm:$0xff]
        %v2800 = vld [vmem:[%s658 + $0x108] sm:$0xff]
        %v2801 = vld [vmem:[%s658 + $0x110] sm:$0xff]
        %v2802 = vld [vmem:[%s658 + $0x118] sm:$0xff]
        %v2803 = vld [vmem:[%s658 + $0x120] sm:$0xff]
        %v2804 = vld [vmem:[%s658 + $0x128] sm:$0xff]
        %v2805 = vld [vmem:[%s658 + $0x130] sm:$0xff]
        %v2806 = vld [vmem:[%s658 + $0x138] sm:$0xff]
        %v2807 = vld [vmem:[%s658 + $0x140] sm:$0xff]
        %v2808 = vld [vmem:[%s658 + $0x148] sm:$0xff]
        %v2809 = vld [vmem:[%s658 + $0x150] sm:$0xff]
        %v2810 = vld [vmem:[%s658 + $0x158] sm:$0xff]
        %v2811 = vld [vmem:[%s658 + $0x160] sm:$0xff]
        %v2812 = vld [vmem:[%s658 + $0x168] sm:$0xff]
        %v2813 = vld [vmem:[%s658 + $0x170] sm:$0xff]
        %v2814 = vld [vmem:[%s658 + $0x178] sm:$0xff]
        %v2815 = vld [vmem:[%s658 + $0x180] sm:$0xff]
        %v2816 = vld [vmem:[%s658 + $0x188] sm:$0xff]
        %v2817 = vld [vmem:[%s658 + $0x190] sm:$0xff]
        %v2818 = vld [vmem:[%s658 + $0x198] sm:$0xff]
        %v2819 = vld [vmem:[%s658 + $0x1a0] sm:$0xff]
        %v2820 = vld [vmem:[%s658 + $0x1a8] sm:$0xff]
        %v2821 = vld [vmem:[%s658 + $0x1b0] sm:$0xff]
        %v2822 = vld [vmem:[%s658 + $0x1b8] sm:$0xff]
        %v2823 = vld [vmem:[%s658 + $0x1c0] sm:$0xff]
        %v2824 = vld [vmem:[%s658 + $0x1c8] sm:$0xff]
        %v2825 = vld [vmem:[%s658 + $0x1d0] sm:$0xff]
        %v2826 = vld [vmem:[%s658 + $0x1d8] sm:$0xff]
        %v2827 = vld [vmem:[%s658 + $0x1e0] sm:$0xff]
        %v2828 = vld [vmem:[%s658 + $0x1e8] sm:$0xff]
        %v2829 = vld [vmem:[%s658 + $0x1f0] sm:$0xff]
        %v2830 = vld [vmem:[%s658 + $0x1f8] sm:$0xff]
        %v2831 = vld [vmem:[%s662] sm:$0xff]
        %v2833 = vlaneseq
        %v2834 = vshrl.u32 %v2833, 7
        %v2835 = vsub.s32 0, %v2834
        %v2836 = vrot.slane %v2831, %v2835
        %v2837 = vlaneseq
        %v2838 = vshrl.u32 %v2837, 7
        %v2839 = vsub.s32 1, %v2838
        %v2840 = vrot.slane %v2831, %v2839
        %v2841 = vlaneseq
        %v2842 = vshrl.u32 %v2841, 7
        %v2843 = vsub.s32 2, %v2842
        %v2844 = vrot.slane %v2831, %v2843
        %v2845 = vlaneseq
        %v2846 = vshrl.u32 %v2845, 7
        %v2847 = vsub.s32 3, %v2846
        %v2848 = vrot.slane %v2831, %v2847
        %v2849 = vlaneseq
        %v2850 = vshrl.u32 %v2849, 7
        %v2851 = vsub.s32 4, %v2850
        %v2852 = vrot.slane %v2831, %v2851
        %v2853 = vlaneseq
        %v2854 = vshrl.u32 %v2853, 7
        %v2855 = vsub.s32 5, %v2854
        %v2856 = vrot.slane %v2831, %v2855
        %v2857 = vlaneseq
        %v2858 = vshrl.u32 %v2857, 7
        %v2859 = vsub.s32 6, %v2858
        %v2860 = vrot.slane %v2831, %v2859
        %v2861 = vlaneseq
        %v2862 = vshrl.u32 %v2861, 7
        %v2863 = vsub.s32 7, %v2862
        %v2864 = vrot.slane %v2831, %v2863
        %v2937 = vunpack.c.l.b16 %v2767
        %v2938 = vunpack.c.h.b16 %v2767
        %v2939 = vunpack.c.l.b16 %v2768
        %v2940 = vunpack.c.h.b16 %v2768
        %v2941 = vunpack.c.l.b16 %v2769
        %v2942 = vunpack.c.h.b16 %v2769
        %v2943 = vunpack.c.l.b16 %v2770
        %v2944 = vunpack.c.h.b16 %v2770
        %v2945 = vunpack.c.l.b16 %v2771
        %v2946 = vunpack.c.h.b16 %v2771
        %v2947 = vunpack.c.l.b16 %v2772
        %v2948 = vunpack.c.h.b16 %v2772
        %v2949 = vunpack.c.l.b16 %v2773
        %v2950 = vunpack.c.h.b16 %v2773
        %v2951 = vunpack.c.l.b16 %v2774
        %v2952 = vunpack.c.h.b16 %v2774
        %v2953 = vunpack.c.l.b16 %v2775
        %v2954 = vunpack.c.h.b16 %v2775
        %v2955 = vunpack.c.l.b16 %v2776
        %v2956 = vunpack.c.h.b16 %v2776
        %v2957 = vunpack.c.l.b16 %v2777
        %v2958 = vunpack.c.h.b16 %v2777
        %v2959 = vunpack.c.l.b16 %v2778
        %v2960 = vunpack.c.h.b16 %v2778
        %v2961 = vunpack.c.l.b16 %v2779
        %v2962 = vunpack.c.h.b16 %v2779
        %v2963 = vunpack.c.l.b16 %v2780
        %v2964 = vunpack.c.h.b16 %v2780
        %v2965 = vunpack.c.l.b16 %v2781
        %v2966 = vunpack.c.h.b16 %v2781
        %v2967 = vunpack.c.l.b16 %v2782
        %v2968 = vunpack.c.h.b16 %v2782
        %v2969 = vunpack.c.l.b16 %v2783
        %v2970 = vunpack.c.h.b16 %v2783
        %v2971 = vunpack.c.l.b16 %v2784
        %v2972 = vunpack.c.h.b16 %v2784
        %v2973 = vunpack.c.l.b16 %v2785
        %v2974 = vunpack.c.h.b16 %v2785
        %v2975 = vunpack.c.l.b16 %v2786
        %v2976 = vunpack.c.h.b16 %v2786
        %v2977 = vunpack.c.l.b16 %v2787
        %v2978 = vunpack.c.h.b16 %v2787
        %v2979 = vunpack.c.l.b16 %v2788
        %v2980 = vunpack.c.h.b16 %v2788
        %v2981 = vunpack.c.l.b16 %v2789
        %v2982 = vunpack.c.h.b16 %v2789
        %v2983 = vunpack.c.l.b16 %v2790
        %v2984 = vunpack.c.h.b16 %v2790
        %v2985 = vunpack.c.l.b16 %v2791
        %v2986 = vunpack.c.h.b16 %v2791
        %v2987 = vunpack.c.l.b16 %v2792
        %v2988 = vunpack.c.h.b16 %v2792
        %v2989 = vunpack.c.l.b16 %v2793
        %v2990 = vunpack.c.h.b16 %v2793
        %v2991 = vunpack.c.l.b16 %v2794
        %v2992 = vunpack.c.h.b16 %v2794
        %v2993 = vunpack.c.l.b16 %v2795
        %v2994 = vunpack.c.h.b16 %v2795
        %v2995 = vunpack.c.l.b16 %v2796
        %v2996 = vunpack.c.h.b16 %v2796
        %v2997 = vunpack.c.l.b16 %v2797
        %v2998 = vunpack.c.h.b16 %v2797
        %v2999 = vunpack.c.l.b16 %v2798
        %v3000 = vunpack.c.h.b16 %v2798
        %v3001 = vunpack.c.l.b16 %v2799
        %v3002 = vunpack.c.h.b16 %v2799
        %v3003 = vunpack.c.l.b16 %v2800
        %v3004 = vunpack.c.h.b16 %v2800
        %v3005 = vunpack.c.l.b16 %v2801
        %v3006 = vunpack.c.h.b16 %v2801
        %v3007 = vunpack.c.l.b16 %v2802
        %v3008 = vunpack.c.h.b16 %v2802
        %v3009 = vunpack.c.l.b16 %v2803
        %v3010 = vunpack.c.h.b16 %v2803
        %v3011 = vunpack.c.l.b16 %v2804
        %v3012 = vunpack.c.h.b16 %v2804
        %v3013 = vunpack.c.l.b16 %v2805
        %v3014 = vunpack.c.h.b16 %v2805
        %v3015 = vunpack.c.l.b16 %v2806
        %v3016 = vunpack.c.h.b16 %v2806
        %v3017 = vunpack.c.l.b16 %v2807
        %v3018 = vunpack.c.h.b16 %v2807
        %v3019 = vunpack.c.l.b16 %v2808
        %v3020 = vunpack.c.h.b16 %v2808
        %v3021 = vunpack.c.l.b16 %v2809
        %v3022 = vunpack.c.h.b16 %v2809
        %v3023 = vunpack.c.l.b16 %v2810
        %v3024 = vunpack.c.h.b16 %v2810
        %v3025 = vunpack.c.l.b16 %v2811
        %v3026 = vunpack.c.h.b16 %v2811
        %v3027 = vunpack.c.l.b16 %v2812
        %v3028 = vunpack.c.h.b16 %v2812
        %v3029 = vunpack.c.l.b16 %v2813
        %v3030 = vunpack.c.h.b16 %v2813
        %v3031 = vunpack.c.l.b16 %v2814
        %v3032 = vunpack.c.h.b16 %v2814
        %v3033 = vunpack.c.l.b16 %v2815
        %v3034 = vunpack.c.h.b16 %v2815
        %v3035 = vunpack.c.l.b16 %v2816
        %v3036 = vunpack.c.h.b16 %v2816
        %v3037 = vunpack.c.l.b16 %v2817
        %v3038 = vunpack.c.h.b16 %v2817
        %v3039 = vunpack.c.l.b16 %v2818
        %v3040 = vunpack.c.h.b16 %v2818
        %v3041 = vunpack.c.l.b16 %v2819
        %v3042 = vunpack.c.h.b16 %v2819
        %v3043 = vunpack.c.l.b16 %v2820
        %v3044 = vunpack.c.h.b16 %v2820
        %v3045 = vunpack.c.l.b16 %v2821
        %v3046 = vunpack.c.h.b16 %v2821
        %v3047 = vunpack.c.l.b16 %v2822
        %v3048 = vunpack.c.h.b16 %v2822
        %v3049 = vunpack.c.l.b16 %v2823
        %v3050 = vunpack.c.h.b16 %v2823
        %v3051 = vunpack.c.l.b16 %v2824
        %v3052 = vunpack.c.h.b16 %v2824
        %v3053 = vunpack.c.l.b16 %v2825
        %v3054 = vunpack.c.h.b16 %v2825
        %v3055 = vunpack.c.l.b16 %v2826
        %v3056 = vunpack.c.h.b16 %v2826
        %v3057 = vunpack.c.l.b16 %v2827
        %v3058 = vunpack.c.h.b16 %v2827
        %v3059 = vunpack.c.l.b16 %v2828
        %v3060 = vunpack.c.h.b16 %v2828
        %v3061 = vunpack.c.l.b16 %v2829
        %v3062 = vunpack.c.h.b16 %v2829
        %v3063 = vunpack.c.l.b16 %v2830
        %v3064 = vunpack.c.h.b16 %v2830
        %v3065 = vpack.c.b16 %v2945, %v2937
        %v3066 = vpack.c.b16 %v2946, %v2938
        %v3067 = vpack.c.b16 %v2947, %v2939
        %v3068 = vpack.c.b16 %v2948, %v2940
        %v3069 = vpack.c.b16 %v2949, %v2941
        %v3070 = vpack.c.b16 %v2950, %v2942
        %v3071 = vpack.c.b16 %v2951, %v2943
        %v3072 = vpack.c.b16 %v2952, %v2944
        %v3073 = vpack.c.b16 %v2961, %v2953
        %v3074 = vpack.c.b16 %v2962, %v2954
        %v3075 = vpack.c.b16 %v2963, %v2955
        %v3076 = vpack.c.b16 %v2964, %v2956
        %v3077 = vpack.c.b16 %v2965, %v2957
        %v3078 = vpack.c.b16 %v2966, %v2958
        %v3079 = vpack.c.b16 %v2967, %v2959
        %v3080 = vpack.c.b16 %v2968, %v2960
        %v3081 = vpack.c.b16 %v2977, %v2969
        %v3082 = vpack.c.b16 %v2978, %v2970
        %v3083 = vpack.c.b16 %v2979, %v2971
        %v3084 = vpack.c.b16 %v2980, %v2972
        %v3085 = vpack.c.b16 %v2981, %v2973
        %v3086 = vpack.c.b16 %v2982, %v2974
        %v3087 = vpack.c.b16 %v2983, %v2975
        %v3088 = vpack.c.b16 %v2984, %v2976
        %v3089 = vpack.c.b16 %v2993, %v2985
        %v3090 = vpack.c.b16 %v2994, %v2986
        %v3091 = vpack.c.b16 %v2995, %v2987
        %v3092 = vpack.c.b16 %v2996, %v2988
        %v3093 = vpack.c.b16 %v2997, %v2989
        %v3094 = vpack.c.b16 %v2998, %v2990
        %v3095 = vpack.c.b16 %v2999, %v2991
        %v3096 = vpack.c.b16 %v3000, %v2992
        %v3097 = vpack.c.b16 %v3009, %v3001
        %v3098 = vpack.c.b16 %v3010, %v3002
        %v3099 = vpack.c.b16 %v3011, %v3003
        %v3100 = vpack.c.b16 %v3012, %v3004
        %v3101 = vpack.c.b16 %v3013, %v3005
        %v3102 = vpack.c.b16 %v3014, %v3006
        %v3103 = vpack.c.b16 %v3015, %v3007
        %v3104 = vpack.c.b16 %v3016, %v3008
        %v3105 = vpack.c.b16 %v3025, %v3017
        %v3106 = vpack.c.b16 %v3026, %v3018
        %v3107 = vpack.c.b16 %v3027, %v3019
        %v3108 = vpack.c.b16 %v3028, %v3020
        %v3109 = vpack.c.b16 %v3029, %v3021
        %v3110 = vpack.c.b16 %v3030, %v3022
        %v3111 = vpack.c.b16 %v3031, %v3023
        %v3112 = vpack.c.b16 %v3032, %v3024
        %v3113 = vpack.c.b16 %v3041, %v3033
        %v3114 = vpack.c.b16 %v3042, %v3034
        %v3115 = vpack.c.b16 %v3043, %v3035
        %v3116 = vpack.c.b16 %v3044, %v3036
        %v3117 = vpack.c.b16 %v3045, %v3037
        %v3118 = vpack.c.b16 %v3046, %v3038
        %v3119 = vpack.c.b16 %v3047, %v3039
        %v3120 = vpack.c.b16 %v3048, %v3040
        %v3121 = vpack.c.b16 %v3057, %v3049
        %v3122 = vpack.c.b16 %v3058, %v3050
        %v3123 = vpack.c.b16 %v3059, %v3051
        %v3124 = vpack.c.b16 %v3060, %v3052
        %v3125 = vpack.c.b16 %v3061, %v3053
        %v3126 = vpack.c.b16 %v3062, %v3054
        %v3127 = vpack.c.b16 %v3063, %v3055
        %v3128 = vpack.c.b16 %v3064, %v3056
        %3193 = vmatprep.subr.bf16.mxu0 %v3066
        %3194 = vmatpush1.bf16.msra.mxu0 %v3065
        %3195 = vmatprep.subr.bf16.mxu0 %v3074
        %3196 = vmatpush1.bf16.msra.mxu0 %v3073
        %3197 = vmatprep.subr.bf16.mxu0 %v3082
        %3198 = vmatpush1.bf16.msra.mxu0 %v3081
        %3199 = vmatprep.subr.bf16.mxu0 %v3090
        %3200 = vmatpush1.bf16.msra.mxu0 %v3089
        %3201 = vmatprep.subr.bf16.mxu0 %v3098
        %3202 = vmatpush1.bf16.msra.mxu0 %v3097
        %3203 = vmatprep.subr.bf16.mxu0 %v3106
        %3204 = vmatpush1.bf16.msra.mxu0 %v3105
        %3205 = vmatprep.subr.bf16.mxu0 %v3114
        %3206 = vmatpush1.bf16.msra.mxu0 %v3113
        %3207 = vmatprep.subr.bf16.mxu0 %v3122
        %3208 = vmatpush1.bf16.msra.mxu0 %v3121
        %3209 = vmatprep.subr.bf16.mxu0 0
        %3210 = vmatpush1.bf16.msra.mxu0 0
        %3211 = vmatprep.subr.bf16.mxu0 0
        %3212 = vmatpush1.bf16.msra.mxu0 0
        %3213 = vmatprep.subr.bf16.mxu0 0
        %3214 = vmatpush1.bf16.msra.mxu0 0
        %3215 = vmatprep.subr.bf16.mxu0 0
        %3216 = vmatpush1.bf16.msra.mxu0 0
        %3217 = vmatprep.subr.bf16.mxu0 0
        %3218 = vmatpush1.bf16.msra.mxu0 0
        %3219 = vmatprep.subr.bf16.mxu0 0
        %3220 = vmatpush1.bf16.msra.mxu0 0
        %3221 = vmatprep.subr.bf16.mxu0 0
        %3222 = vmatpush1.bf16.msra.mxu0 0
        %3223 = vmatprep.subr.bf16.mxu0 0
        %3224 = vmatpush1.bf16.msra.mxu0 0
        %3225 = vmatprep.mubr.bf16.mxu0 0
        %3226 = vmatmul.mubr.bf16.gmra.mrb[0].mxu0 %v2764
        %v3227 = vpop.f32.mrb[0].mxu0
        %v3228 = vadd.f32 %v2836, %v3227
        %v3229 = vpop.f32.mrb[0].mxu0
        %v3230 = vadd.f32 %v2840, %v3229
        %v3231 = vpop.f32.mrb[0].mxu0
        %v3232 = vadd.f32 %v2836, %v3231
        %v3233 = vpop.f32.mrb[0].mxu0
        %v3234 = vadd.f32 %v2840, %v3233
        %3235 = vmatprep.mubr.bf16.mxu0 0
        %3236 = vmatmul.mubr.bf16.gmra.mrb[0].mxu0 %v2765
        %v3237 = vpop.f32.mrb[0].mxu0
        %v3238 = vadd.f32 %v2836, %v3237
        %v3239 = vpop.f32.mrb[0].mxu0
        %v3240 = vadd.f32 %v2840, %v3239
        %v3241 = vpop.f32.mrb[0].mxu0
        %v3242 = vadd.f32 %v2836, %v3241
        %v3243 = vpop.f32.mrb[0].mxu0
        %v3244 = vadd.f32 %v2840, %v3243
        %3245 = vmatprep.mubr.bf16.mxu0 0
        %3246 = vmatmul.mubr.bf16.gmra.mrb[0].mxu0 %v2766
        %v3247 = vpop.f32.mrb[0].mxu0
        %v3248 = vadd.f32 %v2836, %v3247
        %v3249 = vpop.f32.mrb[0].mxu0
        %v3250 = vadd.f32 %v2840, %v3249
        %v3251 = vpop.f32.mrb[0].mxu0
        %v3252 = vadd.f32 %v2836, %v3251
        %v3253 = vpop.f32.mrb[0].mxu0
        %v3254 = vadd.f32 %v2840, %v3253
        %3255 = vdwg.mxu0
        %3256 = vmatprep.subr.bf16.mxu0 %v3068
        %3257 = vmatpush1.bf16.msra.mxu0 %v3067
        %3258 = vmatprep.subr.bf16.mxu0 %v3076
        %3259 = vmatpush1.bf16.msra.mxu0 %v3075
        %3260 = vmatprep.subr.bf16.mxu0 %v3084
        %3261 = vmatpush1.bf16.msra.mxu0 %v3083
        %3262 = vmatprep.subr.bf16.mxu0 %v3092
        %3263 = vmatpush1.bf16.msra.mxu0 %v3091
        %3264 = vmatprep.subr.bf16.mxu0 %v3100
        %3265 = vmatpush1.bf16.msra.mxu0 %v3099
        %3266 = vmatprep.subr.bf16.mxu0 %v3108
        %3267 = vmatpush1.bf16.msra.mxu0 %v3107
        %3268 = vmatprep.subr.bf16.mxu0 %v3116
        %3269 = vmatpush1.bf16.msra.mxu0 %v3115
        %3270 = vmatprep.subr.bf16.mxu0 %v3124
        %3271 = vmatpush1.bf16.msra.mxu0 %v3123
        %3272 = vmatprep.subr.bf16.mxu0 0
        %3273 = vmatpush1.bf16.msra.mxu0 0
        %3274 = vmatprep.subr.bf16.mxu0 0
        %3275 = vmatpush1.bf16.msra.mxu0 0
        %3276 = vmatprep.subr.bf16.mxu0 0
        %3277 = vmatpush1.bf16.msra.mxu0 0
        %3278 = vmatprep.subr.bf16.mxu0 0
        %3279 = vmatpush1.bf16.msra.mxu0 0
        %3280 = vmatprep.subr.bf16.mxu0 0
        %3281 = vmatpush1.bf16.msra.mxu0 0
        %3282 = vmatprep.subr.bf16.mxu0 0
        %3283 = vmatpush1.bf16.msra.mxu0 0
        %3284 = vmatprep.subr.bf16.mxu0 0
        %3285 = vmatpush1.bf16.msra.mxu0 0
        %3286 = vmatprep.subr.bf16.mxu0 0
        %3287 = vmatpush1.bf16.msra.mxu0 0
        %3288 = vmatprep.mubr.bf16.mxu0 0
        %3289 = vmatmul.mubr.bf16.gmra.mrb[0].mxu0 %v2764
        %v3290 = vpop.f32.mrb[0].mxu0
        %v3291 = vadd.f32 %v2844, %v3290
        %v3292 = vpop.f32.mrb[0].mxu0
        %v3293 = vadd.f32 %v2848, %v3292
        %v3294 = vpop.f32.mrb[0].mxu0
        %v3295 = vadd.f32 %v2844, %v3294
        %v3296 = vpop.f32.mrb[0].mxu0
        %v3297 = vadd.f32 %v2848, %v3296
        %3298 = vmatprep.mubr.bf16.mxu0 0
        %3299 = vmatmul.mubr.bf16.gmra.mrb[0].mxu0 %v2765
        %v3300 = vpop.f32.mrb[0].mxu0
        %v3301 = vadd.f32 %v2844, %v3300
        %v3302 = vpop.f32.mrb[0].mxu0
        %v3303 = vadd.f32 %v2848, %v3302
        %v3304 = vpop.f32.mrb[0].mxu0
        %v3305 = vadd.f32 %v2844, %v3304
        %v3306 = vpop.f32.mrb[0].mxu0
        %v3307 = vadd.f32 %v2848, %v3306
        %3308 = vmatprep.mubr.bf16.mxu0 0
        %3309 = vmatmul.mubr.bf16.gmra.mrb[0].mxu0 %v2766
        %v3310 = vpop.f32.mrb[0].mxu0
        %v3311 = vadd.f32 %v2844, %v3310
        %v3312 = vpop.f32.mrb[0].mxu0
        %v3313 = vadd.f32 %v2848, %v3312
        %v3314 = vpop.f32.mrb[0].mxu0
        %v3315 = vadd.f32 %v2844, %v3314
        %v3316 = vpop.f32.mrb[0].mxu0
        %v3317 = vadd.f32 %v2848, %v3316
        %3318 = vdwg.mxu0
        %3319 = vmatprep.subr.bf16.mxu0 %v3070
        %3320 = vmatpush1.bf16.msra.mxu0 %v3069
        %3321 = vmatprep.subr.bf16.mxu0 %v3078
        %3322 = vmatpush1.bf16.msra.mxu0 %v3077
        %3323 = vmatprep.subr.bf16.mxu0 %v3086
        %3324 = vmatpush1.bf16.msra.mxu0 %v3085
        %3325 = vmatprep.subr.bf16.mxu0 %v3094
        %3326 = vmatpush1.bf16.msra.mxu0 %v3093
        %3327 = vmatprep.subr.bf16.mxu0 %v3102
        %3328 = vmatpush1.bf16.msra.mxu0 %v3101
        %3329 = vmatprep.subr.bf16.mxu0 %v3110
        %3330 = vmatpush1.bf16.msra.mxu0 %v3109
        %3331 = vmatprep.subr.bf16.mxu0 %v3118
        %3332 = vmatpush1.bf16.msra.mxu0 %v3117
        %3333 = vmatprep.subr.bf16.mxu0 %v3126
        %3334 = vmatpush1.bf16.msra.mxu0 %v3125
        %3335 = vmatprep.subr.bf16.mxu0 0
        %3336 = vmatpush1.bf16.msra.mxu0 0
        %3337 = vmatprep.subr.bf16.mxu0 0
        %3338 = vmatpush1.bf16.msra.mxu0 0
        %3339 = vmatprep.subr.bf16.mxu0 0
        %3340 = vmatpush1.bf16.msra.mxu0 0
        %3341 = vmatprep.subr.bf16.mxu0 0
        %3342 = vmatpush1.bf16.msra.mxu0 0
        %3343 = vmatprep.subr.bf16.mxu0 0
        %3344 = vmatpush1.bf16.msra.mxu0 0
        %3345 = vmatprep.subr.bf16.mxu0 0
        %3346 = vmatpush1.bf16.msra.mxu0 0
        %3347 = vmatprep.subr.bf16.mxu0 0
        %3348 = vmatpush1.bf16.msra.mxu0 0
        %3349 = vmatprep.subr.bf16.mxu0 0
        %3350 = vmatpush1.bf16.msra.mxu0 0
        %3351 = vmatprep.mubr.bf16.mxu0 0
        %3352 = vmatmul.mubr.bf16.gmra.mrb[0].mxu0 %v2764
        %v3353 = vpop.f32.mrb[0].mxu0
        %v3354 = vadd.f32 %v2852, %v3353
        %v3355 = vpop.f32.mrb[0].mxu0
        %v3356 = vadd.f32 %v2856, %v3355
        %v3357 = vpop.f32.mrb[0].mxu0
        %v3358 = vadd.f32 %v2852, %v3357
        %v3359 = vpop.f32.mrb[0].mxu0
        %v3360 = vadd.f32 %v2856, %v3359
        %3361 = vmatprep.mubr.bf16.mxu0 0
        %3362 = vmatmul.mubr.bf16.gmra.mrb[0].mxu0 %v2765
        %v3363 = vpop.f32.mrb[0].mxu0
        %v3364 = vadd.f32 %v2852, %v3363
        %v3365 = vpop.f32.mrb[0].mxu0
        %v3366 = vadd.f32 %v2856, %v3365
        %v3367 = vpop.f32.mrb[0].mxu0
        %v3368 = vadd.f32 %v2852, %v3367
        %v3369 = vpop.f32.mrb[0].mxu0
        %v3370 = vadd.f32 %v2856, %v3369
        %3371 = vmatprep.mubr.bf16.mxu0 0
        %3372 = vmatmul.mubr.bf16.gmra.mrb[0].mxu0 %v2766
        %v3373 = vpop.f32.mrb[0].mxu0
        %v3374 = vadd.f32 %v2852, %v3373
        %v3375 = vpop.f32.mrb[0].mxu0
        %v3376 = vadd.f32 %v2856, %v3375
        %v3377 = vpop.f32.mrb[0].mxu0
        %v3378 = vadd.f32 %v2852, %v3377
        %v3379 = vpop.f32.mrb[0].mxu0
        %v3380 = vadd.f32 %v2856, %v3379
        %3381 = vdwg.mxu0
        %3382 = vmatprep.subr.bf16.mxu0 %v3072
        %3383 = vmatpush1.bf16.msra.mxu0 %v3071
        %3384 = vmatprep.subr.bf16.mxu0 %v3080
        %3385 = vmatpush1.bf16.msra.mxu0 %v3079
        %3386 = vmatprep.subr.bf16.mxu0 %v3088
        %3387 = vmatpush1.bf16.msra.mxu0 %v3087
        %3388 = vmatprep.subr.bf16.mxu0 %v3096
        %3389 = vmatpush1.bf16.msra.mxu0 %v3095
        %3390 = vmatprep.subr.bf16.mxu0 %v3104
        %3391 = vmatpush1.bf16.msra.mxu0 %v3103
        %3392 = vmatprep.subr.bf16.mxu0 %v3112
        %3393 = vmatpush1.bf16.msra.mxu0 %v3111
        %3394 = vmatprep.subr.bf16.mxu0 %v3120
        %3395 = vmatpush1.bf16.msra.mxu0 %v3119
        %3396 = vmatprep.subr.bf16.mxu0 %v3128
        %3397 = vmatpush1.bf16.msra.mxu0 %v3127
        %3398 = vmatprep.subr.bf16.mxu0 0
        %3399 = vmatpush1.bf16.msra.mxu0 0
        %3400 = vmatprep.subr.bf16.mxu0 0
        %3401 = vmatpush1.bf16.msra.mxu0 0
        %3402 = vmatprep.subr.bf16.mxu0 0
        %3403 = vmatpush1.bf16.msra.mxu0 0
        %3404 = vmatprep.subr.bf16.mxu0 0
        %3405 = vmatpush1.bf16.msra.mxu0 0
        %3406 = vmatprep.subr.bf16.mxu0 0
        %3407 = vmatpush1.bf16.msra.mxu0 0
        %3408 = vmatprep.subr.bf16.mxu0 0
        %3409 = vmatpush1.bf16.msra.mxu0 0
        %3410 = vmatprep.subr.bf16.mxu0 0
        %3411 = vmatpush1.bf16.msra.mxu0 0
        %3412 = vmatprep.subr.bf16.mxu0 0
        %3413 = vmatpush1.bf16.msra.mxu0 0
        %3414 = vmatprep.mubr.bf16.mxu0 0
        %3415 = vmatmul.mubr.bf16.gmra.mrb[0].mxu0 %v2764
        %v3416 = vpop.f32.mrb[0].mxu0
        %v3417 = vadd.f32 %v2860, %v3416
        %v3418 = vpop.f32.mrb[0].mxu0
        %v3419 = vadd.f32 %v2864, %v3418
        %v3420 = vpop.f32.mrb[0].mxu0
        %v3421 = vadd.f32 %v2860, %v3420
        %v3422 = vpop.f32.mrb[0].mxu0
        %v3423 = vadd.f32 %v2864, %v3422
        %3424 = vmatprep.mubr.bf16.mxu0 0
        %3425 = vmatmul.mubr.bf16.gmra.mrb[0].mxu0 %v2765
        %v3426 = vpop.f32.mrb[0].mxu0
        %v3427 = vadd.f32 %v2860, %v3426
        %v3428 = vpop.f32.mrb[0].mxu0
        %v3429 = vadd.f32 %v2864, %v3428
        %v3430 = vpop.f32.mrb[0].mxu0
        %v3431 = vadd.f32 %v2860, %v3430
        %v3432 = vpop.f32.mrb[0].mxu0
        %v3433 = vadd.f32 %v2864, %v3432
        %3434 = vmatprep.mubr.bf16.mxu0 0
        %3435 = vmatmul.mubr.bf16.gmra.mrb[0].mxu0 %v2766
        %v3436 = vpop.f32.mrb[0].mxu0
        %v3437 = vadd.f32 %v2860, %v3436
        %v3438 = vpop.f32.mrb[0].mxu0
        %v3439 = vadd.f32 %v2864, %v3438
        %v3440 = vpop.f32.mrb[0].mxu0
        %v3441 = vadd.f32 %v2860, %v3440
        %v3442 = vpop.f32.mrb[0].mxu0
        %v3443 = vadd.f32 %v2864, %v3442
        %3444 = vdwg.mxu0
        %v3445 = vmax.f32 %v3228, 0.0
        %v3446 = vmax.f32 %v3230, 0.0
        %v3447 = vmax.f32 %v3291, 0.0
        %v3448 = vmax.f32 %v3293, 0.0
        %v3449 = vmax.f32 %v3354, 0.0
        %v3450 = vmax.f32 %v3356, 0.0
        %v3451 = vmax.f32 %v3417, 0.0
        %v3452 = vmax.f32 %v3419, 0.0
        %v3453 = vmax.f32 %v3232, 0.0
        %v3454 = vmax.f32 %v3234, 0.0
        %v3455 = vmax.f32 %v3295, 0.0
        %v3456 = vmax.f32 %v3297, 0.0
        %v3457 = vmax.f32 %v3358, 0.0
        %v3458 = vmax.f32 %v3360, 0.0
        %v3459 = vmax.f32 %v3421, 0.0
        %v3460 = vmax.f32 %v3423, 0.0
        %v3461 = vmax.f32 %v3238, 0.0
        %v3462 = vmax.f32 %v3240, 0.0
        %v3463 = vmax.f32 %v3301, 0.0
        %v3464 = vmax.f32 %v3303, 0.0
        %v3465 = vmax.f32 %v3364, 0.0
        %v3466 = vmax.f32 %v3366, 0.0
        %v3467 = vmax.f32 %v3427, 0.0
        %v3468 = vmax.f32 %v3429, 0.0
        %v3469 = vmax.f32 %v3242, 0.0
        %v3470 = vmax.f32 %v3244, 0.0
        %v3471 = vmax.f32 %v3305, 0.0
        %v3472 = vmax.f32 %v3307, 0.0
        %v3473 = vmax.f32 %v3368, 0.0
        %v3474 = vmax.f32 %v3370, 0.0
        %v3475 = vmax.f32 %v3431, 0.0
        %v3476 = vmax.f32 %v3433, 0.0
        %v3477 = vmax.f32 %v3248, 0.0
        %v3478 = vmax.f32 %v3250, 0.0
        %v3479 = vmax.f32 %v3311, 0.0
        %v3480 = vmax.f32 %v3313, 0.0
        %v3481 = vmax.f32 %v3374, 0.0
        %v3482 = vmax.f32 %v3376, 0.0
        %v3483 = vmax.f32 %v3437, 0.0
        %v3484 = vmax.f32 %v3439, 0.0
        %v3485 = vmax.f32 %v3252, 0.0
        %v3486 = vmax.f32 %v3254, 0.0
        %v3487 = vmax.f32 %v3315, 0.0
        %v3488 = vmax.f32 %v3317, 0.0
        %v3489 = vmax.f32 %v3378, 0.0
        %v3490 = vmax.f32 %v3380, 0.0
        %v3491 = vmax.f32 %v3441, 0.0
        %v3492 = vmax.f32 %v3443, 0.0
        %v3493 = vpack.c.bf16 %v3453, %v3445
        %v3494 = vpack.c.bf16 %v3454, %v3446
        %v3495 = vpack.c.bf16 %v3455, %v3447
        %v3496 = vpack.c.bf16 %v3456, %v3448
        %v3497 = vpack.c.bf16 %v3457, %v3449
        %v3498 = vpack.c.bf16 %v3458, %v3450
        %v3499 = vpack.c.bf16 %v3459, %v3451
        %v3500 = vpack.c.bf16 %v3460, %v3452
        %v3501 = vpack.c.bf16 %v3469, %v3461
        %v3502 = vpack.c.bf16 %v3470, %v3462
        %v3503 = vpack.c.bf16 %v3471, %v3463
        %v3504 = vpack.c.bf16 %v3472, %v3464
        %v3505 = vpack.c.bf16 %v3473, %v3465
        %v3506 = vpack.c.bf16 %v3474, %v3466
        %v3507 = vpack.c.bf16 %v3475, %v3467
        %v3508 = vpack.c.bf16 %v3476, %v3468
        %v3509 = vpack.c.bf16 %v3485, %v3477
        %v3510 = vpack.c.bf16 %v3486, %v3478
        %v3511 = vpack.c.bf16 %v3487, %v3479
        %v3512 = vpack.c.bf16 %v3488, %v3480
        %v3513 = vpack.c.bf16 %v3489, %v3481
        %v3514 = vpack.c.bf16 %v3490, %v3482
        %v3515 = vpack.c.bf16 %v3491, %v3483
        %v3516 = vpack.c.bf16 %v3492, %v3484
        %v3517 = vld [vmem:[%s554] sm:$0xf]
        %v3518 = vld [vmem:[%s554 + $0x4] sm:$0xf]
        %v3519 = vld [vmem:[%s554 + $0x8] sm:$0xf]
        %v3520 = vld [vmem:[%s554 + $0xc] sm:$0xf]
        %v3521 = vld [vmem:[%s554 + $0x10] sm:$0xf]
        %v3522 = vld [vmem:[%s554 + $0x14] sm:$0xf]
        %v3523 = vld [vmem:[%s554 + $0x18] sm:$0xf]
        %v3524 = vld [vmem:[%s554 + $0x1c] sm:$0xf]
        %v3525 = vld [vmem:[%s554 + $0x20] sm:$0xf]
        %v3526 = vld [vmem:[%s554 + $0x24] sm:$0xf]
        %v3527 = vld [vmem:[%s554 + $0x28] sm:$0xf]
        %v3528 = vld [vmem:[%s554 + $0x2c] sm:$0xf]
        %v3529 = vld [vmem:[%s554 + $0x30] sm:$0xf]
        %v3530 = vld [vmem:[%s554 + $0x34] sm:$0xf]
        %v3531 = vld [vmem:[%s554 + $0x38] sm:$0xf]
        %v3532 = vld [vmem:[%s554 + $0x3c] sm:$0xf]
        %v3533 = vld [vmem:[%s554 + $0x40] sm:$0xf]
        %v3534 = vld [vmem:[%s554 + $0x44] sm:$0xf]
        %v3535 = vld [vmem:[%s554 + $0x48] sm:$0xf]
        %v3536 = vld [vmem:[%s554 + $0x4c] sm:$0xf]
        %v3537 = vld [vmem:[%s554 + $0x50] sm:$0xf]
        %v3538 = vld [vmem:[%s554 + $0x54] sm:$0xf]
        %v3539 = vld [vmem:[%s554 + $0x58] sm:$0xf]
        %v3540 = vld [vmem:[%s554 + $0x5c] sm:$0xf]
        %v3541 = vld [vmem:[%s554 + $0x60] sm:$0xf]
        %v3542 = vld [vmem:[%s554 + $0x64] sm:$0xf]
        %v3543 = vld [vmem:[%s554 + $0x68] sm:$0xf]
        %v3544 = vld [vmem:[%s554 + $0x6c] sm:$0xf]
        %v3545 = vld [vmem:[%s554 + $0x70] sm:$0xf]
        %v3546 = vld [vmem:[%s554 + $0x74] sm:$0xf]
        %v3547 = vld [vmem:[%s554 + $0x78] sm:$0xf]
        %v3548 = vld [vmem:[%s554 + $0x7c] sm:$0xf]
        %v3549 = vld [vmem:[%s554 + $0x80] sm:$0xf]
        %v3550 = vld [vmem:[%s554 + $0x84] sm:$0xf]
        %v3551 = vld [vmem:[%s554 + $0x88] sm:$0xf]
        %v3552 = vld [vmem:[%s554 + $0x8c] sm:$0xf]
        %v3553 = vld [vmem:[%s554 + $0x90] sm:$0xf]
        %v3554 = vld [vmem:[%s554 + $0x94] sm:$0xf]
        %v3555 = vld [vmem:[%s554 + $0x98] sm:$0xf]
        %v3556 = vld [vmem:[%s554 + $0x9c] sm:$0xf]
        %v3557 = vld [vmem:[%s554 + $0xa0] sm:$0xf]
        %v3558 = vld [vmem:[%s554 + $0xa4] sm:$0xf]
        %v3559 = vld [vmem:[%s554 + $0xa8] sm:$0xf]
        %v3560 = vld [vmem:[%s554 + $0xac] sm:$0xf]
        %v3561 = vld [vmem:[%s554 + $0xb0] sm:$0xf]
        %v3562 = vld [vmem:[%s554 + $0xb4] sm:$0xf]
        %v3563 = vld [vmem:[%s554 + $0xb8] sm:$0xf]
        %v3564 = vld [vmem:[%s554 + $0xbc] sm:$0xf]
        %v3565 = vld [vmem:[%s554 + $0xc0] sm:$0xf]
        %v3566 = vld [vmem:[%s554 + $0xc4] sm:$0xf]
        %v3567 = vld [vmem:[%s554 + $0xc8] sm:$0xf]
        %v3568 = vld [vmem:[%s554 + $0xcc] sm:$0xf]
        %v3569 = vld [vmem:[%s554 + $0xd0] sm:$0xf]
        %v3570 = vld [vmem:[%s554 + $0xd4] sm:$0xf]
        %v3571 = vld [vmem:[%s554 + $0xd8] sm:$0xf]
        %v3572 = vld [vmem:[%s554 + $0xdc] sm:$0xf]
        %v3573 = vld [vmem:[%s554 + $0xe0] sm:$0xf]
        %v3574 = vld [vmem:[%s554 + $0xe4] sm:$0xf]
        %v3575 = vld [vmem:[%s554 + $0xe8] sm:$0xf]
        %v3576 = vld [vmem:[%s554 + $0xec] sm:$0xf]
        %v3577 = vld [vmem:[%s554 + $0xf0] sm:$0xf]
        %v3578 = vld [vmem:[%s554 + $0xf4] sm:$0xf]
        %v3579 = vld [vmem:[%s554 + $0xf8] sm:$0xf]
        %v3580 = vld [vmem:[%s554 + $0xfc] sm:$0xf]
        %v3581 = vld [vmem:[%s554 + $0x100] sm:$0xf]
        %v3582 = vld [vmem:[%s554 + $0x104] sm:$0xf]
        %v3583 = vld [vmem:[%s554 + $0x108] sm:$0xf]
        %v3584 = vld [vmem:[%s554 + $0x10c] sm:$0xf]
        %v3585 = vld [vmem:[%s554 + $0x110] sm:$0xf]
        %v3586 = vld [vmem:[%s554 + $0x114] sm:$0xf]
        %v3587 = vld [vmem:[%s554 + $0x118] sm:$0xf]
        %v3588 = vld [vmem:[%s554 + $0x11c] sm:$0xf]
        %v3589 = vld [vmem:[%s554 + $0x120] sm:$0xf]
        %v3590 = vld [vmem:[%s554 + $0x124] sm:$0xf]
        %v3591 = vld [vmem:[%s554 + $0x128] sm:$0xf]
        %v3592 = vld [vmem:[%s554 + $0x12c] sm:$0xf]
        %v3593 = vld [vmem:[%s554 + $0x130] sm:$0xf]
        %v3594 = vld [vmem:[%s554 + $0x134] sm:$0xf]
        %v3595 = vld [vmem:[%s554 + $0x138] sm:$0xf]
        %v3596 = vld [vmem:[%s554 + $0x13c] sm:$0xf]
        %v3597 = vld [vmem:[%s554 + $0x140] sm:$0xf]
        %v3598 = vld [vmem:[%s554 + $0x144] sm:$0xf]
        %v3599 = vld [vmem:[%s554 + $0x148] sm:$0xf]
        %v3600 = vld [vmem:[%s554 + $0x14c] sm:$0xf]
        %v3601 = vld [vmem:[%s554 + $0x150] sm:$0xf]
        %v3602 = vld [vmem:[%s554 + $0x154] sm:$0xf]
        %v3603 = vld [vmem:[%s554 + $0x158] sm:$0xf]
        %v3604 = vld [vmem:[%s554 + $0x15c] sm:$0xf]
        %v3605 = vld [vmem:[%s554 + $0x160] sm:$0xf]
        %v3606 = vld [vmem:[%s554 + $0x164] sm:$0xf]
        %v3607 = vld [vmem:[%s554 + $0x168] sm:$0xf]
        %v3608 = vld [vmem:[%s554 + $0x16c] sm:$0xf]
        %v3609 = vld [vmem:[%s554 + $0x170] sm:$0xf]
        %v3610 = vld [vmem:[%s554 + $0x174] sm:$0xf]
        %v3611 = vld [vmem:[%s554 + $0x178] sm:$0xf]
        %v3612 = vld [vmem:[%s554 + $0x17c] sm:$0xf]
        %v3613 = vld [vmem:[%s554 + $0x180] sm:$0xf]
        %v3614 = vld [vmem:[%s554 + $0x184] sm:$0xf]
        %v3615 = vld [vmem:[%s554 + $0x188] sm:$0xf]
        %v3616 = vld [vmem:[%s554 + $0x18c] sm:$0xf]
        %v3617 = vld [vmem:[%s554 + $0x190] sm:$0xf]
        %v3618 = vld [vmem:[%s554 + $0x194] sm:$0xf]
        %v3619 = vld [vmem:[%s554 + $0x198] sm:$0xf]
        %v3620 = vld [vmem:[%s554 + $0x19c] sm:$0xf]
        %v3621 = vld [vmem:[%s554 + $0x1a0] sm:$0xf]
        %v3622 = vld [vmem:[%s554 + $0x1a4] sm:$0xf]
        %v3623 = vld [vmem:[%s554 + $0x1a8] sm:$0xf]
        %v3624 = vld [vmem:[%s554 + $0x1ac] sm:$0xf]
        %v3625 = vld [vmem:[%s554 + $0x1b0] sm:$0xf]
        %v3626 = vld [vmem:[%s554 + $0x1b4] sm:$0xf]
        %v3627 = vld [vmem:[%s554 + $0x1b8] sm:$0xf]
        %v3628 = vld [vmem:[%s554 + $0x1bc] sm:$0xf]
        %v3629 = vld [vmem:[%s554 + $0x1c0] sm:$0xf]
        %v3630 = vld [vmem:[%s554 + $0x1c4] sm:$0xf]
        %v3631 = vld [vmem:[%s554 + $0x1c8] sm:$0xf]
        %v3632 = vld [vmem:[%s554 + $0x1cc] sm:$0xf]
        %v3633 = vld [vmem:[%s554 + $0x1d0] sm:$0xf]
        %v3634 = vld [vmem:[%s554 + $0x1d4] sm:$0xf]
        %v3635 = vld [vmem:[%s554 + $0x1d8] sm:$0xf]
        %v3636 = vld [vmem:[%s554 + $0x1dc] sm:$0xf]
        %v3637 = vld [vmem:[%s554 + $0x1e0] sm:$0xf]
        %v3638 = vld [vmem:[%s554 + $0x1e4] sm:$0xf]
        %v3639 = vld [vmem:[%s554 + $0x1e8] sm:$0xf]
        %v3640 = vld [vmem:[%s554 + $0x1ec] sm:$0xf]
        %v3641 = vld [vmem:[%s554 + $0x1f0] sm:$0xf]
        %v3642 = vld [vmem:[%s554 + $0x1f4] sm:$0xf]
        %v3643 = vld [vmem:[%s554 + $0x1f8] sm:$0xf]
        %v3644 = vld [vmem:[%s554 + $0x1fc] sm:$0xf]
        %v3645 = vld [vmem:[%s665] sm:$0x1]
        %v3647 = vlaneseq
        %v3648 = vshrl.u32 %v3647, 7
        %v3649 = vsub.s32 0, %v3648
        %v3650 = vrot.slane %v3645, %v3649
        %v3780 = vunpack.c.l.b16 %v3517
        %v3781 = vunpack.c.l.b16 %v3518
        %v3782 = vunpack.c.l.b16 %v3519
        %v3783 = vunpack.c.l.b16 %v3520
        %v3784 = vunpack.c.l.b16 %v3521
        %v3785 = vunpack.c.l.b16 %v3522
        %v3786 = vunpack.c.l.b16 %v3523
        %v3787 = vunpack.c.l.b16 %v3524
        %v3788 = vunpack.c.l.b16 %v3525
        %v3789 = vunpack.c.l.b16 %v3526
        %v3790 = vunpack.c.l.b16 %v3527
        %v3791 = vunpack.c.l.b16 %v3528
        %v3792 = vunpack.c.l.b16 %v3529
        %v3793 = vunpack.c.l.b16 %v3530
        %v3794 = vunpack.c.l.b16 %v3531
        %v3795 = vunpack.c.l.b16 %v3532
        %v3796 = vunpack.c.l.b16 %v3533
        %v3797 = vunpack.c.l.b16 %v3534
        %v3798 = vunpack.c.l.b16 %v3535
        %v3799 = vunpack.c.l.b16 %v3536
        %v3800 = vunpack.c.l.b16 %v3537
        %v3801 = vunpack.c.l.b16 %v3538
        %v3802 = vunpack.c.l.b16 %v3539
        %v3803 = vunpack.c.l.b16 %v3540
        %v3804 = vunpack.c.l.b16 %v3541
        %v3805 = vunpack.c.l.b16 %v3542
        %v3806 = vunpack.c.l.b16 %v3543
        %v3807 = vunpack.c.l.b16 %v3544
        %v3808 = vunpack.c.l.b16 %v3545
        %v3809 = vunpack.c.l.b16 %v3546
        %v3810 = vunpack.c.l.b16 %v3547
        %v3811 = vunpack.c.l.b16 %v3548
        %v3812 = vunpack.c.l.b16 %v3549
        %v3813 = vunpack.c.l.b16 %v3550
        %v3814 = vunpack.c.l.b16 %v3551
        %v3815 = vunpack.c.l.b16 %v3552
        %v3816 = vunpack.c.l.b16 %v3553
        %v3817 = vunpack.c.l.b16 %v3554
        %v3818 = vunpack.c.l.b16 %v3555
        %v3819 = vunpack.c.l.b16 %v3556
        %v3820 = vunpack.c.l.b16 %v3557
        %v3821 = vunpack.c.l.b16 %v3558
        %v3822 = vunpack.c.l.b16 %v3559
        %v3823 = vunpack.c.l.b16 %v3560
        %v3824 = vunpack.c.l.b16 %v3561
        %v3825 = vunpack.c.l.b16 %v3562
        %v3826 = vunpack.c.l.b16 %v3563
        %v3827 = vunpack.c.l.b16 %v3564
        %v3828 = vunpack.c.l.b16 %v3565
        %v3829 = vunpack.c.l.b16 %v3566
        %v3830 = vunpack.c.l.b16 %v3567
        %v3831 = vunpack.c.l.b16 %v3568
        %v3832 = vunpack.c.l.b16 %v3569
        %v3833 = vunpack.c.l.b16 %v3570
        %v3834 = vunpack.c.l.b16 %v3571
        %v3835 = vunpack.c.l.b16 %v3572
        %v3836 = vunpack.c.l.b16 %v3573
        %v3837 = vunpack.c.l.b16 %v3574
        %v3838 = vunpack.c.l.b16 %v3575
        %v3839 = vunpack.c.l.b16 %v3576
        %v3840 = vunpack.c.l.b16 %v3577
        %v3841 = vunpack.c.l.b16 %v3578
        %v3842 = vunpack.c.l.b16 %v3579
        %v3843 = vunpack.c.l.b16 %v3580
        %v3844 = vunpack.c.l.b16 %v3581
        %v3845 = vunpack.c.l.b16 %v3582
        %v3846 = vunpack.c.l.b16 %v3583
        %v3847 = vunpack.c.l.b16 %v3584
        %v3848 = vunpack.c.l.b16 %v3585
        %v3849 = vunpack.c.l.b16 %v3586
        %v3850 = vunpack.c.l.b16 %v3587
        %v3851 = vunpack.c.l.b16 %v3588
        %v3852 = vunpack.c.l.b16 %v3589
        %v3853 = vunpack.c.l.b16 %v3590
        %v3854 = vunpack.c.l.b16 %v3591
        %v3855 = vunpack.c.l.b16 %v3592
        %v3856 = vunpack.c.l.b16 %v3593
        %v3857 = vunpack.c.l.b16 %v3594
        %v3858 = vunpack.c.l.b16 %v3595
        %v3859 = vunpack.c.l.b16 %v3596
        %v3860 = vunpack.c.l.b16 %v3597
        %v3861 = vunpack.c.l.b16 %v3598
        %v3862 = vunpack.c.l.b16 %v3599
        %v3863 = vunpack.c.l.b16 %v3600
        %v3864 = vunpack.c.l.b16 %v3601
        %v3865 = vunpack.c.l.b16 %v3602
        %v3866 = vunpack.c.l.b16 %v3603
        %v3867 = vunpack.c.l.b16 %v3604
        %v3868 = vunpack.c.l.b16 %v3605
        %v3869 = vunpack.c.l.b16 %v3606
        %v3870 = vunpack.c.l.b16 %v3607
        %v3871 = vunpack.c.l.b16 %v3608
        %v3872 = vunpack.c.l.b16 %v3609
        %v3873 = vunpack.c.l.b16 %v3610
        %v3874 = vunpack.c.l.b16 %v3611
        %v3875 = vunpack.c.l.b16 %v3612
        %v3876 = vunpack.c.l.b16 %v3613
        %v3877 = vunpack.c.l.b16 %v3614
        %v3878 = vunpack.c.l.b16 %v3615
        %v3879 = vunpack.c.l.b16 %v3616
        %v3880 = vunpack.c.l.b16 %v3617
        %v3881 = vunpack.c.l.b16 %v3618
        %v3882 = vunpack.c.l.b16 %v3619
        %v3883 = vunpack.c.l.b16 %v3620
        %v3884 = vunpack.c.l.b16 %v3621
        %v3885 = vunpack.c.l.b16 %v3622
        %v3886 = vunpack.c.l.b16 %v3623
        %v3887 = vunpack.c.l.b16 %v3624
        %v3888 = vunpack.c.l.b16 %v3625
        %v3889 = vunpack.c.l.b16 %v3626
        %v3890 = vunpack.c.l.b16 %v3627
        %v3891 = vunpack.c.l.b16 %v3628
        %v3892 = vunpack.c.l.b16 %v3629
        %v3893 = vunpack.c.l.b16 %v3630
        %v3894 = vunpack.c.l.b16 %v3631
        %v3895 = vunpack.c.l.b16 %v3632
        %v3896 = vunpack.c.l.b16 %v3633
        %v3897 = vunpack.c.l.b16 %v3634
        %v3898 = vunpack.c.l.b16 %v3635
        %v3899 = vunpack.c.l.b16 %v3636
        %v3900 = vunpack.c.l.b16 %v3637
        %v3901 = vunpack.c.l.b16 %v3638
        %v3902 = vunpack.c.l.b16 %v3639
        %v3903 = vunpack.c.l.b16 %v3640
        %v3904 = vunpack.c.l.b16 %v3641
        %v3905 = vunpack.c.l.b16 %v3642
        %v3906 = vunpack.c.l.b16 %v3643
        %v3907 = vunpack.c.l.b16 %v3644
        %v3908 = vpack.c.b16 %v3781, %v3780
        %v3909 = vpack.c.b16 %v3783, %v3782
        %v3910 = vpack.c.b16 %v3785, %v3784
        %v3911 = vpack.c.b16 %v3787, %v3786
        %v3912 = vpack.c.b16 %v3789, %v3788
        %v3913 = vpack.c.b16 %v3791, %v3790
        %v3914 = vpack.c.b16 %v3793, %v3792
        %v3915 = vpack.c.b16 %v3795, %v3794
        %v3916 = vpack.c.b16 %v3797, %v3796
        %v3917 = vpack.c.b16 %v3799, %v3798
        %v3918 = vpack.c.b16 %v3801, %v3800
        %v3919 = vpack.c.b16 %v3803, %v3802
        %v3920 = vpack.c.b16 %v3805, %v3804
        %v3921 = vpack.c.b16 %v3807, %v3806
        %v3922 = vpack.c.b16 %v3809, %v3808
        %v3923 = vpack.c.b16 %v3811, %v3810
        %v3924 = vpack.c.b16 %v3813, %v3812
        %v3925 = vpack.c.b16 %v3815, %v3814
        %v3926 = vpack.c.b16 %v3817, %v3816
        %v3927 = vpack.c.b16 %v3819, %v3818
        %v3928 = vpack.c.b16 %v3821, %v3820
        %v3929 = vpack.c.b16 %v3823, %v3822
        %v3930 = vpack.c.b16 %v3825, %v3824
        %v3931 = vpack.c.b16 %v3827, %v3826
        %v3932 = vpack.c.b16 %v3829, %v3828
        %v3933 = vpack.c.b16 %v3831, %v3830
        %v3934 = vpack.c.b16 %v3833, %v3832
        %v3935 = vpack.c.b16 %v3835, %v3834
        %v3936 = vpack.c.b16 %v3837, %v3836
        %v3937 = vpack.c.b16 %v3839, %v3838
        %v3938 = vpack.c.b16 %v3841, %v3840
        %v3939 = vpack.c.b16 %v3843, %v3842
        %v3940 = vpack.c.b16 %v3845, %v3844
        %v3941 = vpack.c.b16 %v3847, %v3846
        %v3942 = vpack.c.b16 %v3849, %v3848
        %v3943 = vpack.c.b16 %v3851, %v3850
        %v3944 = vpack.c.b16 %v3853, %v3852
        %v3945 = vpack.c.b16 %v3855, %v3854
        %v3946 = vpack.c.b16 %v3857, %v3856
        %v3947 = vpack.c.b16 %v3859, %v3858
        %v3948 = vpack.c.b16 %v3861, %v3860
        %v3949 = vpack.c.b16 %v3863, %v3862
        %v3950 = vpack.c.b16 %v3865, %v3864
        %v3951 = vpack.c.b16 %v3867, %v3866
        %v3952 = vpack.c.b16 %v3869, %v3868
        %v3953 = vpack.c.b16 %v3871, %v3870
        %v3954 = vpack.c.b16 %v3873, %v3872
        %v3955 = vpack.c.b16 %v3875, %v3874
        %v3956 = vpack.c.b16 %v3877, %v3876
        %v3957 = vpack.c.b16 %v3879, %v3878
        %v3958 = vpack.c.b16 %v3881, %v3880
        %v3959 = vpack.c.b16 %v3883, %v3882
        %v3960 = vpack.c.b16 %v3885, %v3884
        %v3961 = vpack.c.b16 %v3887, %v3886
        %v3962 = vpack.c.b16 %v3889, %v3888
        %v3963 = vpack.c.b16 %v3891, %v3890
        %v3964 = vpack.c.b16 %v3893, %v3892
        %v3965 = vpack.c.b16 %v3895, %v3894
        %v3966 = vpack.c.b16 %v3897, %v3896
        %v3967 = vpack.c.b16 %v3899, %v3898
        %v3968 = vpack.c.b16 %v3901, %v3900
        %v3969 = vpack.c.b16 %v3903, %v3902
        %v3970 = vpack.c.b16 %v3905, %v3904
        %v3971 = vpack.c.b16 %v3907, %v3906
        %4036 = vmatprep.subr.bf16.mxu0 0
        %4037 = vmatpush1.bf16.msra.mxu0 %v3908
        %4038 = vmatprep.subr.bf16.mxu0 0
        %4039 = vmatpush1.bf16.msra.mxu0 %v3909
        %4040 = vmatprep.subr.bf16.mxu0 0
        %4041 = vmatpush1.bf16.msra.mxu0 %v3910
        %4042 = vmatprep.subr.bf16.mxu0 0
        %4043 = vmatpush1.bf16.msra.mxu0 %v3911
        %4044 = vmatprep.subr.bf16.mxu0 0
        %4045 = vmatpush1.bf16.msra.mxu0 %v3912
        %4046 = vmatprep.subr.bf16.mxu0 0
        %4047 = vmatpush1.bf16.msra.mxu0 %v3913
        %4048 = vmatprep.subr.bf16.mxu0 0
        %4049 = vmatpush1.bf16.msra.mxu0 %v3914
        %4050 = vmatprep.subr.bf16.mxu0 0
        %4051 = vmatpush1.bf16.msra.mxu0 %v3915
        %4052 = vmatprep.subr.bf16.mxu0 0
        %4053 = vmatpush1.bf16.msra.mxu0 %v3916
        %4054 = vmatprep.subr.bf16.mxu0 0
        %4055 = vmatpush1.bf16.msra.mxu0 %v3917
        %4056 = vmatprep.subr.bf16.mxu0 0
        %4057 = vmatpush1.bf16.msra.mxu0 %v3918
        %4058 = vmatprep.subr.bf16.mxu0 0
        %4059 = vmatpush1.bf16.msra.mxu0 %v3919
        %4060 = vmatprep.subr.bf16.mxu0 0
        %4061 = vmatpush1.bf16.msra.mxu0 %v3920
        %4062 = vmatprep.subr.bf16.mxu0 0
        %4063 = vmatpush1.bf16.msra.mxu0 %v3921
        %4064 = vmatprep.subr.bf16.mxu0 0
        %4065 = vmatpush1.bf16.msra.mxu0 %v3922
        %4066 = vmatprep.subr.bf16.mxu0 0
        %4067 = vmatpush1.bf16.msra.mxu0 %v3923
        %4068 = vmatprep.mubr.bf16.mxu0 %v3494
        %4069 = vmatmul.mubr.bf16.gmra.mrb[0].mxu0 %v3493
        %v4070 = vpop.f32.mrb[0].mxu0
        %v4071 = vadd.f32 %v3650, %v4070
        %v4072 = vpop.f32.mrb[0].mxu0
        %v4073 = vpop.f32.mrb[0].mxu0
        %v4074 = vadd.f32 %v3650, %v4073
        %v4075 = vpop.f32.mrb[0].mxu0
        %4076 = vmatprep.mubr.bf16.mxu0 %v3502
        %4077 = vmatmul.mubr.bf16.gmra.mrb[0].mxu0 %v3501
        %v4078 = vpop.f32.mrb[0].mxu0
        %v4079 = vadd.f32 %v3650, %v4078
        %v4080 = vpop.f32.mrb[0].mxu0
        %v4081 = vpop.f32.mrb[0].mxu0
        %v4082 = vadd.f32 %v3650, %v4081
        %v4083 = vpop.f32.mrb[0].mxu0
        %4084 = vmatprep.mubr.bf16.mxu0 %v3510
        %4085 = vmatmul.mubr.bf16.gmra.mrb[0].mxu0 %v3509
        %v4086 = vpop.f32.mrb[0].mxu0
        %v4087 = vadd.f32 %v3650, %v4086
        %v4088 = vpop.f32.mrb[0].mxu0
        %v4089 = vpop.f32.mrb[0].mxu0
        %v4090 = vadd.f32 %v3650, %v4089
        %v4091 = vpop.f32.mrb[0].mxu0
        %4092 = vdwg.mxu0
        %4093 = vmatprep.subr.bf16.mxu0 0
        %4094 = vmatpush1.bf16.msra.mxu0 %v3924
        %4095 = vmatprep.subr.bf16.mxu0 0
        %4096 = vmatpush1.bf16.msra.mxu0 %v3925
        %4097 = vmatprep.subr.bf16.mxu0 0
        %4098 = vmatpush1.bf16.msra.mxu0 %v3926
        %4099 = vmatprep.subr.bf16.mxu0 0
        %4100 = vmatpush1.bf16.msra.mxu0 %v3927
        %4101 = vmatprep.subr.bf16.mxu0 0
        %4102 = vmatpush1.bf16.msra.mxu0 %v3928
        %4103 = vmatprep.subr.bf16.mxu0 0
        %4104 = vmatpush1.bf16.msra.mxu0 %v3929
        %4105 = vmatprep.subr.bf16.mxu0 0
        %4106 = vmatpush1.bf16.msra.mxu0 %v3930
        %4107 = vmatprep.subr.bf16.mxu0 0
        %4108 = vmatpush1.bf16.msra.mxu0 %v3931
        %4109 = vmatprep.subr.bf16.mxu0 0
        %4110 = vmatpush1.bf16.msra.mxu0 %v3932
        %4111 = vmatprep.subr.bf16.mxu0 0
        %4112 = vmatpush1.bf16.msra.mxu0 %v3933
        %4113 = vmatprep.subr.bf16.mxu0 0
        %4114 = vmatpush1.bf16.msra.mxu0 %v3934
        %4115 = vmatprep.subr.bf16.mxu0 0
        %4116 = vmatpush1.bf16.msra.mxu0 %v3935
        %4117 = vmatprep.subr.bf16.mxu0 0
        %4118 = vmatpush1.bf16.msra.mxu0 %v3936
        %4119 = vmatprep.subr.bf16.mxu0 0
        %4120 = vmatpush1.bf16.msra.mxu0 %v3937
        %4121 = vmatprep.subr.bf16.mxu0 0
        %4122 = vmatpush1.bf16.msra.mxu0 %v3938
        %4123 = vmatprep.subr.bf16.mxu0 0
        %4124 = vmatpush1.bf16.msra.mxu0 %v3939
        %4125 = vmatprep.mubr.bf16.mxu0 %v3496
        %4126 = vmatmul.mubr.bf16.gmra.mrb[0].mxu0 %v3495
        %v4127 = vpop.f32.mrb[0].mxu0
        %v4128 = vadd.f32 %v4071, %v4127
        %v4129 = vpop.f32.mrb[0].mxu0
        %v4130 = vpop.f32.mrb[0].mxu0
        %v4131 = vadd.f32 %v4074, %v4130
        %v4132 = vpop.f32.mrb[0].mxu0
        %4133 = vmatprep.mubr.bf16.mxu0 %v3504
        %4134 = vmatmul.mubr.bf16.gmra.mrb[0].mxu0 %v3503
        %v4135 = vpop.f32.mrb[0].mxu0
        %v4136 = vadd.f32 %v4079, %v4135
        %v4137 = vpop.f32.mrb[0].mxu0
        %v4138 = vpop.f32.mrb[0].mxu0
        %v4139 = vadd.f32 %v4082, %v4138
        %v4140 = vpop.f32.mrb[0].mxu0
        %4141 = vmatprep.mubr.bf16.mxu0 %v3512
        %4142 = vmatmul.mubr.bf16.gmra.mrb[0].mxu0 %v3511
        %v4143 = vpop.f32.mrb[0].mxu0
        %v4144 = vadd.f32 %v4087, %v4143
        %v4145 = vpop.f32.mrb[0].mxu0
        %v4146 = vpop.f32.mrb[0].mxu0
        %v4147 = vadd.f32 %v4090, %v4146
        %v4148 = vpop.f32.mrb[0].mxu0
        %4149 = vdwg.mxu0
        %4150 = vmatprep.subr.bf16.mxu0 0
        %4151 = vmatpush1.bf16.msra.mxu0 %v3940
        %4152 = vmatprep.subr.bf16.mxu0 0
        %4153 = vmatpush1.bf16.msra.mxu0 %v3941
        %4154 = vmatprep.subr.bf16.mxu0 0
        %4155 = vmatpush1.bf16.msra.mxu0 %v3942
        %4156 = vmatprep.subr.bf16.mxu0 0
        %4157 = vmatpush1.bf16.msra.mxu0 %v3943
        %4158 = vmatprep.subr.bf16.mxu0 0
        %4159 = vmatpush1.bf16.msra.mxu0 %v3944
        %4160 = vmatprep.subr.bf16.mxu0 0
        %4161 = vmatpush1.bf16.msra.mxu0 %v3945
        %4162 = vmatprep.subr.bf16.mxu0 0
        %4163 = vmatpush1.bf16.msra.mxu0 %v3946
        %4164 = vmatprep.subr.bf16.mxu0 0
        %4165 = vmatpush1.bf16.msra.mxu0 %v3947
        %4166 = vmatprep.subr.bf16.mxu0 0
        %4167 = vmatpush1.bf16.msra.mxu0 %v3948
        %4168 = vmatprep.subr.bf16.mxu0 0
        %4169 = vmatpush1.bf16.msra.mxu0 %v3949
        %4170 = vmatprep.subr.bf16.mxu0 0
        %4171 = vmatpush1.bf16.msra.mxu0 %v3950
        %4172 = vmatprep.subr.bf16.mxu0 0
        %4173 = vmatpush1.bf16.msra.mxu0 %v3951
        %4174 = vmatprep.subr.bf16.mxu0 0
        %4175 = vmatpush1.bf16.msra.mxu0 %v3952
        %4176 = vmatprep.subr.bf16.mxu0 0
        %4177 = vmatpush1.bf16.msra.mxu0 %v3953
        %4178 = vmatprep.subr.bf16.mxu0 0
        %4179 = vmatpush1.bf16.msra.mxu0 %v3954
        %4180 = vmatprep.subr.bf16.mxu0 0
        %4181 = vmatpush1.bf16.msra.mxu0 %v3955
        %4182 = vmatprep.mubr.bf16.mxu0 %v3498
        %4183 = vmatmul.mubr.bf16.gmra.mrb[0].mxu0 %v3497
        %v4184 = vpop.f32.mrb[0].mxu0
        %v4185 = vadd.f32 %v4128, %v4184
        %v4186 = vpop.f32.mrb[0].mxu0
        %v4187 = vpop.f32.mrb[0].mxu0
        %v4188 = vadd.f32 %v4131, %v4187
        %v4189 = vpop.f32.mrb[0].mxu0
        %4190 = vmatprep.mubr.bf16.mxu0 %v3506
        %4191 = vmatmul.mubr.bf16.gmra.mrb[0].mxu0 %v3505
        %v4192 = vpop.f32.mrb[0].mxu0
        %v4193 = vadd.f32 %v4136, %v4192
        %v4194 = vpop.f32.mrb[0].mxu0
        %v4195 = vpop.f32.mrb[0].mxu0
        %v4196 = vadd.f32 %v4139, %v4195
        %v4197 = vpop.f32.mrb[0].mxu0
        %4198 = vmatprep.mubr.bf16.mxu0 %v3514
        %4199 = vmatmul.mubr.bf16.gmra.mrb[0].mxu0 %v3513
        %v4200 = vpop.f32.mrb[0].mxu0
        %v4201 = vadd.f32 %v4144, %v4200
        %v4202 = vpop.f32.mrb[0].mxu0
        %v4203 = vpop.f32.mrb[0].mxu0
        %v4204 = vadd.f32 %v4147, %v4203
        %v4205 = vpop.f32.mrb[0].mxu0
        %4206 = vdwg.mxu0
        %4207 = vmatprep.subr.bf16.mxu0 0
        %4208 = vmatpush1.bf16.msra.mxu0 %v3956
        %4209 = vmatprep.subr.bf16.mxu0 0
        %4210 = vmatpush1.bf16.msra.mxu0 %v3957
        %4211 = vmatprep.subr.bf16.mxu0 0
        %4212 = vmatpush1.bf16.msra.mxu0 %v3958
        %4213 = vmatprep.subr.bf16.mxu0 0
        %4214 = vmatpush1.bf16.msra.mxu0 %v3959
        %4215 = vmatprep.subr.bf16.mxu0 0
        %4216 = vmatpush1.bf16.msra.mxu0 %v3960
        %4217 = vmatprep.subr.bf16.mxu0 0
        %4218 = vmatpush1.bf16.msra.mxu0 %v3961
        %4219 = vmatprep.subr.bf16.mxu0 0
        %4220 = vmatpush1.bf16.msra.mxu0 %v3962
        %4221 = vmatprep.subr.bf16.mxu0 0
        %4222 = vmatpush1.bf16.msra.mxu0 %v3963
        %4223 = vmatprep.subr.bf16.mxu0 0
        %4224 = vmatpush1.bf16.msra.mxu0 %v3964
        %4225 = vmatprep.subr.bf16.mxu0 0
        %4226 = vmatpush1.bf16.msra.mxu0 %v3965
        %4227 = vmatprep.subr.bf16.mxu0 0
        %4228 = vmatpush1.bf16.msra.mxu0 %v3966
        %4229 = vmatprep.subr.bf16.mxu0 0
        %4230 = vmatpush1.bf16.msra.mxu0 %v3967
        %4231 = vmatprep.subr.bf16.mxu0 0
        %4232 = vmatpush1.bf16.msra.mxu0 %v3968
        %4233 = vmatprep.subr.bf16.mxu0 0
        %4234 = vmatpush1.bf16.msra.mxu0 %v3969
        %4235 = vmatprep.subr.bf16.mxu0 0
        %4236 = vmatpush1.bf16.msra.mxu0 %v3970
        %4237 = vmatprep.subr.bf16.mxu0 0
        %4238 = vmatpush1.bf16.msra.mxu0 %v3971
        %4239 = vmatprep.mubr.bf16.mxu0 %v3500
        %4240 = vmatmul.mubr.bf16.gmra.mrb[0].mxu0 %v3499
        %v4241 = vpop.f32.mrb[0].mxu0
        %v4242 = vadd.f32 %v4185, %v4241
        %v4243 = vpop.f32.mrb[0].mxu0
        %v4244 = vpop.f32.mrb[0].mxu0
        %v4245 = vadd.f32 %v4188, %v4244
        %v4246 = vpop.f32.mrb[0].mxu0
        %4247 = vmatprep.mubr.bf16.mxu0 %v3508
        %4248 = vmatmul.mubr.bf16.gmra.mrb[0].mxu0 %v3507
        %v4249 = vpop.f32.mrb[0].mxu0
        %v4250 = vadd.f32 %v4193, %v4249
        %v4251 = vpop.f32.mrb[0].mxu0
        %v4252 = vpop.f32.mrb[0].mxu0
        %v4253 = vadd.f32 %v4196, %v4252
        %v4254 = vpop.f32.mrb[0].mxu0
        %4255 = vmatprep.mubr.bf16.mxu0 %v3516
        %4256 = vmatmul.mubr.bf16.gmra.mrb[0].mxu0 %v3515
        %v4257 = vpop.f32.mrb[0].mxu0
        %v4258 = vadd.f32 %v4201, %v4257
        %v4259 = vpop.f32.mrb[0].mxu0
        %v4260 = vpop.f32.mrb[0].mxu0
        %v4261 = vadd.f32 %v4204, %v4260
        %v4262 = vpop.f32.mrb[0].mxu0
        %4263 = vdwg.mxu0
        %v4264 = vadd.f32 %v2758, %v4242
        %v4265 = vadd.f32 %v2759, %v4245
        %v4266 = vadd.f32 %v2760, %v4250
        %v4267 = vadd.f32 %v2761, %v4253
        %v4268 = vadd.f32 %v2762, %v4258
        %v4269 = vadd.f32 %v2763, %v4261
        %4270 = vadd.xlane.f32.xlu0 %v4264
        %v4271 = vpop.xlane.xlu0 %4270
        %4272 = vadd.xlane.f32.xlu0 %v4265
        %v4273 = vpop.xlane.xlu0 %4272
        %4274 = vadd.xlane.f32.xlu0 %v4266
        %v4275 = vpop.xlane.xlu0 %4274
        %4276 = vadd.xlane.f32.xlu0 %v4267
        %v4277 = vpop.xlane.xlu0 %4276
        %4278 = vadd.xlane.f32.xlu0 %v4268
        %v4279 = vpop.xlane.xlu0 %4278
        %4280 = vadd.xlane.f32.xlu0 %v4269
        %v4281 = vpop.xlane.xlu0 %4280
        %v4282 = vmul.f32 %v4271, %v2683
        %v4283 = vmul.f32 %v4273, %v2683
        %v4284 = vmul.f32 %v4275, %v2683
        %v4285 = vmul.f32 %v4277, %v2683
        %v4286 = vmul.f32 %v4279, %v2683
        %v4287 = vmul.f32 %v4281, %v2683
        %v4288 = vsub.f32 %v4264, %v4282
        %v4289 = vsub.f32 %v4265, %v4283
        %v4290 = vsub.f32 %v4266, %v4284
        %v4291 = vsub.f32 %v4267, %v4285
        %v4292 = vsub.f32 %v4268, %v4286
        %v4293 = vsub.f32 %v4269, %v4287
        %v4294 = vmul.f32 %v4288, %v4288
        %v4295 = vmul.f32 %v4289, %v4289
        %v4296 = vmul.f32 %v4290, %v4290
        %v4297 = vmul.f32 %v4291, %v4291
        %v4298 = vmul.f32 %v4292, %v4292
        %v4299 = vmul.f32 %v4293, %v4293
        %4300 = vadd.xlane.f32.xlu0 %v4294
        %v4301 = vpop.xlane.xlu0 %4300
        %4302 = vadd.xlane.f32.xlu0 %v4295
        %v4303 = vpop.xlane.xlu0 %4302
        %4304 = vadd.xlane.f32.xlu0 %v4296
        %v4305 = vpop.xlane.xlu0 %4304
        %4306 = vadd.xlane.f32.xlu0 %v4297
        %v4307 = vpop.xlane.xlu0 %4306
        %4308 = vadd.xlane.f32.xlu0 %v4298
        %v4309 = vpop.xlane.xlu0 %4308
        %4310 = vadd.xlane.f32.xlu0 %v4299
        %v4311 = vpop.xlane.xlu0 %4310
        %v4312 = vmul.f32 %v4301, %v2683
        %v4313 = vmul.f32 %v4303, %v2683
        %v4314 = vmul.f32 %v4305, %v2683
        %v4315 = vmul.f32 %v4307, %v2683
        %v4316 = vmul.f32 %v4309, %v2683
        %v4317 = vmul.f32 %v4311, %v2683
        %v4318 = vadd.f32 %v4312, 1e-05
        %v4319 = vadd.f32 %v4313, 1e-05
        %v4320 = vadd.f32 %v4314, 1e-05
        %v4321 = vadd.f32 %v4315, 1e-05
        %v4322 = vadd.f32 %v4316, 1e-05
        %v4323 = vadd.f32 %v4317, 1e-05
        %v4324 = vrsqrt.pop %v4318
        %v4325 = vrsqrt.pop %v4319
        %v4326 = vrsqrt.pop %v4320
        %v4327 = vrsqrt.pop %v4321
        %v4328 = vrsqrt.pop %v4322
        %v4329 = vrsqrt.pop %v4323
        %v4330 = vmul.f32 %v4288, %v4324
        %v4331 = vmul.f32 %v4289, %v4325
        %v4332 = vmul.f32 %v4290, %v4326
        %v4333 = vmul.f32 %v4291, %v4327
        %v4334 = vmul.f32 %v4292, %v4328
        %v4335 = vmul.f32 %v4293, %v4329
        %v4336 = vld [vmem:[%s674] sm:$0x1]
        %v4338 = vlaneseq
        %v4339 = vshrl.u32 %v4338, 7
        %v4340 = vsub.s32 0, %v4339
        %v4341 = vrot.slane %v4336, %v4340
        %v4343 = vmul.f32 %v4330, %v4341
        %v4344 = vmul.f32 %v4331, %v4341
        %v4345 = vmul.f32 %v4332, %v4341
        %v4346 = vmul.f32 %v4333, %v4341
        %v4347 = vmul.f32 %v4334, %v4341
        %v4348 = vmul.f32 %v4335, %v4341
        %v4349 = vld [vmem:[%s677] sm:$0x1]
        %v4351 = vlaneseq
        %v4352 = vshrl.u32 %v4351, 7
        %v4353 = vsub.s32 0, %v4352
        %v4354 = vrot.slane %v4349, %v4353
        %v4356 = vadd.f32 %v4343, %v4354
        %v4357 = vadd.f32 %v4344, %v4354
        %v4358 = vadd.f32 %v4345, %v4354
        %v4359 = vadd.f32 %v4346, %v4354
        %v4360 = vadd.f32 %v4347, %v4354
        %v4361 = vadd.f32 %v4348, %v4354
        %4362 = vst [vmem:[%s15] sm:$0xff] %v4356
        %4363 = vst [vmem:[%s15 + $0x8] sm:$0xff] %v4357
        %4364 = vst [vmem:[%s15 + $0x10] sm:$0xff] %v4358
        %4365 = vst [vmem:[%s15 + $0x18] sm:$0xff] %v4359
        %4366 = vst [vmem:[%s15 + $0x20] sm:$0xff] %v4360
        %4367 = vst [vmem:[%s15 + $0x28] sm:$0xff] %v4361
        // Predicated region
        $region89: #{pst_path_forward.1} parent=79 // pred_check
          %p4368 = pneg %p417
        $region90: #{pst_path_forward.1} parent=79 // pred_check_branch
          %4370 = sbr.rel (%p4368) target = $region92
        $region91: #{pst_path_forward.1} parent=79 // pred_region
          _
        $region92: #{pst_path_forward.1} parent=79 // pred_fallthru
          _
        // Predicated region
        $region93: #{pst_path_forward.1} parent=79 // pred_check
          %p4371 = pneg %p417
        $region94: #{pst_path_forward.1} parent=79 // pred_check_branch
          %4373 = sbr.rel (%p4371) target = $region96
        $region95: #{pst_path_forward.1} parent=79 // pred_region
          _
        $region96: #{pst_path_forward.1} parent=79 // pred_fallthru
          _
      $region80: #{pst_path_forward.1} parent=5 // pred_fallthru
        _
      %p4374 = scmp.le.s32.totalorder 2, %s24
      // Predicated region
      $region97: #{pst_path_forward.1} parent=5 // pred_check
        %p4375 = pneg %p4374
      $region98: #{pst_path_forward.1} parent=5 // pred_check_branch
        %4377 = sbr.rel (%p4375) target = $region100
      $region99: #{pst_path_forward.1} parent=5 // pred_region
        %s4378 = ssub.s32 %s24, 2
      $region100: #{pst_path_forward.1} parent=5 // pred_fallthru
        _
    $region6: #{pst_path_forward.1} parent=1 // loop_footer
      %s28 = sadd.s32 1, %s24
    $region7: #{pst_path_forward.1} parent=1 // loop_footer_branch
      %23 = sbr.rel target = $region3
    $region8: #{pst_path_forward.1} parent=1 // loop_exit
      _
    %4379 = vsyncpa [#allocation3], 1
    %s4380 = scalar_lea.sflag [#allocation3], 1
    %4381 = vsyncpa %s4380, 1

</llo_original>
